<compile_context>
chip_gen: v5e
topology: v5e:2x2
jax: 0.10.0
libtpu: 0.0.40
codegen_flags: <defaults>
</compile_context>

<pallas_src>
import functools

import jax
import jax.numpy as jnp
from jax.experimental import pallas as pl
from jax.experimental.pallas import tpu as pltpu


def _round_up(x, m):
    return ((x + m - 1) // m) * m


def _pick_time_chunk(seq_len, cap=16):
    """Largest divisor of seq_len that is <= cap (keeps the unrolled chunk small)."""
    for c in range(min(seq_len, cap), 0, -1):
        if seq_len % c == 0:
            return c
    return 1


def _pad2d(a, rows, cols):
    return jnp.pad(a, ((0, rows - a.shape[0]), (0, cols - a.shape[1])))


def _gru_kernel(n_layers, h_pad, t_chunk, b_pad, *refs):
    """Fused multilayer GRU recurrence over one time chunk.

    refs = (x_ref, h0_ref, *weight_refs, htop_ref, h_state_ref)
      x_ref        (T*Bp, Din0)  current time chunk of inputs, flat (time, batch) rows
      h0_ref       (L, Bp, Hp)   initial hidden state
      weight refs  5 per layer: Wx_all (Din, 3Hp), Wh_zr (Hp, 2Hp), b_zr (1, 2Hp),
                                Whg (Hp, Hp), bhg (1, Hp)
      htop_ref     (T*Bp, Hp)    top-layer hidden per timestep (output, flat rows)
      h_state_ref  (L, Bp, Hp)   resident hidden state == final-hidden output
    """
    x_ref, h0_ref = refs[0], refs[1]
    w_refs = refs[2:2 + 5 * n_layers]
    htop_ref = refs[2 + 5 * n_layers]
    h_ref = refs[3 + 5 * n_layers]

    # h_ref is an output block with a constant index map -> VMEM-resident across
    # the whole grid, so it doubles as the running hidden state (no scratch).
    @pl.when(pl.program_id(0) == 0)
    def _():
        h_ref[...] = h0_ref[...]

    # Layer-0 input-side gate matmul for the WHOLE chunk: one big MXU call
    # (M = T*Bp) instead of T tiny (M = Bp) ones. Does not touch the recurrence.
    pre_x0 = jnp.dot(x_ref[...], w_refs[0][...],
                     preferred_element_type=jnp.float32)            # (T*Bp, 3Hp)

    for j in range(t_chunk):              # static small chunk (unrolled)
        x = None
        for l in range(n_layers):         # static small layer count (unrolled)
            Wx, Whzr, bzr, Whg, bhg = w_refs[5 * l: 5 * l + 5]
            h_prev = h_ref[l]              # (Bp, Hp)

            if l == 0:
                # Static, sublane-aligned row slice of the hoisted chunk matmul.
                pre_x = pre_x0[j * b_pad:(j + 1) * b_pad, :]         # (Bp, 3Hp)
            else:
                # One MXU call for all three input-side gate matmuls.
                pre_x = jnp.dot(x, Wx[...], preferred_element_type=jnp.float32)

            # One MXU call for the fused z/r hidden-side matmul + one fused bias add.
            zr = jax.nn.sigmoid(
                pre_x[:, :2 * h_pad]
                + jnp.dot(h_prev, Whzr[...], preferred_element_type=jnp.float32)
                + bzr[...])
            z = zr[:, :h_pad]
            r = zr[:, h_pad:]
            g = jnp.tanh(
                pre_x[:, 2 * h_pad:]
                + jnp.dot(r * h_prev, Whg[...], preferred_element_type=jnp.float32)
                + bhg[...])

            h_cur = z * h_prev + (1.0 - z) * g
            h_ref[l] = h_cur
            x = h_cur                      # dropout(p=0) == identity

        htop_ref[j * b_pad:(j + 1) * b_pad, :] = x.astype(htop_ref.dtype)


def multilayer_gru_forward(x, h0, params, *, n_layers, h_dim, out_dim, t_chunk=None):
    """x: (B, S, I) f32; h0: (B, L, H) f32.  Returns ((B, S, O), (B, L, H))."""
    B, S, I = x.shape
    L, H, O = n_layers, h_dim, out_dim

    Bp = _round_up(B, 8)        # sublane tile
    Hp = _round_up(H, 128)      # lane tile
    Ip = _round_up(I, 128)
    T = t_chunk if t_chunk is not None else _pick_time_chunk(S)
    assert S % T == 0

    # Time-major + pad to full (8, 128) vreg tiles, then flatten (time, batch)
    # rows so the kernel sees lane-dense 2-D blocks with no in-kernel reshapes.
    # Zero padding is exact for this recurrence: padded hidden lanes stay zero,
    # padded batch rows are independent and sliced off below.
    x_t = jnp.pad(jnp.transpose(x, (1, 0, 2)),
                  ((0, 0), (0, Bp - B), (0, Ip - I)))            # (S, Bp, Ip)
    x_flat = x_t.reshape(S * Bp, Ip)                             # (S*Bp, Ip)
    h0_t = jnp.pad(jnp.transpose(h0, (1, 0, 2)),
                   ((0, 0), (0, Bp - B), (0, Hp - H)))           # (L, Bp, Hp)

    # Fused, padded per-layer weights (stored (in, out), i.e. kernel computes x @ W):
    #   Wx_all (Din, 3Hp) = [Wxz | Wxr | Wxg],  Wh_zr (Hp, 2Hp) = [Whz | Whr],
    #   b_zr (1, 2Hp) = [bhz | bhr],            Whg (Hp, Hp), bhg (1, Hp).
    flat_w = []
    d_in_pad = Ip
    for l in range(L):
        p = params["layers"][l]
        flat_w += [
            jnp.concatenate([_pad2d(p["Wxz"], d_in_pad, Hp),
                             _pad2d(p["Wxr"], d_in_pad, Hp),
                             _pad2d(p["Wxg"], d_in_pad, Hp)], axis=1),
            jnp.concatenate([_pad2d(p["Whz"], Hp, Hp),
                             _pad2d(p["Whr"], Hp, Hp)], axis=1),
            jnp.concatenate([_pad2d(p["bhz"], 1, Hp),
                             _pad2d(p["bhr"], 1, Hp)], axis=1),
            _pad2d(p["Whg"], Hp, Hp),
            _pad2d(p["bhg"], 1, Hp),
        ]
        d_in_pad = Hp
    # TODO(synk): for large n_layers, stack these into (L, ., .) arrays and iterate
    #             with lax.fori_loop to bound code size / vreg live ranges.
    # TODO(synk): optional bf16 weight cast (keep preferred_element_type=f32) for
    #             v6e/v7x MXU throughput; kept f32 here to match the reference exactly.

    def const_spec(a):
        nd = a.ndim
        # Constant block index => never re-fetched; single buffer avoids the
        # default double-buffering VMEM cost for weights / h0.
        return pl.BlockSpec(a.shape, lambda c, _nd=nd: (0,) * _nd,
                            pipeline_mode=pl.Buffered(1))

    in_specs = (
        [pl.BlockSpec((T * Bp, Ip), lambda c: (c, 0)),           # x, one time chunk
         const_spec(h0_t)]
        + [const_spec(w) for w in flat_w]
    )
    out_specs = [
        pl.BlockSpec((T * Bp, Hp), lambda c: (c, 0)),            # top-layer hidden per step
        pl.BlockSpec((L, Bp, Hp), lambda c: (0, 0, 0)),          # final hidden (resident)
    ]

    # VMEM budget: single-buffered weights + double-buffered time chunks + state
    # + the hoisted (T*Bp, 3Hp) layer-0 pre-activation.
    est = sum(int(w.size) * 4 for w in flat_w)
    est += 2 * T * Bp * (Ip + Hp) * 4 + 2 * L * Bp * Hp * 4 + T * Bp * 3 * Hp * 4
    vmem_limit = int(min(100 * 2**20, max(32 * 2**20, 4 * est)))

    kernel = functools.partial(_gru_kernel, L, Hp, T, Bp)

    htop_flat, hT_t = pl.pallas_call(
        kernel,
        out_shape=(jax.ShapeDtypeStruct((S * Bp, Hp), jnp.float32),
                   jax.ShapeDtypeStruct((L, Bp, Hp), jnp.float32)),
        grid_spec=pltpu.PrefetchScalarGridSpec(
            num_scalar_prefetch=0,
            grid=(S // T,),
            in_specs=in_specs,
            out_specs=out_specs,
        ),
        compiler_params=pltpu.CompilerParams(
            dimension_semantics=("arbitrary",),     # sequential recurrence over time
            vmem_limit_bytes=vmem_limit),
    )(x_flat, h0_t, *flat_w)

    # Output projection hoisted out of the recurrence: one big lane-dense matmul.
    htop_t = htop_flat.reshape(S, Bp, Hp)
    h_top = htop_t[:, :B, :H]                                    # (S, B, H)
    y = (h_top.reshape(S * B, H) @ params["Why"] + params["by"]).reshape(S, B, O)
    y = jnp.transpose(y, (1, 0, 2))                              # (B, S, O)
    hT = jnp.transpose(hT_t[:, :B, :H], (1, 0, 2))               # (B, L, H)
    return y, hT


def init_params(key, in_dim, h_dim, out_dim, n_layers):
    """Deterministic synthetic parameters. Weights stored as (in, out); biases as (1, out)."""
    params = {"layers": []}
    cur_in = in_dim
    for _ in range(n_layers):
        layer = {}
        for name in ("Wxz", "Wxr", "Wxg"):
            key, k = jax.random.split(key)
            layer[name] = (jax.random.normal(k, (cur_in, h_dim), jnp.float32)
                           * (1.0 / jnp.sqrt(cur_in)))
        for wname, bname in (("Whz", "bhz"), ("Whr", "bhr"), ("Whg", "bhg")):
            key, k1 = jax.random.split(key)
            key, k2 = jax.random.split(key)
            layer[wname] = (jax.random.normal(k1, (h_dim, h_dim), jnp.float32)
                            * (1.0 / jnp.sqrt(h_dim)))
            layer[bname] = (jax.random.normal(k2, (1, h_dim), jnp.float32) * 0.1)
        params["layers"].append(layer)
        cur_in = h_dim
    key, k1 = jax.random.split(key)
    key, k2 = jax.random.split(key)
    params["Why"] = (jax.random.normal(k1, (h_dim, out_dim), jnp.float32)
                     * (1.0 / jnp.sqrt(h_dim)))
    params["by"] = jax.random.normal(k2, (1, out_dim), jnp.float32) * 0.1
    return params


def multilayer_gru_reference(x, h0, params, *, n_layers, h_dim, out_dim):
    """Pure-JAX reference mirroring the PyTorch forward (for verification)."""
    B, S, _ = x.shape
    states = [h0[:, i, :] for i in range(n_layers)]
    outs = []
    for t in range(S):
        xt = x[:, t, :]
        for l in range(n_layers):
            p = params["layers"][l]
            h_prev = states[l]
            z = jax.nn.sigmoid(xt @ p["Wxz"] + h_prev @ p["Whz"] + p["bhz"])
            r = jax.nn.sigmoid(xt @ p["Wxr"] + h_prev @ p["Whr"] + p["bhr"])
            g = jnp.tanh(xt @ p["Wxg"] + (r * h_prev) @ p["Whg"] + p["bhg"])
            h_cur = z * h_prev + (1.0 - z) * g
            states[l] = h_cur
            xt = h_cur
        outs.append(xt @ params["Why"] + params["by"])
    return jnp.stack(outs, axis=1), jnp.stack(states, axis=1)


if __name__ == "__main__":
    B, S = 2, 8
    in_dim, h_dim, out_dim, n_layers = 16, 32, 16, 2

    key = jax.random.PRNGKey(0)
    key, kx, kh = jax.random.split(key, 3)
    x = jax.random.normal(kx, (B, S, in_dim), jnp.float32)
    h0 = jax.random.normal(kh, (B, n_layers, h_dim), jnp.float32)
    params = init_params(key, in_dim, h_dim, out_dim, n_layers)

    y, hT = multilayer_gru_forward(x, h0, params,
                                   n_layers=n_layers, h_dim=h_dim, out_dim=out_dim)
    y = jax.block_until_ready(y)
    hT = jax.block_until_ready(hT)

    y_ref, hT_ref = multilayer_gru_reference(x, h0, params,
                                             n_layers=n_layers, h_dim=h_dim,
                                             out_dim=out_dim)
    assert y.shape == (B, S, out_dim) and hT.shape == (B, n_layers, h_dim)
    assert jnp.allclose(y, y_ref, atol=1e-4, rtol=1e-4)
    assert jnp.allclose(hT, hT_ref, atol=1e-4, rtol=1e-4)

    print("KERNEL_OK")
</pallas_src>

<mosaic_0001>
module attributes {stable_mosaic.version = 11 : i64} {
  func.func @_gru_kernel(%arg0: i32, %arg1: memref<64x128xf32, #tpu.memory_space<vmem>>, %arg2: memref<2x8x128xf32, #tpu.memory_space<vmem>>, %arg3: memref<128x384xf32, #tpu.memory_space<vmem>>, %arg4: memref<128x256xf32, #tpu.memory_space<vmem>>, %arg5: memref<1x256xf32, #tpu.memory_space<vmem>>, %arg6: memref<128x128xf32, #tpu.memory_space<vmem>>, %arg7: memref<1x128xf32, #tpu.memory_space<vmem>>, %arg8: memref<128x384xf32, #tpu.memory_space<vmem>>, %arg9: memref<128x256xf32, #tpu.memory_space<vmem>>, %arg10: memref<1x256xf32, #tpu.memory_space<vmem>>, %arg11: memref<128x128xf32, #tpu.memory_space<vmem>>, %arg12: memref<1x128xf32, #tpu.memory_space<vmem>>, %arg13: memref<64x128xf32, #tpu.memory_space<vmem>>, %arg14: memref<2x8x128xf32, #tpu.memory_space<vmem>>) attributes {dimension_semantics = [#tpu.dimension_semantics<arbitrary>], iteration_bounds = array<i64: 1>, scalar_prefetch = 0 : i64, scratch_operands = 0 : i64, tpu.core_type = #tpu.core_type<tc>, window_params = [{transform_indices = @transform_0, window_bounds = array<i64: 64, 128>}, {pipeline_mode = #tpu.pipeline_mode<synchronous>, transform_indices = @transform_1, window_bounds = array<i64: 2, 8, 128>}, {pipeline_mode = #tpu.pipeline_mode<synchronous>, transform_indices = @transform_2, window_bounds = array<i64: 128, 384>}, {pipeline_mode = #tpu.pipeline_mode<synchronous>, transform_indices = @transform_3, window_bounds = array<i64: 128, 256>}, {pipeline_mode = #tpu.pipeline_mode<synchronous>, transform_indices = @transform_4, window_bounds = array<i64: 1, 256>}, {pipeline_mode = #tpu.pipeline_mode<synchronous>, transform_indices = @transform_5, window_bounds = array<i64: 128, 128>}, {pipeline_mode = #tpu.pipeline_mode<synchronous>, transform_indices = @transform_6, window_bounds = array<i64: 1, 128>}, {pipeline_mode = #tpu.pipeline_mode<synchronous>, transform_indices = @transform_7, window_bounds = array<i64: 128, 384>}, {pipeline_mode = #tpu.pipeline_mode<synchronous>, transform_indices = @transform_8, window_bounds = array<i64: 128, 256>}, {pipeline_mode = #tpu.pipeline_mode<synchronous>, transform_indices = @transform_9, window_bounds = array<i64: 1, 256>}, {pipeline_mode = #tpu.pipeline_mode<synchronous>, transform_indices = @transform_10, window_bounds = array<i64: 128, 128>}, {pipeline_mode = #tpu.pipeline_mode<synchronous>, transform_indices = @transform_11, window_bounds = array<i64: 1, 128>}, {transform_indices = @transform_12, window_bounds = array<i64: 64, 128>}, {pipeline_mode = #tpu.pipeline_mode<synchronous>, transform_indices = @transform_13, window_bounds = array<i64: 2, 8, 128>}]} {
    %c0_i32 = arith.constant 0 : i32
    %0 = arith.cmpi eq, %arg0, %c0_i32 : i32
    %1 = arith.extui %0 : i1 to i32
    %c0_i32_0 = arith.constant 0 : i32
    %2 = arith.cmpi ne, %1, %c0_i32_0 : i32
    scf.if %2 {
      %c0_324 = arith.constant 0 : index
      %c0_325 = arith.constant 0 : index
      %c0_326 = arith.constant 0 : index
      %566 = vector.load %arg2[%c0_324, %c0_325, %c0_326] : memref<2x8x128xf32, #tpu.memory_space<vmem>>, vector<2x8x128xf32>
      %c0_327 = arith.constant 0 : index
      %c0_328 = arith.constant 0 : index
      %c0_329 = arith.constant 0 : index
      %567 = vector.load %arg14[%c0_327, %c0_328, %c0_329] : memref<2x8x128xf32, #tpu.memory_space<vmem>>, vector<2x8x128xf32>
      tpu.vector_store %arg14[%c0_327, %c0_328, %c0_329], %566 {strides = array<i32>} : memref<2x8x128xf32, #tpu.memory_space<vmem>>, vector<2x8x128xf32>,
    } else {
    }
    %c0 = arith.constant 0 : index
    %c0_1 = arith.constant 0 : index
    %3 = vector.load %arg1[%c0, %c0_1] : memref<64x128xf32, #tpu.memory_space<vmem>>, vector<64x128xf32>
    %c0_2 = arith.constant 0 : index
    %c0_3 = arith.constant 0 : index
    %4 = vector.load %arg3[%c0_2, %c0_3] : memref<128x384xf32, #tpu.memory_space<vmem>>, vector<128x384xf32>
    %cst = arith.constant dense<0.000000e+00> : vector<64x384xf32>
    %5 = tpu.matmul %3, %4, %cst {dimension_numbers = #tpu.dot_dimension_numbers<[1], [0], [0], [1], [0, 0, 1, 1], [], []>} : vector<64x128xf32>, vector<128x384xf32>, vector<64x384xf32> -> vector<64x384xf32>
    %c0_4 = arith.constant 0 : index
    %c0_5 = arith.constant 0 : index
    %c0_6 = arith.constant 0 : index
    %6 = vector.load %arg14[%c0_4, %c0_5, %c0_6] : memref<2x8x128xf32, #tpu.memory_space<vmem>>, vector<1x8x128xf32>
    %7 = vector.shape_cast %6 : vector<1x8x128xf32> to vector<8x128xf32>
    %8 = vector.extract_strided_slice %5 {offsets = [0, 0], sizes = [8, 384], strides = [1, 1]} : vector<64x384xf32> to vector<8x384xf32>
    %9 = vector.extract_strided_slice %8 {offsets = [0, 0], sizes = [8, 256], strides = [1, 1]} : vector<8x384xf32> to vector<8x256xf32>
    %c0_7 = arith.constant 0 : index
    %c0_8 = arith.constant 0 : index
    %10 = vector.load %arg4[%c0_7, %c0_8] : memref<128x256xf32, #tpu.memory_space<vmem>>, vector<128x256xf32>
    %cst_9 = arith.constant dense<0.000000e+00> : vector<8x256xf32>
    %11 = tpu.matmul %7, %10, %cst_9 {dimension_numbers = #tpu.dot_dimension_numbers<[1], [0], [0], [1], [0, 0, 1, 1], [], []>} : vector<8x128xf32>, vector<128x256xf32>, vector<8x256xf32> -> vector<8x256xf32>
    %12 = arith.addf %9, %11 : vector<8x256xf32>
    %c0_10 = arith.constant 0 : index
    %c0_11 = arith.constant 0 : index
    %13 = vector.load %arg5[%c0_10, %c0_11] : memref<1x256xf32, #tpu.memory_space<vmem>>, vector<1x256xf32>
    %14 = vector.broadcast %13 : vector<1x256xf32> to vector<8x256xf32>
    %15 = arith.addf %12, %14 : vector<8x256xf32>
    %16 = arith.negf %15 : vector<8x256xf32>
    %17 = math.exp %16 : vector<8x256xf32>
    %cst_12 = arith.constant 1.000000e+00 : f32
    %18 = vector.broadcast %cst_12 : f32 to vector<8x256xf32>
    %19 = arith.addf %18, %17 : vector<8x256xf32>
    %20 = arith.divf %18, %19 : vector<8x256xf32>
    %21 = vector.extract_strided_slice %20 {offsets = [0, 0], sizes = [8, 128], strides = [1, 1]} : vector<8x256xf32> to vector<8x128xf32>
    %22 = vector.extract_strided_slice %20 {offsets = [0, 128], sizes = [8, 128], strides = [1, 1]} : vector<8x256xf32> to vector<8x128xf32>
    %23 = vector.extract_strided_slice %8 {offsets = [0, 256], sizes = [8, 128], strides = [1, 1]} : vector<8x384xf32> to vector<8x128xf32>
    %24 = arith.mulf %22, %7 : vector<8x128xf32>
    %c0_13 = arith.constant 0 : index
    %c0_14 = arith.constant 0 : index
    %25 = vector.load %arg6[%c0_13, %c0_14] : memref<128x128xf32, #tpu.memory_space<vmem>>, vector<128x128xf32>
    %cst_15 = arith.constant dense<0.000000e+00> : vector<8x128xf32>
    %26 = tpu.matmul %24, %25, %cst_15 {dimension_numbers = #tpu.dot_dimension_numbers<[1], [0], [0], [1], [0, 0, 1, 1], [], []>} : vector<8x128xf32>, vector<128x128xf32>, vector<8x128xf32> -> vector<8x128xf32>
    %27 = arith.addf %23, %26 : vector<8x128xf32>
    %c0_16 = arith.constant 0 : index
    %c0_17 = arith.constant 0 : index
    %28 = vector.load %arg7[%c0_16, %c0_17] : memref<1x128xf32, #tpu.memory_space<vmem>>, vector<1x128xf32>
    %29 = vector.broadcast %28 : vector<1x128xf32> to vector<8x128xf32>
    %30 = arith.addf %27, %29 : vector<8x128xf32>
    %31 = math.tanh %30 : vector<8x128xf32>
    %32 = arith.mulf %21, %7 : vector<8x128xf32>
    %cst_18 = arith.constant 1.000000e+00 : f32
    %33 = vector.broadcast %cst_18 : f32 to vector<8x128xf32>
    %34 = arith.subf %33, %21 : vector<8x128xf32>
    %35 = arith.mulf %34, %31 : vector<8x128xf32>
    %36 = arith.addf %32, %35 : vector<8x128xf32>
    %c0_19 = arith.constant 0 : index
    %c0_20 = arith.constant 0 : index
    %c0_21 = arith.constant 0 : index
    %37 = vector.load %arg14[%c0_19, %c0_20, %c0_21] : memref<2x8x128xf32, #tpu.memory_space<vmem>>, vector<1x8x128xf32>
    %38 = vector.shape_cast %37 : vector<1x8x128xf32> to vector<8x128xf32>
    %39 = vector.shape_cast %36 : vector<8x128xf32> to vector<1x8x128xf32>
    tpu.vector_store %arg14[%c0_19, %c0_20, %c0_21], %39 {strides = array<i32>} : memref<2x8x128xf32, #tpu.memory_space<vmem>>, vector<1x8x128xf32>,
    %c1 = arith.constant 1 : index
    %c0_22 = arith.constant 0 : index
    %c0_23 = arith.constant 0 : index
    %40 = vector.load %arg14[%c1, %c0_22, %c0_23] : memref<2x8x128xf32, #tpu.memory_space<vmem>>, vector<1x8x128xf32>
    %41 = vector.shape_cast %40 : vector<1x8x128xf32> to vector<8x128xf32>
    %c0_24 = arith.constant 0 : index
    %c0_25 = arith.constant 0 : index
    %42 = vector.load %arg8[%c0_24, %c0_25] : memref<128x384xf32, #tpu.memory_space<vmem>>, vector<128x384xf32>
    %cst_26 = arith.constant dense<0.000000e+00> : vector<8x384xf32>
    %43 = tpu.matmul %36, %42, %cst_26 {dimension_numbers = #tpu.dot_dimension_numbers<[1], [0], [0], [1], [0, 0, 1, 1], [], []>} : vector<8x128xf32>, vector<128x384xf32>, vector<8x384xf32> -> vector<8x384xf32>
    %44 = vector.extract_strided_slice %43 {offsets = [0, 0], sizes = [8, 256], strides = [1, 1]} : vector<8x384xf32> to vector<8x256xf32>
    %c0_27 = arith.constant 0 : index
    %c0_28 = arith.constant 0 : index
    %45 = vector.load %arg9[%c0_27, %c0_28] : memref<128x256xf32, #tpu.memory_space<vmem>>, vector<128x256xf32>
    %cst_29 = arith.constant dense<0.000000e+00> : vector<8x256xf32>
    %46 = tpu.matmul %41, %45, %cst_29 {dimension_numbers = #tpu.dot_dimension_numbers<[1], [0], [0], [1], [0, 0, 1, 1], [], []>} : vector<8x128xf32>, vector<128x256xf32>, vector<8x256xf32> -> vector<8x256xf32>
    %47 = arith.addf %44, %46 : vector<8x256xf32>
    %c0_30 = arith.constant 0 : index
    %c0_31 = arith.constant 0 : index
    %48 = vector.load %arg10[%c0_30, %c0_31] : memref<1x256xf32, #tpu.memory_space<vmem>>, vector<1x256xf32>
    %49 = vector.broadcast %48 : vector<1x256xf32> to vector<8x256xf32>
    %50 = arith.addf %47, %49 : vector<8x256xf32>
    %51 = arith.negf %50 : vector<8x256xf32>
    %52 = math.exp %51 : vector<8x256xf32>
    %cst_32 = arith.constant 1.000000e+00 : f32
    %53 = vector.broadcast %cst_32 : f32 to vector<8x256xf32>
    %54 = arith.addf %53, %52 : vector<8x256xf32>
    %55 = arith.divf %53, %54 : vector<8x256xf32>
    %56 = vector.extract_strided_slice %55 {offsets = [0, 0], sizes = [8, 128], strides = [1, 1]} : vector<8x256xf32> to vector<8x128xf32>
    %57 = vector.extract_strided_slice %55 {offsets = [0, 128], sizes = [8, 128], strides = [1, 1]} : vector<8x256xf32> to vector<8x128xf32>
    %58 = vector.extract_strided_slice %43 {offsets = [0, 256], sizes = [8, 128], strides = [1, 1]} : vector<8x384xf32> to vector<8x128xf32>
    %59 = arith.mulf %57, %41 : vector<8x128xf32>
    %c0_33 = arith.constant 0 : index
    %c0_34 = arith.constant 0 : index
    %60 = vector.load %arg11[%c0_33, %c0_34] : memref<128x128xf32, #tpu.memory_space<vmem>>, vector<128x128xf32>
    %cst_35 = arith.constant dense<0.000000e+00> : vector<8x128xf32>
    %61 = tpu.matmul %59, %60, %cst_35 {dimension_numbers = #tpu.dot_dimension_numbers<[1], [0], [0], [1], [0, 0, 1, 1], [], []>} : vector<8x128xf32>, vector<128x128xf32>, vector<8x128xf32> -> vector<8x128xf32>
    %62 = arith.addf %58, %61 : vector<8x128xf32>
    %c0_36 = arith.constant 0 : index
    %c0_37 = arith.constant 0 : index
    %63 = vector.load %arg12[%c0_36, %c0_37] : memref<1x128xf32, #tpu.memory_space<vmem>>, vector<1x128xf32>
    %64 = vector.broadcast %63 : vector<1x128xf32> to vector<8x128xf32>
    %65 = arith.addf %62, %64 : vector<8x128xf32>
    %66 = math.tanh %65 : vector<8x128xf32>
    %67 = arith.mulf %56, %41 : vector<8x128xf32>
    %cst_38 = arith.constant 1.000000e+00 : f32
    %68 = vector.broadcast %cst_38 : f32 to vector<8x128xf32>
    %69 = arith.subf %68, %56 : vector<8x128xf32>
    %70 = arith.mulf %69, %66 : vector<8x128xf32>
    %71 = arith.addf %67, %70 : vector<8x128xf32>
    %c1_39 = arith.constant 1 : index
    %c0_40 = arith.constant 0 : index
    %c0_41 = arith.constant 0 : index
    %72 = vector.load %arg14[%c1_39, %c0_40, %c0_41] : memref<2x8x128xf32, #tpu.memory_space<vmem>>, vector<1x8x128xf32>
    %73 = vector.shape_cast %72 : vector<1x8x128xf32> to vector<8x128xf32>
    %74 = vector.shape_cast %71 : vector<8x128xf32> to vector<1x8x128xf32>
    tpu.vector_store %arg14[%c1_39, %c0_40, %c0_41], %74 {strides = array<i32>} : memref<2x8x128xf32, #tpu.memory_space<vmem>>, vector<1x8x128xf32>,
    %c0_42 = arith.constant 0 : index
    %c0_43 = arith.constant 0 : index
    %75 = vector.load %arg13[%c0_42, %c0_43] : memref<64x128xf32, #tpu.memory_space<vmem>>, vector<8x128xf32>
    tpu.vector_store %arg13[%c0_42, %c0_43], %71 {strides = array<i32>} : memref<64x128xf32, #tpu.memory_space<vmem>>, vector<8x128xf32>,
    %c0_44 = arith.constant 0 : index
    %c0_45 = arith.constant 0 : index
    %c0_46 = arith.constant 0 : index
    %76 = vector.load %arg14[%c0_44, %c0_45, %c0_46] : memref<2x8x128xf32, #tpu.memory_space<vmem>>, vector<1x8x128xf32>
    %77 = vector.shape_cast %76 : vector<1x8x128xf32> to vector<8x128xf32>
    %78 = vector.extract_strided_slice %5 {offsets = [8, 0], sizes = [8, 384], strides = [1, 1]} : vector<64x384xf32> to vector<8x384xf32>
    %79 = vector.extract_strided_slice %78 {offsets = [0, 0], sizes = [8, 256], strides = [1, 1]} : vector<8x384xf32> to vector<8x256xf32>
    %c0_47 = arith.constant 0 : index
    %c0_48 = arith.constant 0 : index
    %80 = vector.load %arg4[%c0_47, %c0_48] : memref<128x256xf32, #tpu.memory_space<vmem>>, vector<128x256xf32>
    %cst_49 = arith.constant dense<0.000000e+00> : vector<8x256xf32>
    %81 = tpu.matmul %77, %80, %cst_49 {dimension_numbers = #tpu.dot_dimension_numbers<[1], [0], [0], [1], [0, 0, 1, 1], [], []>} : vector<8x128xf32>, vector<128x256xf32>, vector<8x256xf32> -> vector<8x256xf32>
    %82 = arith.addf %79, %81 : vector<8x256xf32>
    %c0_50 = arith.constant 0 : index
    %c0_51 = arith.constant 0 : index
    %83 = vector.load %arg5[%c0_50, %c0_51] : memref<1x256xf32, #tpu.memory_space<vmem>>, vector<1x256xf32>
    %84 = vector.broadcast %83 : vector<1x256xf32> to vector<8x256xf32>
    %85 = arith.addf %82, %84 : vector<8x256xf32>
    %86 = arith.negf %85 : vector<8x256xf32>
    %87 = math.exp %86 : vector<8x256xf32>
    %cst_52 = arith.constant 1.000000e+00 : f32
    %88 = vector.broadcast %cst_52 : f32 to vector<8x256xf32>
    %89 = arith.addf %88, %87 : vector<8x256xf32>
    %90 = arith.divf %88, %89 : vector<8x256xf32>
    %91 = vector.extract_strided_slice %90 {offsets = [0, 0], sizes = [8, 128], strides = [1, 1]} : vector<8x256xf32> to vector<8x128xf32>
    %92 = vector.extract_strided_slice %90 {offsets = [0, 128], sizes = [8, 128], strides = [1, 1]} : vector<8x256xf32> to vector<8x128xf32>
    %93 = vector.extract_strided_slice %78 {offsets = [0, 256], sizes = [8, 128], strides = [1, 1]} : vector<8x384xf32> to vector<8x128xf32>
    %94 = arith.mulf %92, %77 : vector<8x128xf32>
    %c0_53 = arith.constant 0 : index
    %c0_54 = arith.constant 0 : index
    %95 = vector.load %arg6[%c0_53, %c0_54] : memref<128x128xf32, #tpu.memory_space<vmem>>, vector<128x128xf32>
    %cst_55 = arith.constant dense<0.000000e+00> : vector<8x128xf32>
    %96 = tpu.matmul %94, %95, %cst_55 {dimension_numbers = #tpu.dot_dimension_numbers<[1], [0], [0], [1], [0, 0, 1, 1], [], []>} : vector<8x128xf32>, vector<128x128xf32>, vector<8x128xf32> -> vector<8x128xf32>
    %97 = arith.addf %93, %96 : vector<8x128xf32>
    %c0_56 = arith.constant 0 : index
    %c0_57 = arith.constant 0 : index
    %98 = vector.load %arg7[%c0_56, %c0_57] : memref<1x128xf32, #tpu.memory_space<vmem>>, vector<1x128xf32>
    %99 = vector.broadcast %98 : vector<1x128xf32> to vector<8x128xf32>
    %100 = arith.addf %97, %99 : vector<8x128xf32>
    %101 = math.tanh %100 : vector<8x128xf32>
    %102 = arith.mulf %91, %77 : vector<8x128xf32>
    %cst_58 = arith.constant 1.000000e+00 : f32
    %103 = vector.broadcast %cst_58 : f32 to vector<8x128xf32>
    %104 = arith.subf %103, %91 : vector<8x128xf32>
    %105 = arith.mulf %104, %101 : vector<8x128xf32>
    %106 = arith.addf %102, %105 : vector<8x128xf32>
    %c0_59 = arith.constant 0 : index
    %c0_60 = arith.constant 0 : index
    %c0_61 = arith.constant 0 : index
    %107 = vector.load %arg14[%c0_59, %c0_60, %c0_61] : memref<2x8x128xf32, #tpu.memory_space<vmem>>, vector<1x8x128xf32>
    %108 = vector.shape_cast %107 : vector<1x8x128xf32> to vector<8x128xf32>
    %109 = vector.shape_cast %106 : vector<8x128xf32> to vector<1x8x128xf32>
    tpu.vector_store %arg14[%c0_59, %c0_60, %c0_61], %109 {strides = array<i32>} : memref<2x8x128xf32, #tpu.memory_space<vmem>>, vector<1x8x128xf32>,
    %c1_62 = arith.constant 1 : index
    %c0_63 = arith.constant 0 : index
    %c0_64 = arith.constant 0 : index
    %110 = vector.load %arg14[%c1_62, %c0_63, %c0_64] : memref<2x8x128xf32, #tpu.memory_space<vmem>>, vector<1x8x128xf32>
    %111 = vector.shape_cast %110 : vector<1x8x128xf32> to vector<8x128xf32>
    %c0_65 = arith.constant 0 : index
    %c0_66 = arith.constant 0 : index
    %112 = vector.load %arg8[%c0_65, %c0_66] : memref<128x384xf32, #tpu.memory_space<vmem>>, vector<128x384xf32>
    %cst_67 = arith.constant dense<0.000000e+00> : vector<8x384xf32>
    %113 = tpu.matmul %106, %112, %cst_67 {dimension_numbers = #tpu.dot_dimension_numbers<[1], [0], [0], [1], [0, 0, 1, 1], [], []>} : vector<8x128xf32>, vector<128x384xf32>, vector<8x384xf32> -> vector<8x384xf32>
    %114 = vector.extract_strided_slice %113 {offsets = [0, 0], sizes = [8, 256], strides = [1, 1]} : vector<8x384xf32> to vector<8x256xf32>
    %c0_68 = arith.constant 0 : index
    %c0_69 = arith.constant 0 : index
    %115 = vector.load %arg9[%c0_68, %c0_69] : memref<128x256xf32, #tpu.memory_space<vmem>>, vector<128x256xf32>
    %cst_70 = arith.constant dense<0.000000e+00> : vector<8x256xf32>
    %116 = tpu.matmul %111, %115, %cst_70 {dimension_numbers = #tpu.dot_dimension_numbers<[1], [0], [0], [1], [0, 0, 1, 1], [], []>} : vector<8x128xf32>, vector<128x256xf32>, vector<8x256xf32> -> vector<8x256xf32>
    %117 = arith.addf %114, %116 : vector<8x256xf32>
    %c0_71 = arith.constant 0 : index
    %c0_72 = arith.constant 0 : index
    %118 = vector.load %arg10[%c0_71, %c0_72] : memref<1x256xf32, #tpu.memory_space<vmem>>, vector<1x256xf32>
    %119 = vector.broadcast %118 : vector<1x256xf32> to vector<8x256xf32>
    %120 = arith.addf %117, %119 : vector<8x256xf32>
    %121 = arith.negf %120 : vector<8x256xf32>
    %122 = math.exp %121 : vector<8x256xf32>
    %cst_73 = arith.constant 1.000000e+00 : f32
    %123 = vector.broadcast %cst_73 : f32 to vector<8x256xf32>
    %124 = arith.addf %123, %122 : vector<8x256xf32>
    %125 = arith.divf %123, %124 : vector<8x256xf32>
    %126 = vector.extract_strided_slice %125 {offsets = [0, 0], sizes = [8, 128], strides = [1, 1]} : vector<8x256xf32> to vector<8x128xf32>
    %127 = vector.extract_strided_slice %125 {offsets = [0, 128], sizes = [8, 128], strides = [1, 1]} : vector<8x256xf32> to vector<8x128xf32>
    %128 = vector.extract_strided_slice %113 {offsets = [0, 256], sizes = [8, 128], strides = [1, 1]} : vector<8x384xf32> to vector<8x128xf32>
    %129 = arith.mulf %127, %111 : vector<8x128xf32>
    %c0_74 = arith.constant 0 : index
    %c0_75 = arith.constant 0 : index
    %130 = vector.load %arg11[%c0_74, %c0_75] : memref<128x128xf32, #tpu.memory_space<vmem>>, vector<128x128xf32>
    %cst_76 = arith.constant dense<0.000000e+00> : vector<8x128xf32>
    %131 = tpu.matmul %129, %130, %cst_76 {dimension_numbers = #tpu.dot_dimension_numbers<[1], [0], [0], [1], [0, 0, 1, 1], [], []>} : vector<8x128xf32>, vector<128x128xf32>, vector<8x128xf32> -> vector<8x128xf32>
    %132 = arith.addf %128, %131 : vector<8x128xf32>
    %c0_77 = arith.constant 0 : index
    %c0_78 = arith.constant 0 : index
    %133 = vector.load %arg12[%c0_77, %c0_78] : memref<1x128xf32, #tpu.memory_space<vmem>>, vector<1x128xf32>
    %134 = vector.broadcast %133 : vector<1x128xf32> to vector<8x128xf32>
    %135 = arith.addf %132, %134 : vector<8x128xf32>
    %136 = math.tanh %135 : vector<8x128xf32>
    %137 = arith.mulf %126, %111 : vector<8x128xf32>
    %cst_79 = arith.constant 1.000000e+00 : f32
    %138 = vector.broadcast %cst_79 : f32 to vector<8x128xf32>
    %139 = arith.subf %138, %126 : vector<8x128xf32>
    %140 = arith.mulf %139, %136 : vector<8x128xf32>
    %141 = arith.addf %137, %140 : vector<8x128xf32>
    %c1_80 = arith.constant 1 : index
    %c0_81 = arith.constant 0 : index
    %c0_82 = arith.constant 0 : index
    %142 = vector.load %arg14[%c1_80, %c0_81, %c0_82] : memref<2x8x128xf32, #tpu.memory_space<vmem>>, vector<1x8x128xf32>
    %143 = vector.shape_cast %142 : vector<1x8x128xf32> to vector<8x128xf32>
    %144 = vector.shape_cast %141 : vector<8x128xf32> to vector<1x8x128xf32>
    tpu.vector_store %arg14[%c1_80, %c0_81, %c0_82], %144 {strides = array<i32>} : memref<2x8x128xf32, #tpu.memory_space<vmem>>, vector<1x8x128xf32>,
    %c8 = arith.constant 8 : index
    %c0_83 = arith.constant 0 : index
    %145 = vector.load %arg13[%c8, %c0_83] : memref<64x128xf32, #tpu.memory_space<vmem>>, vector<8x128xf32>
    tpu.vector_store %arg13[%c8, %c0_83], %141 {strides = array<i32>} : memref<64x128xf32, #tpu.memory_space<vmem>>, vector<8x128xf32>,
    %c0_84 = arith.constant 0 : index
    %c0_85 = arith.constant 0 : index
    %c0_86 = arith.constant 0 : index
    %146 = vector.load %arg14[%c0_84, %c0_85, %c0_86] : memref<2x8x128xf32, #tpu.memory_space<vmem>>, vector<1x8x128xf32>
    %147 = vector.shape_cast %146 : vector<1x8x128xf32> to vector<8x128xf32>
    %148 = vector.extract_strided_slice %5 {offsets = [16, 0], sizes = [8, 384], strides = [1, 1]} : vector<64x384xf32> to vector<8x384xf32>
    %149 = vector.extract_strided_slice %148 {offsets = [0, 0], sizes = [8, 256], strides = [1, 1]} : vector<8x384xf32> to vector<8x256xf32>
    %c0_87 = arith.constant 0 : index
    %c0_88 = arith.constant 0 : index
    %150 = vector.load %arg4[%c0_87, %c0_88] : memref<128x256xf32, #tpu.memory_space<vmem>>, vector<128x256xf32>
    %cst_89 = arith.constant dense<0.000000e+00> : vector<8x256xf32>
    %151 = tpu.matmul %147, %150, %cst_89 {dimension_numbers = #tpu.dot_dimension_numbers<[1], [0], [0], [1], [0, 0, 1, 1], [], []>} : vector<8x128xf32>, vector<128x256xf32>, vector<8x256xf32> -> vector<8x256xf32>
    %152 = arith.addf %149, %151 : vector<8x256xf32>
    %c0_90 = arith.constant 0 : index
    %c0_91 = arith.constant 0 : index
    %153 = vector.load %arg5[%c0_90, %c0_91] : memref<1x256xf32, #tpu.memory_space<vmem>>, vector<1x256xf32>
    %154 = vector.broadcast %153 : vector<1x256xf32> to vector<8x256xf32>
    %155 = arith.addf %152, %154 : vector<8x256xf32>
    %156 = arith.negf %155 : vector<8x256xf32>
    %157 = math.exp %156 : vector<8x256xf32>
    %cst_92 = arith.constant 1.000000e+00 : f32
    %158 = vector.broadcast %cst_92 : f32 to vector<8x256xf32>
    %159 = arith.addf %158, %157 : vector<8x256xf32>
    %160 = arith.divf %158, %159 : vector<8x256xf32>
    %161 = vector.extract_strided_slice %160 {offsets = [0, 0], sizes = [8, 128], strides = [1, 1]} : vector<8x256xf32> to vector<8x128xf32>
    %162 = vector.extract_strided_slice %160 {offsets = [0, 128], sizes = [8, 128], strides = [1, 1]} : vector<8x256xf32> to vector<8x128xf32>
    %163 = vector.extract_strided_slice %148 {offsets = [0, 256], sizes = [8, 128], strides = [1, 1]} : vector<8x384xf32> to vector<8x128xf32>
    %164 = arith.mulf %162, %147 : vector<8x128xf32>
    %c0_93 = arith.constant 0 : index
    %c0_94 = arith.constant 0 : index
    %165 = vector.load %arg6[%c0_93, %c0_94] : memref<128x128xf32, #tpu.memory_space<vmem>>, vector<128x128xf32>
    %cst_95 = arith.constant dense<0.000000e+00> : vector<8x128xf32>
    %166 = tpu.matmul %164, %165, %cst_95 {dimension_numbers = #tpu.dot_dimension_numbers<[1], [0], [0], [1], [0, 0, 1, 1], [], []>} : vector<8x128xf32>, vector<128x128xf32>, vector<8x128xf32> -> vector<8x128xf32>
    %167 = arith.addf %163, %166 : vector<8x128xf32>
    %c0_96 = arith.constant 0 : index
    %c0_97 = arith.constant 0 : index
    %168 = vector.load %arg7[%c0_96, %c0_97] : memref<1x128xf32, #tpu.memory_space<vmem>>, vector<1x128xf32>
    %169 = vector.broadcast %168 : vector<1x128xf32> to vector<8x128xf32>
    %170 = arith.addf %167, %169 : vector<8x128xf32>
    %171 = math.tanh %170 : vector<8x128xf32>
    %172 = arith.mulf %161, %147 : vector<8x128xf32>
    %cst_98 = arith.constant 1.000000e+00 : f32
    %173 = vector.broadcast %cst_98 : f32 to vector<8x128xf32>
    %174 = arith.subf %173, %161 : vector<8x128xf32>
    %175 = arith.mulf %174, %171 : vector<8x128xf32>
    %176 = arith.addf %172, %175 : vector<8x128xf32>
    %c0_99 = arith.constant 0 : index
    %c0_100 = arith.constant 0 : index
    %c0_101 = arith.constant 0 : index
    %177 = vector.load %arg14[%c0_99, %c0_100, %c0_101] : memref<2x8x128xf32, #tpu.memory_space<vmem>>, vector<1x8x128xf32>
    %178 = vector.shape_cast %177 : vector<1x8x128xf32> to vector<8x128xf32>
    %179 = vector.shape_cast %176 : vector<8x128xf32> to vector<1x8x128xf32>
    tpu.vector_store %arg14[%c0_99, %c0_100, %c0_101], %179 {strides = array<i32>} : memref<2x8x128xf32, #tpu.memory_space<vmem>>, vector<1x8x128xf32>,
    %c1_102 = arith.constant 1 : index
    %c0_103 = arith.constant 0 : index
    %c0_104 = arith.constant 0 : index
    %180 = vector.load %arg14[%c1_102, %c0_103, %c0_104] : memref<2x8x128xf32, #tpu.memory_space<vmem>>, vector<1x8x128xf32>
    %181 = vector.shape_cast %180 : vector<1x8x128xf32> to vector<8x128xf32>
    %c0_105 = arith.constant 0 : index
    %c0_106 = arith.constant 0 : index
    %182 = vector.load %arg8[%c0_105, %c0_106] : memref<128x384xf32, #tpu.memory_space<vmem>>, vector<128x384xf32>
    %cst_107 = arith.constant dense<0.000000e+00> : vector<8x384xf32>
    %183 = tpu.matmul %176, %182, %cst_107 {dimension_numbers = #tpu.dot_dimension_numbers<[1], [0], [0], [1], [0, 0, 1, 1], [], []>} : vector<8x128xf32>, vector<128x384xf32>, vector<8x384xf32> -> vector<8x384xf32>
    %184 = vector.extract_strided_slice %183 {offsets = [0, 0], sizes = [8, 256], strides = [1, 1]} : vector<8x384xf32> to vector<8x256xf32>
    %c0_108 = arith.constant 0 : index
    %c0_109 = arith.constant 0 : index
    %185 = vector.load %arg9[%c0_108, %c0_109] : memref<128x256xf32, #tpu.memory_space<vmem>>, vector<128x256xf32>
    %cst_110 = arith.constant dense<0.000000e+00> : vector<8x256xf32>
    %186 = tpu.matmul %181, %185, %cst_110 {dimension_numbers = #tpu.dot_dimension_numbers<[1], [0], [0], [1], [0, 0, 1, 1], [], []>} : vector<8x128xf32>, vector<128x256xf32>, vector<8x256xf32> -> vector<8x256xf32>
    %187 = arith.addf %184, %186 : vector<8x256xf32>
    %c0_111 = arith.constant 0 : index
    %c0_112 = arith.constant 0 : index
    %188 = vector.load %arg10[%c0_111, %c0_112] : memref<1x256xf32, #tpu.memory_space<vmem>>, vector<1x256xf32>
    %189 = vector.broadcast %188 : vector<1x256xf32> to vector<8x256xf32>
    %190 = arith.addf %187, %189 : vector<8x256xf32>
    %191 = arith.negf %190 : vector<8x256xf32>
    %192 = math.exp %191 : vector<8x256xf32>
    %cst_113 = arith.constant 1.000000e+00 : f32
    %193 = vector.broadcast %cst_113 : f32 to vector<8x256xf32>
    %194 = arith.addf %193, %192 : vector<8x256xf32>
    %195 = arith.divf %193, %194 : vector<8x256xf32>
    %196 = vector.extract_strided_slice %195 {offsets = [0, 0], sizes = [8, 128], strides = [1, 1]} : vector<8x256xf32> to vector<8x128xf32>
    %197 = vector.extract_strided_slice %195 {offsets = [0, 128], sizes = [8, 128], strides = [1, 1]} : vector<8x256xf32> to vector<8x128xf32>
    %198 = vector.extract_strided_slice %183 {offsets = [0, 256], sizes = [8, 128], strides = [1, 1]} : vector<8x384xf32> to vector<8x128xf32>
    %199 = arith.mulf %197, %181 : vector<8x128xf32>
    %c0_114 = arith.constant 0 : index
    %c0_115 = arith.constant 0 : index
    %200 = vector.load %arg11[%c0_114, %c0_115] : memref<128x128xf32, #tpu.memory_space<vmem>>, vector<128x128xf32>
    %cst_116 = arith.constant dense<0.000000e+00> : vector<8x128xf32>
    %201 = tpu.matmul %199, %200, %cst_116 {dimension_numbers = #tpu.dot_dimension_numbers<[1], [0], [0], [1], [0, 0, 1, 1], [], []>} : vector<8x128xf32>, vector<128x128xf32>, vector<8x128xf32> -> vector<8x128xf32>
    %202 = arith.addf %198, %201 : vector<8x128xf32>
    %c0_117 = arith.constant 0 : index
    %c0_118 = arith.constant 0 : index
    %203 = vector.load %arg12[%c0_117, %c0_118] : memref<1x128xf32, #tpu.memory_space<vmem>>, vector<1x128xf32>
    %204 = vector.broadcast %203 : vector<1x128xf32> to vector<8x128xf32>
    %205 = arith.addf %202, %204 : vector<8x128xf32>
    %206 = math.tanh %205 : vector<8x128xf32>
    %207 = arith.mulf %196, %181 : vector<8x128xf32>
    %cst_119 = arith.constant 1.000000e+00 : f32
    %208 = vector.broadcast %cst_119 : f32 to vector<8x128xf32>
    %209 = arith.subf %208, %196 : vector<8x128xf32>
    %210 = arith.mulf %209, %206 : vector<8x128xf32>
    %211 = arith.addf %207, %210 : vector<8x128xf32>
    %c1_120 = arith.constant 1 : index
    %c0_121 = arith.constant 0 : index
    %c0_122 = arith.constant 0 : index
    %212 = vector.load %arg14[%c1_120, %c0_121, %c0_122] : memref<2x8x128xf32, #tpu.memory_space<vmem>>, vector<1x8x128xf32>
    %213 = vector.shape_cast %212 : vector<1x8x128xf32> to vector<8x128xf32>
    %214 = vector.shape_cast %211 : vector<8x128xf32> to vector<1x8x128xf32>
    tpu.vector_store %arg14[%c1_120, %c0_121, %c0_122], %214 {strides = array<i32>} : memref<2x8x128xf32, #tpu.memory_space<vmem>>, vector<1x8x128xf32>,
    %c16 = arith.constant 16 : index
    %c0_123 = arith.constant 0 : index
    %215 = vector.load %arg13[%c16, %c0_123] : memref<64x128xf32, #tpu.memory_space<vmem>>, vector<8x128xf32>
    tpu.vector_store %arg13[%c16, %c0_123], %211 {strides = array<i32>} : memref<64x128xf32, #tpu.memory_space<vmem>>, vector<8x128xf32>,
    %c0_124 = arith.constant 0 : index
    %c0_125 = arith.constant 0 : index
    %c0_126 = arith.constant 0 : index
    %216 = vector.load %arg14[%c0_124, %c0_125, %c0_126] : memref<2x8x128xf32, #tpu.memory_space<vmem>>, vector<1x8x128xf32>
    %217 = vector.shape_cast %216 : vector<1x8x128xf32> to vector<8x128xf32>
    %218 = vector.extract_strided_slice %5 {offsets = [24, 0], sizes = [8, 384], strides = [1, 1]} : vector<64x384xf32> to vector<8x384xf32>
    %219 = vector.extract_strided_slice %218 {offsets = [0, 0], sizes = [8, 256], strides = [1, 1]} : vector<8x384xf32> to vector<8x256xf32>
    %c0_127 = arith.constant 0 : index
    %c0_128 = arith.constant 0 : index
    %220 = vector.load %arg4[%c0_127, %c0_128] : memref<128x256xf32, #tpu.memory_space<vmem>>, vector<128x256xf32>
    %cst_129 = arith.constant dense<0.000000e+00> : vector<8x256xf32>
    %221 = tpu.matmul %217, %220, %cst_129 {dimension_numbers = #tpu.dot_dimension_numbers<[1], [0], [0], [1], [0, 0, 1, 1], [], []>} : vector<8x128xf32>, vector<128x256xf32>, vector<8x256xf32> -> vector<8x256xf32>
    %222 = arith.addf %219, %221 : vector<8x256xf32>
    %c0_130 = arith.constant 0 : index
    %c0_131 = arith.constant 0 : index
    %223 = vector.load %arg5[%c0_130, %c0_131] : memref<1x256xf32, #tpu.memory_space<vmem>>, vector<1x256xf32>
    %224 = vector.broadcast %223 : vector<1x256xf32> to vector<8x256xf32>
    %225 = arith.addf %222, %224 : vector<8x256xf32>
    %226 = arith.negf %225 : vector<8x256xf32>
    %227 = math.exp %226 : vector<8x256xf32>
    %cst_132 = arith.constant 1.000000e+00 : f32
    %228 = vector.broadcast %cst_132 : f32 to vector<8x256xf32>
    %229 = arith.addf %228, %227 : vector<8x256xf32>
    %230 = arith.divf %228, %229 : vector<8x256xf32>
    %231 = vector.extract_strided_slice %230 {offsets = [0, 0], sizes = [8, 128], strides = [1, 1]} : vector<8x256xf32> to vector<8x128xf32>
    %232 = vector.extract_strided_slice %230 {offsets = [0, 128], sizes = [8, 128], strides = [1, 1]} : vector<8x256xf32> to vector<8x128xf32>
    %233 = vector.extract_strided_slice %218 {offsets = [0, 256], sizes = [8, 128], strides = [1, 1]} : vector<8x384xf32> to vector<8x128xf32>
    %234 = arith.mulf %232, %217 : vector<8x128xf32>
    %c0_133 = arith.constant 0 : index
    %c0_134 = arith.constant 0 : index
    %235 = vector.load %arg6[%c0_133, %c0_134] : memref<128x128xf32, #tpu.memory_space<vmem>>, vector<128x128xf32>
    %cst_135 = arith.constant dense<0.000000e+00> : vector<8x128xf32>
    %236 = tpu.matmul %234, %235, %cst_135 {dimension_numbers = #tpu.dot_dimension_numbers<[1], [0], [0], [1], [0, 0, 1, 1], [], []>} : vector<8x128xf32>, vector<128x128xf32>, vector<8x128xf32> -> vector<8x128xf32>
    %237 = arith.addf %233, %236 : vector<8x128xf32>
    %c0_136 = arith.constant 0 : index
    %c0_137 = arith.constant 0 : index
    %238 = vector.load %arg7[%c0_136, %c0_137] : memref<1x128xf32, #tpu.memory_space<vmem>>, vector<1x128xf32>
    %239 = vector.broadcast %238 : vector<1x128xf32> to vector<8x128xf32>
    %240 = arith.addf %237, %239 : vector<8x128xf32>
    %241 = math.tanh %240 : vector<8x128xf32>
    %242 = arith.mulf %231, %217 : vector<8x128xf32>
    %cst_138 = arith.constant 1.000000e+00 : f32
    %243 = vector.broadcast %cst_138 : f32 to vector<8x128xf32>
    %244 = arith.subf %243, %231 : vector<8x128xf32>
    %245 = arith.mulf %244, %241 : vector<8x128xf32>
    %246 = arith.addf %242, %245 : vector<8x128xf32>
    %c0_139 = arith.constant 0 : index
    %c0_140 = arith.constant 0 : index
    %c0_141 = arith.constant 0 : index
    %247 = vector.load %arg14[%c0_139, %c0_140, %c0_141] : memref<2x8x128xf32, #tpu.memory_space<vmem>>, vector<1x8x128xf32>
    %248 = vector.shape_cast %247 : vector<1x8x128xf32> to vector<8x128xf32>
    %249 = vector.shape_cast %246 : vector<8x128xf32> to vector<1x8x128xf32>
    tpu.vector_store %arg14[%c0_139, %c0_140, %c0_141], %249 {strides = array<i32>} : memref<2x8x128xf32, #tpu.memory_space<vmem>>, vector<1x8x128xf32>,
    %c1_142 = arith.constant 1 : index
    %c0_143 = arith.constant 0 : index
    %c0_144 = arith.constant 0 : index
    %250 = vector.load %arg14[%c1_142, %c0_143, %c0_144] : memref<2x8x128xf32, #tpu.memory_space<vmem>>, vector<1x8x128xf32>
    %251 = vector.shape_cast %250 : vector<1x8x128xf32> to vector<8x128xf32>
    %c0_145 = arith.constant 0 : index
    %c0_146 = arith.constant 0 : index
    %252 = vector.load %arg8[%c0_145, %c0_146] : memref<128x384xf32, #tpu.memory_space<vmem>>, vector<128x384xf32>
    %cst_147 = arith.constant dense<0.000000e+00> : vector<8x384xf32>
    %253 = tpu.matmul %246, %252, %cst_147 {dimension_numbers = #tpu.dot_dimension_numbers<[1], [0], [0], [1], [0, 0, 1, 1], [], []>} : vector<8x128xf32>, vector<128x384xf32>, vector<8x384xf32> -> vector<8x384xf32>
    %254 = vector.extract_strided_slice %253 {offsets = [0, 0], sizes = [8, 256], strides = [1, 1]} : vector<8x384xf32> to vector<8x256xf32>
    %c0_148 = arith.constant 0 : index
    %c0_149 = arith.constant 0 : index
    %255 = vector.load %arg9[%c0_148, %c0_149] : memref<128x256xf32, #tpu.memory_space<vmem>>, vector<128x256xf32>
    %cst_150 = arith.constant dense<0.000000e+00> : vector<8x256xf32>
    %256 = tpu.matmul %251, %255, %cst_150 {dimension_numbers = #tpu.dot_dimension_numbers<[1], [0], [0], [1], [0, 0, 1, 1], [], []>} : vector<8x128xf32>, vector<128x256xf32>, vector<8x256xf32> -> vector<8x256xf32>
    %257 = arith.addf %254, %256 : vector<8x256xf32>
    %c0_151 = arith.constant 0 : index
    %c0_152 = arith.constant 0 : index
    %258 = vector.load %arg10[%c0_151, %c0_152] : memref<1x256xf32, #tpu.memory_space<vmem>>, vector<1x256xf32>
    %259 = vector.broadcast %258 : vector<1x256xf32> to vector<8x256xf32>
    %260 = arith.addf %257, %259 : vector<8x256xf32>
    %261 = arith.negf %260 : vector<8x256xf32>
    %262 = math.exp %261 : vector<8x256xf32>
    %cst_153 = arith.constant 1.000000e+00 : f32
    %263 = vector.broadcast %cst_153 : f32 to vector<8x256xf32>
    %264 = arith.addf %263, %262 : vector<8x256xf32>
    %265 = arith.divf %263, %264 : vector<8x256xf32>
    %266 = vector.extract_strided_slice %265 {offsets = [0, 0], sizes = [8, 128], strides = [1, 1]} : vector<8x256xf32> to vector<8x128xf32>
    %267 = vector.extract_strided_slice %265 {offsets = [0, 128], sizes = [8, 128], strides = [1, 1]} : vector<8x256xf32> to vector<8x128xf32>
    %268 = vector.extract_strided_slice %253 {offsets = [0, 256], sizes = [8, 128], strides = [1, 1]} : vector<8x384xf32> to vector<8x128xf32>
    %269 = arith.mulf %267, %251 : vector<8x128xf32>
    %c0_154 = arith.constant 0 : index
    %c0_155 = arith.constant 0 : index
    %270 = vector.load %arg11[%c0_154, %c0_155] : memref<128x128xf32, #tpu.memory_space<vmem>>, vector<128x128xf32>
    %cst_156 = arith.constant dense<0.000000e+00> : vector<8x128xf32>
    %271 = tpu.matmul %269, %270, %cst_156 {dimension_numbers = #tpu.dot_dimension_numbers<[1], [0], [0], [1], [0, 0, 1, 1], [], []>} : vector<8x128xf32>, vector<128x128xf32>, vector<8x128xf32> -> vector<8x128xf32>
    %272 = arith.addf %268, %271 : vector<8x128xf32>
    %c0_157 = arith.constant 0 : index
    %c0_158 = arith.constant 0 : index
    %273 = vector.load %arg12[%c0_157, %c0_158] : memref<1x128xf32, #tpu.memory_space<vmem>>, vector<1x128xf32>
    %274 = vector.broadcast %273 : vector<1x128xf32> to vector<8x128xf32>
    %275 = arith.addf %272, %274 : vector<8x128xf32>
    %276 = math.tanh %275 : vector<8x128xf32>
    %277 = arith.mulf %266, %251 : vector<8x128xf32>
    %cst_159 = arith.constant 1.000000e+00 : f32
    %278 = vector.broadcast %cst_159 : f32 to vector<8x128xf32>
    %279 = arith.subf %278, %266 : vector<8x128xf32>
    %280 = arith.mulf %279, %276 : vector<8x128xf32>
    %281 = arith.addf %277, %280 : vector<8x128xf32>
    %c1_160 = arith.constant 1 : index
    %c0_161 = arith.constant 0 : index
    %c0_162 = arith.constant 0 : index
    %282 = vector.load %arg14[%c1_160, %c0_161, %c0_162] : memref<2x8x128xf32, #tpu.memory_space<vmem>>, vector<1x8x128xf32>
    %283 = vector.shape_cast %282 : vector<1x8x128xf32> to vector<8x128xf32>
    %284 = vector.shape_cast %281 : vector<8x128xf32> to vector<1x8x128xf32>
    tpu.vector_store %arg14[%c1_160, %c0_161, %c0_162], %284 {strides = array<i32>} : memref<2x8x128xf32, #tpu.memory_space<vmem>>, vector<1x8x128xf32>,
    %c24 = arith.constant 24 : index
    %c0_163 = arith.constant 0 : index
    %285 = vector.load %arg13[%c24, %c0_163] : memref<64x128xf32, #tpu.memory_space<vmem>>, vector<8x128xf32>
    tpu.vector_store %arg13[%c24, %c0_163], %281 {strides = array<i32>} : memref<64x128xf32, #tpu.memory_space<vmem>>, vector<8x128xf32>,
    %c0_164 = arith.constant 0 : index
    %c0_165 = arith.constant 0 : index
    %c0_166 = arith.constant 0 : index
    %286 = vector.load %arg14[%c0_164, %c0_165, %c0_166] : memref<2x8x128xf32, #tpu.memory_space<vmem>>, vector<1x8x128xf32>
    %287 = vector.shape_cast %286 : vector<1x8x128xf32> to vector<8x128xf32>
    %288 = vector.extract_strided_slice %5 {offsets = [32, 0], sizes = [8, 384], strides = [1, 1]} : vector<64x384xf32> to vector<8x384xf32>
    %289 = vector.extract_strided_slice %288 {offsets = [0, 0], sizes = [8, 256], strides = [1, 1]} : vector<8x384xf32> to vector<8x256xf32>
    %c0_167 = arith.constant 0 : index
    %c0_168 = arith.constant 0 : index
    %290 = vector.load %arg4[%c0_167, %c0_168] : memref<128x256xf32, #tpu.memory_space<vmem>>, vector<128x256xf32>
    %cst_169 = arith.constant dense<0.000000e+00> : vector<8x256xf32>
    %291 = tpu.matmul %287, %290, %cst_169 {dimension_numbers = #tpu.dot_dimension_numbers<[1], [0], [0], [1], [0, 0, 1, 1], [], []>} : vector<8x128xf32>, vector<128x256xf32>, vector<8x256xf32> -> vector<8x256xf32>
    %292 = arith.addf %289, %291 : vector<8x256xf32>
    %c0_170 = arith.constant 0 : index
    %c0_171 = arith.constant 0 : index
    %293 = vector.load %arg5[%c0_170, %c0_171] : memref<1x256xf32, #tpu.memory_space<vmem>>, vector<1x256xf32>
    %294 = vector.broadcast %293 : vector<1x256xf32> to vector<8x256xf32>
    %295 = arith.addf %292, %294 : vector<8x256xf32>
    %296 = arith.negf %295 : vector<8x256xf32>
    %297 = math.exp %296 : vector<8x256xf32>
    %cst_172 = arith.constant 1.000000e+00 : f32
    %298 = vector.broadcast %cst_172 : f32 to vector<8x256xf32>
    %299 = arith.addf %298, %297 : vector<8x256xf32>
    %300 = arith.divf %298, %299 : vector<8x256xf32>
    %301 = vector.extract_strided_slice %300 {offsets = [0, 0], sizes = [8, 128], strides = [1, 1]} : vector<8x256xf32> to vector<8x128xf32>
    %302 = vector.extract_strided_slice %300 {offsets = [0, 128], sizes = [8, 128], strides = [1, 1]} : vector<8x256xf32> to vector<8x128xf32>
    %303 = vector.extract_strided_slice %288 {offsets = [0, 256], sizes = [8, 128], strides = [1, 1]} : vector<8x384xf32> to vector<8x128xf32>
    %304 = arith.mulf %302, %287 : vector<8x128xf32>
    %c0_173 = arith.constant 0 : index
    %c0_174 = arith.constant 0 : index
    %305 = vector.load %arg6[%c0_173, %c0_174] : memref<128x128xf32, #tpu.memory_space<vmem>>, vector<128x128xf32>
    %cst_175 = arith.constant dense<0.000000e+00> : vector<8x128xf32>
    %306 = tpu.matmul %304, %305, %cst_175 {dimension_numbers = #tpu.dot_dimension_numbers<[1], [0], [0], [1], [0, 0, 1, 1], [], []>} : vector<8x128xf32>, vector<128x128xf32>, vector<8x128xf32> -> vector<8x128xf32>
    %307 = arith.addf %303, %306 : vector<8x128xf32>
    %c0_176 = arith.constant 0 : index
    %c0_177 = arith.constant 0 : index
    %308 = vector.load %arg7[%c0_176, %c0_177] : memref<1x128xf32, #tpu.memory_space<vmem>>, vector<1x128xf32>
    %309 = vector.broadcast %308 : vector<1x128xf32> to vector<8x128xf32>
    %310 = arith.addf %307, %309 : vector<8x128xf32>
    %311 = math.tanh %310 : vector<8x128xf32>
    %312 = arith.mulf %301, %287 : vector<8x128xf32>
    %cst_178 = arith.constant 1.000000e+00 : f32
    %313 = vector.broadcast %cst_178 : f32 to vector<8x128xf32>
    %314 = arith.subf %313, %301 : vector<8x128xf32>
    %315 = arith.mulf %314, %311 : vector<8x128xf32>
    %316 = arith.addf %312, %315 : vector<8x128xf32>
    %c0_179 = arith.constant 0 : index
    %c0_180 = arith.constant 0 : index
    %c0_181 = arith.constant 0 : index
    %317 = vector.load %arg14[%c0_179, %c0_180, %c0_181] : memref<2x8x128xf32, #tpu.memory_space<vmem>>, vector<1x8x128xf32>
    %318 = vector.shape_cast %317 : vector<1x8x128xf32> to vector<8x128xf32>
    %319 = vector.shape_cast %316 : vector<8x128xf32> to vector<1x8x128xf32>
    tpu.vector_store %arg14[%c0_179, %c0_180, %c0_181], %319 {strides = array<i32>} : memref<2x8x128xf32, #tpu.memory_space<vmem>>, vector<1x8x128xf32>,
    %c1_182 = arith.constant 1 : index
    %c0_183 = arith.constant 0 : index
    %c0_184 = arith.constant 0 : index
    %320 = vector.load %arg14[%c1_182, %c0_183, %c0_184] : memref<2x8x128xf32, #tpu.memory_space<vmem>>, vector<1x8x128xf32>
    %321 = vector.shape_cast %320 : vector<1x8x128xf32> to vector<8x128xf32>
    %c0_185 = arith.constant 0 : index
    %c0_186 = arith.constant 0 : index
    %322 = vector.load %arg8[%c0_185, %c0_186] : memref<128x384xf32, #tpu.memory_space<vmem>>, vector<128x384xf32>
    %cst_187 = arith.constant dense<0.000000e+00> : vector<8x384xf32>
    %323 = tpu.matmul %316, %322, %cst_187 {dimension_numbers = #tpu.dot_dimension_numbers<[1], [0], [0], [1], [0, 0, 1, 1], [], []>} : vector<8x128xf32>, vector<128x384xf32>, vector<8x384xf32> -> vector<8x384xf32>
    %324 = vector.extract_strided_slice %323 {offsets = [0, 0], sizes = [8, 256], strides = [1, 1]} : vector<8x384xf32> to vector<8x256xf32>
    %c0_188 = arith.constant 0 : index
    %c0_189 = arith.constant 0 : index
    %325 = vector.load %arg9[%c0_188, %c0_189] : memref<128x256xf32, #tpu.memory_space<vmem>>, vector<128x256xf32>
    %cst_190 = arith.constant dense<0.000000e+00> : vector<8x256xf32>
    %326 = tpu.matmul %321, %325, %cst_190 {dimension_numbers = #tpu.dot_dimension_numbers<[1], [0], [0], [1], [0, 0, 1, 1], [], []>} : vector<8x128xf32>, vector<128x256xf32>, vector<8x256xf32> -> vector<8x256xf32>
    %327 = arith.addf %324, %326 : vector<8x256xf32>
    %c0_191 = arith.constant 0 : index
    %c0_192 = arith.constant 0 : index
    %328 = vector.load %arg10[%c0_191, %c0_192] : memref<1x256xf32, #tpu.memory_space<vmem>>, vector<1x256xf32>
    %329 = vector.broadcast %328 : vector<1x256xf32> to vector<8x256xf32>
    %330 = arith.addf %327, %329 : vector<8x256xf32>
    %331 = arith.negf %330 : vector<8x256xf32>
    %332 = math.exp %331 : vector<8x256xf32>
    %cst_193 = arith.constant 1.000000e+00 : f32
    %333 = vector.broadcast %cst_193 : f32 to vector<8x256xf32>
    %334 = arith.addf %333, %332 : vector<8x256xf32>
    %335 = arith.divf %333, %334 : vector<8x256xf32>
    %336 = vector.extract_strided_slice %335 {offsets = [0, 0], sizes = [8, 128], strides = [1, 1]} : vector<8x256xf32> to vector<8x128xf32>
    %337 = vector.extract_strided_slice %335 {offsets = [0, 128], sizes = [8, 128], strides = [1, 1]} : vector<8x256xf32> to vector<8x128xf32>
    %338 = vector.extract_strided_slice %323 {offsets = [0, 256], sizes = [8, 128], strides = [1, 1]} : vector<8x384xf32> to vector<8x128xf32>
    %339 = arith.mulf %337, %321 : vector<8x128xf32>
    %c0_194 = arith.constant 0 : index
    %c0_195 = arith.constant 0 : index
    %340 = vector.load %arg11[%c0_194, %c0_195] : memref<128x128xf32, #tpu.memory_space<vmem>>, vector<128x128xf32>
    %cst_196 = arith.constant dense<0.000000e+00> : vector<8x128xf32>
    %341 = tpu.matmul %339, %340, %cst_196 {dimension_numbers = #tpu.dot_dimension_numbers<[1], [0], [0], [1], [0, 0, 1, 1], [], []>} : vector<8x128xf32>, vector<128x128xf32>, vector<8x128xf32> -> vector<8x128xf32>
    %342 = arith.addf %338, %341 : vector<8x128xf32>
    %c0_197 = arith.constant 0 : index
    %c0_198 = arith.constant 0 : index
    %343 = vector.load %arg12[%c0_197, %c0_198] : memref<1x128xf32, #tpu.memory_space<vmem>>, vector<1x128xf32>
    %344 = vector.broadcast %343 : vector<1x128xf32> to vector<8x128xf32>
    %345 = arith.addf %342, %344 : vector<8x128xf32>
    %346 = math.tanh %345 : vector<8x128xf32>
    %347 = arith.mulf %336, %321 : vector<8x128xf32>
    %cst_199 = arith.constant 1.000000e+00 : f32
    %348 = vector.broadcast %cst_199 : f32 to vector<8x128xf32>
    %349 = arith.subf %348, %336 : vector<8x128xf32>
    %350 = arith.mulf %349, %346 : vector<8x128xf32>
    %351 = arith.addf %347, %350 : vector<8x128xf32>
    %c1_200 = arith.constant 1 : index
    %c0_201 = arith.constant 0 : index
    %c0_202 = arith.constant 0 : index
    %352 = vector.load %arg14[%c1_200, %c0_201, %c0_202] : memref<2x8x128xf32, #tpu.memory_space<vmem>>, vector<1x8x128xf32>
    %353 = vector.shape_cast %352 : vector<1x8x128xf32> to vector<8x128xf32>
    %354 = vector.shape_cast %351 : vector<8x128xf32> to vector<1x8x128xf32>
    tpu.vector_store %arg14[%c1_200, %c0_201, %c0_202], %354 {strides = array<i32>} : memref<2x8x128xf32, #tpu.memory_space<vmem>>, vector<1x8x128xf32>,
    %c32 = arith.constant 32 : index
    %c0_203 = arith.constant 0 : index
    %355 = vector.load %arg13[%c32, %c0_203] : memref<64x128xf32, #tpu.memory_space<vmem>>, vector<8x128xf32>
    tpu.vector_store %arg13[%c32, %c0_203], %351 {strides = array<i32>} : memref<64x128xf32, #tpu.memory_space<vmem>>, vector<8x128xf32>,
    %c0_204 = arith.constant 0 : index
    %c0_205 = arith.constant 0 : index
    %c0_206 = arith.constant 0 : index
    %356 = vector.load %arg14[%c0_204, %c0_205, %c0_206] : memref<2x8x128xf32, #tpu.memory_space<vmem>>, vector<1x8x128xf32>
    %357 = vector.shape_cast %356 : vector<1x8x128xf32> to vector<8x128xf32>
    %358 = vector.extract_strided_slice %5 {offsets = [40, 0], sizes = [8, 384], strides = [1, 1]} : vector<64x384xf32> to vector<8x384xf32>
    %359 = vector.extract_strided_slice %358 {offsets = [0, 0], sizes = [8, 256], strides = [1, 1]} : vector<8x384xf32> to vector<8x256xf32>
    %c0_207 = arith.constant 0 : index
    %c0_208 = arith.constant 0 : index
    %360 = vector.load %arg4[%c0_207, %c0_208] : memref<128x256xf32, #tpu.memory_space<vmem>>, vector<128x256xf32>
    %cst_209 = arith.constant dense<0.000000e+00> : vector<8x256xf32>
    %361 = tpu.matmul %357, %360, %cst_209 {dimension_numbers = #tpu.dot_dimension_numbers<[1], [0], [0], [1], [0, 0, 1, 1], [], []>} : vector<8x128xf32>, vector<128x256xf32>, vector<8x256xf32> -> vector<8x256xf32>
    %362 = arith.addf %359, %361 : vector<8x256xf32>
    %c0_210 = arith.constant 0 : index
    %c0_211 = arith.constant 0 : index
    %363 = vector.load %arg5[%c0_210, %c0_211] : memref<1x256xf32, #tpu.memory_space<vmem>>, vector<1x256xf32>
    %364 = vector.broadcast %363 : vector<1x256xf32> to vector<8x256xf32>
    %365 = arith.addf %362, %364 : vector<8x256xf32>
    %366 = arith.negf %365 : vector<8x256xf32>
    %367 = math.exp %366 : vector<8x256xf32>
    %cst_212 = arith.constant 1.000000e+00 : f32
    %368 = vector.broadcast %cst_212 : f32 to vector<8x256xf32>
    %369 = arith.addf %368, %367 : vector<8x256xf32>
    %370 = arith.divf %368, %369 : vector<8x256xf32>
    %371 = vector.extract_strided_slice %370 {offsets = [0, 0], sizes = [8, 128], strides = [1, 1]} : vector<8x256xf32> to vector<8x128xf32>
    %372 = vector.extract_strided_slice %370 {offsets = [0, 128], sizes = [8, 128], strides = [1, 1]} : vector<8x256xf32> to vector<8x128xf32>
    %373 = vector.extract_strided_slice %358 {offsets = [0, 256], sizes = [8, 128], strides = [1, 1]} : vector<8x384xf32> to vector<8x128xf32>
    %374 = arith.mulf %372, %357 : vector<8x128xf32>
    %c0_213 = arith.constant 0 : index
    %c0_214 = arith.constant 0 : index
    %375 = vector.load %arg6[%c0_213, %c0_214] : memref<128x128xf32, #tpu.memory_space<vmem>>, vector<128x128xf32>
    %cst_215 = arith.constant dense<0.000000e+00> : vector<8x128xf32>
    %376 = tpu.matmul %374, %375, %cst_215 {dimension_numbers = #tpu.dot_dimension_numbers<[1], [0], [0], [1], [0, 0, 1, 1], [], []>} : vector<8x128xf32>, vector<128x128xf32>, vector<8x128xf32> -> vector<8x128xf32>
    %377 = arith.addf %373, %376 : vector<8x128xf32>
    %c0_216 = arith.constant 0 : index
    %c0_217 = arith.constant 0 : index
    %378 = vector.load %arg7[%c0_216, %c0_217] : memref<1x128xf32, #tpu.memory_space<vmem>>, vector<1x128xf32>
    %379 = vector.broadcast %378 : vector<1x128xf32> to vector<8x128xf32>
    %380 = arith.addf %377, %379 : vector<8x128xf32>
    %381 = math.tanh %380 : vector<8x128xf32>
    %382 = arith.mulf %371, %357 : vector<8x128xf32>
    %cst_218 = arith.constant 1.000000e+00 : f32
    %383 = vector.broadcast %cst_218 : f32 to vector<8x128xf32>
    %384 = arith.subf %383, %371 : vector<8x128xf32>
    %385 = arith.mulf %384, %381 : vector<8x128xf32>
    %386 = arith.addf %382, %385 : vector<8x128xf32>
    %c0_219 = arith.constant 0 : index
    %c0_220 = arith.constant 0 : index
    %c0_221 = arith.constant 0 : index
    %387 = vector.load %arg14[%c0_219, %c0_220, %c0_221] : memref<2x8x128xf32, #tpu.memory_space<vmem>>, vector<1x8x128xf32>
    %388 = vector.shape_cast %387 : vector<1x8x128xf32> to vector<8x128xf32>
    %389 = vector.shape_cast %386 : vector<8x128xf32> to vector<1x8x128xf32>
    tpu.vector_store %arg14[%c0_219, %c0_220, %c0_221], %389 {strides = array<i32>} : memref<2x8x128xf32, #tpu.memory_space<vmem>>, vector<1x8x128xf32>,
    %c1_222 = arith.constant 1 : index
    %c0_223 = arith.constant 0 : index
    %c0_224 = arith.constant 0 : index
    %390 = vector.load %arg14[%c1_222, %c0_223, %c0_224] : memref<2x8x128xf32, #tpu.memory_space<vmem>>, vector<1x8x128xf32>
    %391 = vector.shape_cast %390 : vector<1x8x128xf32> to vector<8x128xf32>
    %c0_225 = arith.constant 0 : index
    %c0_226 = arith.constant 0 : index
    %392 = vector.load %arg8[%c0_225, %c0_226] : memref<128x384xf32, #tpu.memory_space<vmem>>, vector<128x384xf32>
    %cst_227 = arith.constant dense<0.000000e+00> : vector<8x384xf32>
    %393 = tpu.matmul %386, %392, %cst_227 {dimension_numbers = #tpu.dot_dimension_numbers<[1], [0], [0], [1], [0, 0, 1, 1], [], []>} : vector<8x128xf32>, vector<128x384xf32>, vector<8x384xf32> -> vector<8x384xf32>
    %394 = vector.extract_strided_slice %393 {offsets = [0, 0], sizes = [8, 256], strides = [1, 1]} : vector<8x384xf32> to vector<8x256xf32>
    %c0_228 = arith.constant 0 : index
    %c0_229 = arith.constant 0 : index
    %395 = vector.load %arg9[%c0_228, %c0_229] : memref<128x256xf32, #tpu.memory_space<vmem>>, vector<128x256xf32>
    %cst_230 = arith.constant dense<0.000000e+00> : vector<8x256xf32>
    %396 = tpu.matmul %391, %395, %cst_230 {dimension_numbers = #tpu.dot_dimension_numbers<[1], [0], [0], [1], [0, 0, 1, 1], [], []>} : vector<8x128xf32>, vector<128x256xf32>, vector<8x256xf32> -> vector<8x256xf32>
    %397 = arith.addf %394, %396 : vector<8x256xf32>
    %c0_231 = arith.constant 0 : index
    %c0_232 = arith.constant 0 : index
    %398 = vector.load %arg10[%c0_231, %c0_232] : memref<1x256xf32, #tpu.memory_space<vmem>>, vector<1x256xf32>
    %399 = vector.broadcast %398 : vector<1x256xf32> to vector<8x256xf32>
    %400 = arith.addf %397, %399 : vector<8x256xf32>
    %401 = arith.negf %400 : vector<8x256xf32>
    %402 = math.exp %401 : vector<8x256xf32>
    %cst_233 = arith.constant 1.000000e+00 : f32
    %403 = vector.broadcast %cst_233 : f32 to vector<8x256xf32>
    %404 = arith.addf %403, %402 : vector<8x256xf32>
    %405 = arith.divf %403, %404 : vector<8x256xf32>
    %406 = vector.extract_strided_slice %405 {offsets = [0, 0], sizes = [8, 128], strides = [1, 1]} : vector<8x256xf32> to vector<8x128xf32>
    %407 = vector.extract_strided_slice %405 {offsets = [0, 128], sizes = [8, 128], strides = [1, 1]} : vector<8x256xf32> to vector<8x128xf32>
    %408 = vector.extract_strided_slice %393 {offsets = [0, 256], sizes = [8, 128], strides = [1, 1]} : vector<8x384xf32> to vector<8x128xf32>
    %409 = arith.mulf %407, %391 : vector<8x128xf32>
    %c0_234 = arith.constant 0 : index
    %c0_235 = arith.constant 0 : index
    %410 = vector.load %arg11[%c0_234, %c0_235] : memref<128x128xf32, #tpu.memory_space<vmem>>, vector<128x128xf32>
    %cst_236 = arith.constant dense<0.000000e+00> : vector<8x128xf32>
    %411 = tpu.matmul %409, %410, %cst_236 {dimension_numbers = #tpu.dot_dimension_numbers<[1], [0], [0], [1], [0, 0, 1, 1], [], []>} : vector<8x128xf32>, vector<128x128xf32>, vector<8x128xf32> -> vector<8x128xf32>
    %412 = arith.addf %408, %411 : vector<8x128xf32>
    %c0_237 = arith.constant 0 : index
    %c0_238 = arith.constant 0 : index
    %413 = vector.load %arg12[%c0_237, %c0_238] : memref<1x128xf32, #tpu.memory_space<vmem>>, vector<1x128xf32>
    %414 = vector.broadcast %413 : vector<1x128xf32> to vector<8x128xf32>
    %415 = arith.addf %412, %414 : vector<8x128xf32>
    %416 = math.tanh %415 : vector<8x128xf32>
    %417 = arith.mulf %406, %391 : vector<8x128xf32>
    %cst_239 = arith.constant 1.000000e+00 : f32
    %418 = vector.broadcast %cst_239 : f32 to vector<8x128xf32>
    %419 = arith.subf %418, %406 : vector<8x128xf32>
    %420 = arith.mulf %419, %416 : vector<8x128xf32>
    %421 = arith.addf %417, %420 : vector<8x128xf32>
    %c1_240 = arith.constant 1 : index
    %c0_241 = arith.constant 0 : index
    %c0_242 = arith.constant 0 : index
    %422 = vector.load %arg14[%c1_240, %c0_241, %c0_242] : memref<2x8x128xf32, #tpu.memory_space<vmem>>, vector<1x8x128xf32>
    %423 = vector.shape_cast %422 : vector<1x8x128xf32> to vector<8x128xf32>
    %424 = vector.shape_cast %421 : vector<8x128xf32> to vector<1x8x128xf32>
    tpu.vector_store %arg14[%c1_240, %c0_241, %c0_242], %424 {strides = array<i32>} : memref<2x8x128xf32, #tpu.memory_space<vmem>>, vector<1x8x128xf32>,
    %c40 = arith.constant 40 : index
    %c0_243 = arith.constant 0 : index
    %425 = vector.load %arg13[%c40, %c0_243] : memref<64x128xf32, #tpu.memory_space<vmem>>, vector<8x128xf32>
    tpu.vector_store %arg13[%c40, %c0_243], %421 {strides = array<i32>} : memref<64x128xf32, #tpu.memory_space<vmem>>, vector<8x128xf32>,
    %c0_244 = arith.constant 0 : index
    %c0_245 = arith.constant 0 : index
    %c0_246 = arith.constant 0 : index
    %426 = vector.load %arg14[%c0_244, %c0_245, %c0_246] : memref<2x8x128xf32, #tpu.memory_space<vmem>>, vector<1x8x128xf32>
    %427 = vector.shape_cast %426 : vector<1x8x128xf32> to vector<8x128xf32>
    %428 = vector.extract_strided_slice %5 {offsets = [48, 0], sizes = [8, 384], strides = [1, 1]} : vector<64x384xf32> to vector<8x384xf32>
    %429 = vector.extract_strided_slice %428 {offsets = [0, 0], sizes = [8, 256], strides = [1, 1]} : vector<8x384xf32> to vector<8x256xf32>
    %c0_247 = arith.constant 0 : index
    %c0_248 = arith.constant 0 : index
    %430 = vector.load %arg4[%c0_247, %c0_248] : memref<128x256xf32, #tpu.memory_space<vmem>>, vector<128x256xf32>
    %cst_249 = arith.constant dense<0.000000e+00> : vector<8x256xf32>
    %431 = tpu.matmul %427, %430, %cst_249 {dimension_numbers = #tpu.dot_dimension_numbers<[1], [0], [0], [1], [0, 0, 1, 1], [], []>} : vector<8x128xf32>, vector<128x256xf32>, vector<8x256xf32> -> vector<8x256xf32>
    %432 = arith.addf %429, %431 : vector<8x256xf32>
    %c0_250 = arith.constant 0 : index
    %c0_251 = arith.constant 0 : index
    %433 = vector.load %arg5[%c0_250, %c0_251] : memref<1x256xf32, #tpu.memory_space<vmem>>, vector<1x256xf32>
    %434 = vector.broadcast %433 : vector<1x256xf32> to vector<8x256xf32>
    %435 = arith.addf %432, %434 : vector<8x256xf32>
    %436 = arith.negf %435 : vector<8x256xf32>
    %437 = math.exp %436 : vector<8x256xf32>
    %cst_252 = arith.constant 1.000000e+00 : f32
    %438 = vector.broadcast %cst_252 : f32 to vector<8x256xf32>
    %439 = arith.addf %438, %437 : vector<8x256xf32>
    %440 = arith.divf %438, %439 : vector<8x256xf32>
    %441 = vector.extract_strided_slice %440 {offsets = [0, 0], sizes = [8, 128], strides = [1, 1]} : vector<8x256xf32> to vector<8x128xf32>
    %442 = vector.extract_strided_slice %440 {offsets = [0, 128], sizes = [8, 128], strides = [1, 1]} : vector<8x256xf32> to vector<8x128xf32>
    %443 = vector.extract_strided_slice %428 {offsets = [0, 256], sizes = [8, 128], strides = [1, 1]} : vector<8x384xf32> to vector<8x128xf32>
    %444 = arith.mulf %442, %427 : vector<8x128xf32>
    %c0_253 = arith.constant 0 : index
    %c0_254 = arith.constant 0 : index
    %445 = vector.load %arg6[%c0_253, %c0_254] : memref<128x128xf32, #tpu.memory_space<vmem>>, vector<128x128xf32>
    %cst_255 = arith.constant dense<0.000000e+00> : vector<8x128xf32>
    %446 = tpu.matmul %444, %445, %cst_255 {dimension_numbers = #tpu.dot_dimension_numbers<[1], [0], [0], [1], [0, 0, 1, 1], [], []>} : vector<8x128xf32>, vector<128x128xf32>, vector<8x128xf32> -> vector<8x128xf32>
    %447 = arith.addf %443, %446 : vector<8x128xf32>
    %c0_256 = arith.constant 0 : index
    %c0_257 = arith.constant 0 : index
    %448 = vector.load %arg7[%c0_256, %c0_257] : memref<1x128xf32, #tpu.memory_space<vmem>>, vector<1x128xf32>
    %449 = vector.broadcast %448 : vector<1x128xf32> to vector<8x128xf32>
    %450 = arith.addf %447, %449 : vector<8x128xf32>
    %451 = math.tanh %450 : vector<8x128xf32>
    %452 = arith.mulf %441, %427 : vector<8x128xf32>
    %cst_258 = arith.constant 1.000000e+00 : f32
    %453 = vector.broadcast %cst_258 : f32 to vector<8x128xf32>
    %454 = arith.subf %453, %441 : vector<8x128xf32>
    %455 = arith.mulf %454, %451 : vector<8x128xf32>
    %456 = arith.addf %452, %455 : vector<8x128xf32>
    %c0_259 = arith.constant 0 : index
    %c0_260 = arith.constant 0 : index
    %c0_261 = arith.constant 0 : index
    %457 = vector.load %arg14[%c0_259, %c0_260, %c0_261] : memref<2x8x128xf32, #tpu.memory_space<vmem>>, vector<1x8x128xf32>
    %458 = vector.shape_cast %457 : vector<1x8x128xf32> to vector<8x128xf32>
    %459 = vector.shape_cast %456 : vector<8x128xf32> to vector<1x8x128xf32>
    tpu.vector_store %arg14[%c0_259, %c0_260, %c0_261], %459 {strides = array<i32>} : memref<2x8x128xf32, #tpu.memory_space<vmem>>, vector<1x8x128xf32>,
    %c1_262 = arith.constant 1 : index
    %c0_263 = arith.constant 0 : index
    %c0_264 = arith.constant 0 : index
    %460 = vector.load %arg14[%c1_262, %c0_263, %c0_264] : memref<2x8x128xf32, #tpu.memory_space<vmem>>, vector<1x8x128xf32>
    %461 = vector.shape_cast %460 : vector<1x8x128xf32> to vector<8x128xf32>
    %c0_265 = arith.constant 0 : index
    %c0_266 = arith.constant 0 : index
    %462 = vector.load %arg8[%c0_265, %c0_266] : memref<128x384xf32, #tpu.memory_space<vmem>>, vector<128x384xf32>
    %cst_267 = arith.constant dense<0.000000e+00> : vector<8x384xf32>
    %463 = tpu.matmul %456, %462, %cst_267 {dimension_numbers = #tpu.dot_dimension_numbers<[1], [0], [0], [1], [0, 0, 1, 1], [], []>} : vector<8x128xf32>, vector<128x384xf32>, vector<8x384xf32> -> vector<8x384xf32>
    %464 = vector.extract_strided_slice %463 {offsets = [0, 0], sizes = [8, 256], strides = [1, 1]} : vector<8x384xf32> to vector<8x256xf32>
    %c0_268 = arith.constant 0 : index
    %c0_269 = arith.constant 0 : index
    %465 = vector.load %arg9[%c0_268, %c0_269] : memref<128x256xf32, #tpu.memory_space<vmem>>, vector<128x256xf32>
    %cst_270 = arith.constant dense<0.000000e+00> : vector<8x256xf32>
    %466 = tpu.matmul %461, %465, %cst_270 {dimension_numbers = #tpu.dot_dimension_numbers<[1], [0], [0], [1], [0, 0, 1, 1], [], []>} : vector<8x128xf32>, vector<128x256xf32>, vector<8x256xf32> -> vector<8x256xf32>
    %467 = arith.addf %464, %466 : vector<8x256xf32>
    %c0_271 = arith.constant 0 : index
    %c0_272 = arith.constant 0 : index
    %468 = vector.load %arg10[%c0_271, %c0_272] : memref<1x256xf32, #tpu.memory_space<vmem>>, vector<1x256xf32>
    %469 = vector.broadcast %468 : vector<1x256xf32> to vector<8x256xf32>
    %470 = arith.addf %467, %469 : vector<8x256xf32>
    %471 = arith.negf %470 : vector<8x256xf32>
    %472 = math.exp %471 : vector<8x256xf32>
    %cst_273 = arith.constant 1.000000e+00 : f32
    %473 = vector.broadcast %cst_273 : f32 to vector<8x256xf32>
    %474 = arith.addf %473, %472 : vector<8x256xf32>
    %475 = arith.divf %473, %474 : vector<8x256xf32>
    %476 = vector.extract_strided_slice %475 {offsets = [0, 0], sizes = [8, 128], strides = [1, 1]} : vector<8x256xf32> to vector<8x128xf32>
    %477 = vector.extract_strided_slice %475 {offsets = [0, 128], sizes = [8, 128], strides = [1, 1]} : vector<8x256xf32> to vector<8x128xf32>
    %478 = vector.extract_strided_slice %463 {offsets = [0, 256], sizes = [8, 128], strides = [1, 1]} : vector<8x384xf32> to vector<8x128xf32>
    %479 = arith.mulf %477, %461 : vector<8x128xf32>
    %c0_274 = arith.constant 0 : index
    %c0_275 = arith.constant 0 : index
    %480 = vector.load %arg11[%c0_274, %c0_275] : memref<128x128xf32, #tpu.memory_space<vmem>>, vector<128x128xf32>
    %cst_276 = arith.constant dense<0.000000e+00> : vector<8x128xf32>
    %481 = tpu.matmul %479, %480, %cst_276 {dimension_numbers = #tpu.dot_dimension_numbers<[1], [0], [0], [1], [0, 0, 1, 1], [], []>} : vector<8x128xf32>, vector<128x128xf32>, vector<8x128xf32> -> vector<8x128xf32>
    %482 = arith.addf %478, %481 : vector<8x128xf32>
    %c0_277 = arith.constant 0 : index
    %c0_278 = arith.constant 0 : index
    %483 = vector.load %arg12[%c0_277, %c0_278] : memref<1x128xf32, #tpu.memory_space<vmem>>, vector<1x128xf32>
    %484 = vector.broadcast %483 : vector<1x128xf32> to vector<8x128xf32>
    %485 = arith.addf %482, %484 : vector<8x128xf32>
    %486 = math.tanh %485 : vector<8x128xf32>
    %487 = arith.mulf %476, %461 : vector<8x128xf32>
    %cst_279 = arith.constant 1.000000e+00 : f32
    %488 = vector.broadcast %cst_279 : f32 to vector<8x128xf32>
    %489 = arith.subf %488, %476 : vector<8x128xf32>
    %490 = arith.mulf %489, %486 : vector<8x128xf32>
    %491 = arith.addf %487, %490 : vector<8x128xf32>
    %c1_280 = arith.constant 1 : index
    %c0_281 = arith.constant 0 : index
    %c0_282 = arith.constant 0 : index
    %492 = vector.load %arg14[%c1_280, %c0_281, %c0_282] : memref<2x8x128xf32, #tpu.memory_space<vmem>>, vector<1x8x128xf32>
    %493 = vector.shape_cast %492 : vector<1x8x128xf32> to vector<8x128xf32>
    %494 = vector.shape_cast %491 : vector<8x128xf32> to vector<1x8x128xf32>
    tpu.vector_store %arg14[%c1_280, %c0_281, %c0_282], %494 {strides = array<i32>} : memref<2x8x128xf32, #tpu.memory_space<vmem>>, vector<1x8x128xf32>,
    %c48 = arith.constant 48 : index
    %c0_283 = arith.constant 0 : index
    %495 = vector.load %arg13[%c48, %c0_283] : memref<64x128xf32, #tpu.memory_space<vmem>>, vector<8x128xf32>
    tpu.vector_store %arg13[%c48, %c0_283], %491 {strides = array<i32>} : memref<64x128xf32, #tpu.memory_space<vmem>>, vector<8x128xf32>,
    %c0_284 = arith.constant 0 : index
    %c0_285 = arith.constant 0 : index
    %c0_286 = arith.constant 0 : index
    %496 = vector.load %arg14[%c0_284, %c0_285, %c0_286] : memref<2x8x128xf32, #tpu.memory_space<vmem>>, vector<1x8x128xf32>
    %497 = vector.shape_cast %496 : vector<1x8x128xf32> to vector<8x128xf32>
    %498 = vector.extract_strided_slice %5 {offsets = [56, 0], sizes = [8, 384], strides = [1, 1]} : vector<64x384xf32> to vector<8x384xf32>
    %499 = vector.extract_strided_slice %498 {offsets = [0, 0], sizes = [8, 256], strides = [1, 1]} : vector<8x384xf32> to vector<8x256xf32>
    %c0_287 = arith.constant 0 : index
    %c0_288 = arith.constant 0 : index
    %500 = vector.load %arg4[%c0_287, %c0_288] : memref<128x256xf32, #tpu.memory_space<vmem>>, vector<128x256xf32>
    %cst_289 = arith.constant dense<0.000000e+00> : vector<8x256xf32>
    %501 = tpu.matmul %497, %500, %cst_289 {dimension_numbers = #tpu.dot_dimension_numbers<[1], [0], [0], [1], [0, 0, 1, 1], [], []>} : vector<8x128xf32>, vector<128x256xf32>, vector<8x256xf32> -> vector<8x256xf32>
    %502 = arith.addf %499, %501 : vector<8x256xf32>
    %c0_290 = arith.constant 0 : index
    %c0_291 = arith.constant 0 : index
    %503 = vector.load %arg5[%c0_290, %c0_291] : memref<1x256xf32, #tpu.memory_space<vmem>>, vector<1x256xf32>
    %504 = vector.broadcast %503 : vector<1x256xf32> to vector<8x256xf32>
    %505 = arith.addf %502, %504 : vector<8x256xf32>
    %506 = arith.negf %505 : vector<8x256xf32>
    %507 = math.exp %506 : vector<8x256xf32>
    %cst_292 = arith.constant 1.000000e+00 : f32
    %508 = vector.broadcast %cst_292 : f32 to vector<8x256xf32>
    %509 = arith.addf %508, %507 : vector<8x256xf32>
    %510 = arith.divf %508, %509 : vector<8x256xf32>
    %511 = vector.extract_strided_slice %510 {offsets = [0, 0], sizes = [8, 128], strides = [1, 1]} : vector<8x256xf32> to vector<8x128xf32>
    %512 = vector.extract_strided_slice %510 {offsets = [0, 128], sizes = [8, 128], strides = [1, 1]} : vector<8x256xf32> to vector<8x128xf32>
    %513 = vector.extract_strided_slice %498 {offsets = [0, 256], sizes = [8, 128], strides = [1, 1]} : vector<8x384xf32> to vector<8x128xf32>
    %514 = arith.mulf %512, %497 : vector<8x128xf32>
    %c0_293 = arith.constant 0 : index
    %c0_294 = arith.constant 0 : index
    %515 = vector.load %arg6[%c0_293, %c0_294] : memref<128x128xf32, #tpu.memory_space<vmem>>, vector<128x128xf32>
    %cst_295 = arith.constant dense<0.000000e+00> : vector<8x128xf32>
    %516 = tpu.matmul %514, %515, %cst_295 {dimension_numbers = #tpu.dot_dimension_numbers<[1], [0], [0], [1], [0, 0, 1, 1], [], []>} : vector<8x128xf32>, vector<128x128xf32>, vector<8x128xf32> -> vector<8x128xf32>
    %517 = arith.addf %513, %516 : vector<8x128xf32>
    %c0_296 = arith.constant 0 : index
    %c0_297 = arith.constant 0 : index
    %518 = vector.load %arg7[%c0_296, %c0_297] : memref<1x128xf32, #tpu.memory_space<vmem>>, vector<1x128xf32>
    %519 = vector.broadcast %518 : vector<1x128xf32> to vector<8x128xf32>
    %520 = arith.addf %517, %519 : vector<8x128xf32>
    %521 = math.tanh %520 : vector<8x128xf32>
    %522 = arith.mulf %511, %497 : vector<8x128xf32>
    %cst_298 = arith.constant 1.000000e+00 : f32
    %523 = vector.broadcast %cst_298 : f32 to vector<8x128xf32>
    %524 = arith.subf %523, %511 : vector<8x128xf32>
    %525 = arith.mulf %524, %521 : vector<8x128xf32>
    %526 = arith.addf %522, %525 : vector<8x128xf32>
    %c0_299 = arith.constant 0 : index
    %c0_300 = arith.constant 0 : index
    %c0_301 = arith.constant 0 : index
    %527 = vector.load %arg14[%c0_299, %c0_300, %c0_301] : memref<2x8x128xf32, #tpu.memory_space<vmem>>, vector<1x8x128xf32>
    %528 = vector.shape_cast %527 : vector<1x8x128xf32> to vector<8x128xf32>
    %529 = vector.shape_cast %526 : vector<8x128xf32> to vector<1x8x128xf32>
    tpu.vector_store %arg14[%c0_299, %c0_300, %c0_301], %529 {strides = array<i32>} : memref<2x8x128xf32, #tpu.memory_space<vmem>>, vector<1x8x128xf32>,
    %c1_302 = arith.constant 1 : index
    %c0_303 = arith.constant 0 : index
    %c0_304 = arith.constant 0 : index
    %530 = vector.load %arg14[%c1_302, %c0_303, %c0_304] : memref<2x8x128xf32, #tpu.memory_space<vmem>>, vector<1x8x128xf32>
    %531 = vector.shape_cast %530 : vector<1x8x128xf32> to vector<8x128xf32>
    %c0_305 = arith.constant 0 : index
    %c0_306 = arith.constant 0 : index
    %532 = vector.load %arg8[%c0_305, %c0_306] : memref<128x384xf32, #tpu.memory_space<vmem>>, vector<128x384xf32>
    %cst_307 = arith.constant dense<0.000000e+00> : vector<8x384xf32>
    %533 = tpu.matmul %526, %532, %cst_307 {dimension_numbers = #tpu.dot_dimension_numbers<[1], [0], [0], [1], [0, 0, 1, 1], [], []>} : vector<8x128xf32>, vector<128x384xf32>, vector<8x384xf32> -> vector<8x384xf32>
    %534 = vector.extract_strided_slice %533 {offsets = [0, 0], sizes = [8, 256], strides = [1, 1]} : vector<8x384xf32> to vector<8x256xf32>
    %c0_308 = arith.constant 0 : index
    %c0_309 = arith.constant 0 : index
    %535 = vector.load %arg9[%c0_308, %c0_309] : memref<128x256xf32, #tpu.memory_space<vmem>>, vector<128x256xf32>
    %cst_310 = arith.constant dense<0.000000e+00> : vector<8x256xf32>
    %536 = tpu.matmul %531, %535, %cst_310 {dimension_numbers = #tpu.dot_dimension_numbers<[1], [0], [0], [1], [0, 0, 1, 1], [], []>} : vector<8x128xf32>, vector<128x256xf32>, vector<8x256xf32> -> vector<8x256xf32>
    %537 = arith.addf %534, %536 : vector<8x256xf32>
    %c0_311 = arith.constant 0 : index
    %c0_312 = arith.constant 0 : index
    %538 = vector.load %arg10[%c0_311, %c0_312] : memref<1x256xf32, #tpu.memory_space<vmem>>, vector<1x256xf32>
    %539 = vector.broadcast %538 : vector<1x256xf32> to vector<8x256xf32>
    %540 = arith.addf %537, %539 : vector<8x256xf32>
    %541 = arith.negf %540 : vector<8x256xf32>
    %542 = math.exp %541 : vector<8x256xf32>
    %cst_313 = arith.constant 1.000000e+00 : f32
    %543 = vector.broadcast %cst_313 : f32 to vector<8x256xf32>
    %544 = arith.addf %543, %542 : vector<8x256xf32>
    %545 = arith.divf %543, %544 : vector<8x256xf32>
    %546 = vector.extract_strided_slice %545 {offsets = [0, 0], sizes = [8, 128], strides = [1, 1]} : vector<8x256xf32> to vector<8x128xf32>
    %547 = vector.extract_strided_slice %545 {offsets = [0, 128], sizes = [8, 128], strides = [1, 1]} : vector<8x256xf32> to vector<8x128xf32>
    %548 = vector.extract_strided_slice %533 {offsets = [0, 256], sizes = [8, 128], strides = [1, 1]} : vector<8x384xf32> to vector<8x128xf32>
    %549 = arith.mulf %547, %531 : vector<8x128xf32>
    %c0_314 = arith.constant 0 : index
    %c0_315 = arith.constant 0 : index
    %550 = vector.load %arg11[%c0_314, %c0_315] : memref<128x128xf32, #tpu.memory_space<vmem>>, vector<128x128xf32>
    %cst_316 = arith.constant dense<0.000000e+00> : vector<8x128xf32>
    %551 = tpu.matmul %549, %550, %cst_316 {dimension_numbers = #tpu.dot_dimension_numbers<[1], [0], [0], [1], [0, 0, 1, 1], [], []>} : vector<8x128xf32>, vector<128x128xf32>, vector<8x128xf32> -> vector<8x128xf32>
    %552 = arith.addf %548, %551 : vector<8x128xf32>
    %c0_317 = arith.constant 0 : index
    %c0_318 = arith.constant 0 : index
    %553 = vector.load %arg12[%c0_317, %c0_318] : memref<1x128xf32, #tpu.memory_space<vmem>>, vector<1x128xf32>
    %554 = vector.broadcast %553 : vector<1x128xf32> to vector<8x128xf32>
    %555 = arith.addf %552, %554 : vector<8x128xf32>
    %556 = math.tanh %555 : vector<8x128xf32>
    %557 = arith.mulf %546, %531 : vector<8x128xf32>
    %cst_319 = arith.constant 1.000000e+00 : f32
    %558 = vector.broadcast %cst_319 : f32 to vector<8x128xf32>
    %559 = arith.subf %558, %546 : vector<8x128xf32>
    %560 = arith.mulf %559, %556 : vector<8x128xf32>
    %561 = arith.addf %557, %560 : vector<8x128xf32>
    %c1_320 = arith.constant 1 : index
    %c0_321 = arith.constant 0 : index
    %c0_322 = arith.constant 0 : index
    %562 = vector.load %arg14[%c1_320, %c0_321, %c0_322] : memref<2x8x128xf32, #tpu.memory_space<vmem>>, vector<1x8x128xf32>
    %563 = vector.shape_cast %562 : vector<1x8x128xf32> to vector<8x128xf32>
    %564 = vector.shape_cast %561 : vector<8x128xf32> to vector<1x8x128xf32>
    tpu.vector_store %arg14[%c1_320, %c0_321, %c0_322], %564 {strides = array<i32>} : memref<2x8x128xf32, #tpu.memory_space<vmem>>, vector<1x8x128xf32>,
    %c56 = arith.constant 56 : index
    %c0_323 = arith.constant 0 : index
    %565 = vector.load %arg13[%c56, %c0_323] : memref<64x128xf32, #tpu.memory_space<vmem>>, vector<8x128xf32>
    tpu.vector_store %arg13[%c56, %c0_323], %561 {strides = array<i32>} : memref<64x128xf32, #tpu.memory_space<vmem>>, vector<8x128xf32>,
    return
  }
  func.func @transform_0(%arg0: i32) -> (i32, i32) {
    %c0_i32 = arith.constant 0 : i32
    %c0_i32_0 = arith.constant 0 : i32
    return %arg0, %c0_i32 : i32, i32
  }
  func.func @transform_1(%arg0: i32) -> (i32, i32, i32) {
    %c0_i32 = arith.constant 0 : i32
    %c0_i32_0 = arith.constant 0 : i32
    %c0_i32_1 = arith.constant 0 : i32
    %c0_i32_2 = arith.constant 0 : i32
    return %c0_i32, %c0_i32_0, %c0_i32_1 : i32, i32, i32
  }
  func.func @transform_2(%arg0: i32) -> (i32, i32) {
    %c0_i32 = arith.constant 0 : i32
    %c0_i32_0 = arith.constant 0 : i32
    %c0_i32_1 = arith.constant 0 : i32
    return %c0_i32, %c0_i32_0 : i32, i32
  }
  func.func @transform_3(%arg0: i32) -> (i32, i32) {
    %c0_i32 = arith.constant 0 : i32
    %c0_i32_0 = arith.constant 0 : i32
    %c0_i32_1 = arith.constant 0 : i32
    return %c0_i32, %c0_i32_0 : i32, i32
  }
  func.func @transform_4(%arg0: i32) -> (i32, i32) {
    %c0_i32 = arith.constant 0 : i32
    %c0_i32_0 = arith.constant 0 : i32
    %c0_i32_1 = arith.constant 0 : i32
    return %c0_i32, %c0_i32_0 : i32, i32
  }
  func.func @transform_5(%arg0: i32) -> (i32, i32) {
    %c0_i32 = arith.constant 0 : i32
    %c0_i32_0 = arith.constant 0 : i32
    %c0_i32_1 = arith.constant 0 : i32
    return %c0_i32, %c0_i32_0 : i32, i32
  }
  func.func @transform_6(%arg0: i32) -> (i32, i32) {
    %c0_i32 = arith.constant 0 : i32
    %c0_i32_0 = arith.constant 0 : i32
    %c0_i32_1 = arith.constant 0 : i32
    return %c0_i32, %c0_i32_0 : i32, i32
  }
  func.func @transform_7(%arg0: i32) -> (i32, i32) {
    %c0_i32 = arith.constant 0 : i32
    %c0_i32_0 = arith.constant 0 : i32
    %c0_i32_1 = arith.constant 0 : i32
    return %c0_i32, %c0_i32_0 : i32, i32
  }
  func.func @transform_8(%arg0: i32) -> (i32, i32) {
    %c0_i32 = arith.constant 0 : i32
    %c0_i32_0 = arith.constant 0 : i32
    %c0_i32_1 = arith.constant 0 : i32
    return %c0_i32, %c0_i32_0 : i32, i32
  }
  func.func @transform_9(%arg0: i32) -> (i32, i32) {
    %c0_i32 = arith.constant 0 : i32
    %c0_i32_0 = arith.constant 0 : i32
    %c0_i32_1 = arith.constant 0 : i32
    return %c0_i32, %c0_i32_0 : i32, i32
  }
  func.func @transform_10(%arg0: i32) -> (i32, i32) {
    %c0_i32 = arith.constant 0 : i32
    %c0_i32_0 = arith.constant 0 : i32
    %c0_i32_1 = arith.constant 0 : i32
    return %c0_i32, %c0_i32_0 : i32, i32
  }
  func.func @transform_11(%arg0: i32) -> (i32, i32) {
    %c0_i32 = arith.constant 0 : i32
    %c0_i32_0 = arith.constant 0 : i32
    %c0_i32_1 = arith.constant 0 : i32
    return %c0_i32, %c0_i32_0 : i32, i32
  }
  func.func @transform_12(%arg0: i32) -> (i32, i32) {
    %c0_i32 = arith.constant 0 : i32
    %c0_i32_0 = arith.constant 0 : i32
    return %arg0, %c0_i32 : i32, i32
  }
  func.func @transform_13(%arg0: i32) -> (i32, i32, i32) {
    %c0_i32 = arith.constant 0 : i32
    %c0_i32_0 = arith.constant 0 : i32
    %c0_i32_1 = arith.constant 0 : i32
    %c0_i32_2 = arith.constant 0 : i32
    return %c0_i32, %c0_i32_0, %c0_i32_1 : i32, i32, i32
  }
}

</mosaic_0001>

<llo_original>
// kernel: tpu_custom_call.1
$region0: #{tpu_custom_call.1}
  #allocation0 [shape = 'u32[]', space=smem, size = 0x4, offset = 0x4, fixed_abs, tag = 'smem constant byte address 0x4 - core index']
  #allocation1 [shape = 'u32[72,128]{1,0:T(1,128)}', space=vmem, size = 0x9000, scoped, tag = 'internal scratch']
  %s0 = inlined_call_operand.hbm [shape: f32[64,128], index: 0, kind: input, shape index: {}]
  %s1 = inlined_call_operand.hbm [shape: f32[2,8,128], index: 1, kind: input, shape index: {}]
  %s2 = inlined_call_operand.hbm [shape: f32[128,384], index: 2, kind: input, shape index: {}]
  %s3 = inlined_call_operand.hbm [shape: f32[128,256], index: 3, kind: input, shape index: {}]
  %s4 = inlined_call_operand.vmem [shape: f32[1,256], index: 4, kind: input, shape index: {}]
  %s5 = inlined_call_operand.hbm [shape: f32[128,128], index: 5, kind: input, shape index: {}]
  %s6 = inlined_call_operand.vmem [shape: f32[1,128], index: 6, kind: input, shape index: {}]
  %s7 = inlined_call_operand.hbm [shape: f32[128,384], index: 7, kind: input, shape index: {}]
  %s8 = inlined_call_operand.hbm [shape: f32[128,256], index: 8, kind: input, shape index: {}]
  %s9 = inlined_call_operand.vmem [shape: f32[1,256], index: 9, kind: input, shape index: {}]
  %s10 = inlined_call_operand.hbm [shape: f32[128,128], index: 10, kind: input, shape index: {}]
  %s11 = inlined_call_operand.vmem [shape: f32[1,128], index: 11, kind: input, shape index: {}]
  %s12 = inlined_call_operand.hbm [shape: f32[64,128], index: 12, kind: output, shape index: {0}]
  %s13 = inlined_call_operand.hbm [shape: f32[2,8,128], index: 13, kind: output, shape index: {1}]
  %14 = xla_tuple %s12, %s13
  %s15 = sld [smem:[#allocation0]]
  $region102: #{tpu_custom_call.1} parent=0
    _
  %s17 = ssub.s32 1, %s15
  %s18 = scalar_select 0, %s17, %s15
  $region1: #{tpu_custom_call.1} parent=0
    #allocation2 [shape = 'u8[32768]{0}', space=vmem, size = 0x8000, scoped, tag = 'input window, operand 0, single buffered']
    #allocation3 [shape = 's32[1]{0}', space=sflag, size = 0x4, scoped, tag = 'scoped memory for tpu_custom_call.1']
    #allocation4 [shape = 's32[1]{0}', space=sflag, size = 0x4, scoped, tag = 'scoped memory for tpu_custom_call.1']
    #allocation5 [shape = 'u8[8192]{0}', space=vmem, size = 0x2000, scoped, tag = 'input window, operand 1, single buffered']
    #allocation6 [shape = 's32[1]{0}', space=sflag, size = 0x4, scoped, tag = 'scoped memory for tpu_custom_call.1']
    #allocation7 [shape = 'u8[196608]{0}', space=vmem, size = 0x30000, scoped, tag = 'input window, operand 2, single buffered']
    #allocation8 [shape = 'u8[131072]{0}', space=vmem, size = 0x20000, scoped, tag = 'input window, operand 3, single buffered']
    #allocation9 [shape = 's32[1]{0}', space=sflag, size = 0x4, scoped, tag = 'scoped memory for tpu_custom_call.1']
    #allocation10 [shape = 'u8[65536]{0}', space=vmem, size = 0x10000, scoped, tag = 'input window, operand 5, single buffered']
    #allocation11 [shape = 'u8[196608]{0}', space=vmem, size = 0x30000, scoped, tag = 'input window, operand 7, single buffered']
    #allocation12 [shape = 's32[1]{0}', space=sflag, size = 0x4, scoped, tag = 'scoped memory for tpu_custom_call.1']
    #allocation13 [shape = 'u8[131072]{0}', space=vmem, size = 0x20000, scoped, tag = 'input window, operand 8, single buffered']
    #allocation14 [shape = 'u8[65536]{0}', space=vmem, size = 0x10000, scoped, tag = 'input window, operand 10, single buffered']
    #allocation15 [shape = 's32[1]{0}', space=sflag, size = 0x4, scoped, tag = 'scoped memory for tpu_custom_call.1']
    #allocation16 [shape = 'u8[32768]{0}', space=vmem, size = 0x8000, scoped, tag = 'output window, operand 0, single buffered']
    #allocation17 [shape = 'u8[8192]{0}', space=vmem, size = 0x2000, scoped, tag = 'output window, operand 1, single buffered']
    #allocation18 [shape = 's32[1]{0}', space=sflag, size = 0x4, scoped, tag = 'scoped memory for tpu_custom_call.1']
    %19 = vsyncpa [#allocation3], 0
    %20 = vsyncpa [#allocation6], 0
    %21 = vsyncpa [#allocation9], 0
    %22 = vsyncpa [#allocation12], 0
    %23 = vsyncpa [#allocation15], 0
    %24 = vsyncpa [#allocation4], 0
    %25 = vsyncpa [#allocation18], 0
    // Predicated region
    $region2: #{tpu_custom_call.1} parent=1 // pred_check
      _
    $region3: #{tpu_custom_call.1} parent=1 // pred_check_branch
      %27 = sbr.rel (0) target = $region5
    $region4: #{tpu_custom_call.1} parent=1 // pred_region
      %29 = vsyncadd [#allocation3], 0
      %s30 = sshll.u32 %s0, 4
      %s31 = int_to_ptr.hbm [resolvable:$true] %s30
      %s32 = sshll.u32 [#allocation2], 4
      %s33 = int_to_ptr.vmem [resolvable:$true] %s32
      %38 = dma.hbm_to_vmem [thread:$0]  %s31, 1024, %s33, [#allocation3], 128, 128, 8
    $region5: #{tpu_custom_call.1} parent=1 // pred_fallthru
      _
    // Predicated region
    $region6: #{tpu_custom_call.1} parent=1 // pred_check
      _
    $region7: #{tpu_custom_call.1} parent=1 // pred_check_branch
      %40 = sbr.rel (0) target = $region9
    $region8: #{tpu_custom_call.1} parent=1 // pred_region
      %42 = vsyncadd [#allocation6], 0
      %s43 = sshll.u32 %s1, 4
      %s44 = int_to_ptr.hbm [resolvable:$true] %s43
      %s45 = sshll.u32 [#allocation5], 4
      %s46 = int_to_ptr.vmem [resolvable:$true] %s45
      %51 = dma.hbm_to_vmem [thread:$0]  %s44, 256, %s46, [#allocation6], 128, 128, 8
    $region9: #{tpu_custom_call.1} parent=1 // pred_fallthru
      _
    // Predicated region
    $region10: #{tpu_custom_call.1} parent=1 // pred_check
      _
    $region11: #{tpu_custom_call.1} parent=1 // pred_check_branch
      %53 = sbr.rel (0) target = $region13
    $region12: #{tpu_custom_call.1} parent=1 // pred_region
      %55 = vsyncadd [#allocation6], 0
      %s56 = sshll.u32 %s2, 4
      %s57 = int_to_ptr.hbm [resolvable:$true] %s56
      %s58 = sshll.u32 [#allocation7], 4
      %s59 = int_to_ptr.vmem [resolvable:$true] %s58
      %64 = dma.hbm_to_vmem [thread:$0]  %s57, 6144, %s59, [#allocation6], 384, 384, 24
    $region13: #{tpu_custom_call.1} parent=1 // pred_fallthru
      _
    // Predicated region
    $region14: #{tpu_custom_call.1} parent=1 // pred_check
      _
    $region15: #{tpu_custom_call.1} parent=1 // pred_check_branch
      %66 = sbr.rel (0) target = $region17
    $region16: #{tpu_custom_call.1} parent=1 // pred_region
      %68 = vsyncadd [#allocation9], 0
      %s69 = sshll.u32 %s3, 4
      %s70 = int_to_ptr.hbm [resolvable:$true] %s69
      %s71 = sshll.u32 [#allocation8], 4
      %s72 = int_to_ptr.vmem [resolvable:$true] %s71
      %77 = dma.hbm_to_vmem [thread:$0]  %s70, 4096, %s72, [#allocation9], 256, 256, 16
    $region17: #{tpu_custom_call.1} parent=1 // pred_fallthru
      _
    // Predicated region
    $region18: #{tpu_custom_call.1} parent=1 // pred_check
      _
    $region19: #{tpu_custom_call.1} parent=1 // pred_check_branch
      %79 = sbr.rel (0) target = $region21
    $region20: #{tpu_custom_call.1} parent=1 // pred_region
      _
    $region21: #{tpu_custom_call.1} parent=1 // pred_fallthru
      _
    // Predicated region
    $region22: #{tpu_custom_call.1} parent=1 // pred_check
      _
    $region23: #{tpu_custom_call.1} parent=1 // pred_check_branch
      %81 = sbr.rel (0) target = $region25
    $region24: #{tpu_custom_call.1} parent=1 // pred_region
      %83 = vsyncadd [#allocation9], 0
      %s84 = sshll.u32 %s5, 4
      %s85 = int_to_ptr.hbm [resolvable:$true] %s84
      %s86 = sshll.u32 [#allocation10], 4
      %s87 = int_to_ptr.vmem [resolvable:$true] %s86
      %92 = dma.hbm_to_vmem [thread:$0]  %s85, 2048, %s87, [#allocation9], 128, 128, 8
    $region25: #{tpu_custom_call.1} parent=1 // pred_fallthru
      _
    // Predicated region
    $region26: #{tpu_custom_call.1} parent=1 // pred_check
      _
    $region27: #{tpu_custom_call.1} parent=1 // pred_check_branch
      %94 = sbr.rel (0) target = $region29
    $region28: #{tpu_custom_call.1} parent=1 // pred_region
      _
    $region29: #{tpu_custom_call.1} parent=1 // pred_fallthru
      _
    // Predicated region
    $region30: #{tpu_custom_call.1} parent=1 // pred_check
      _
    $region31: #{tpu_custom_call.1} parent=1 // pred_check_branch
      %96 = sbr.rel (0) target = $region33
    $region32: #{tpu_custom_call.1} parent=1 // pred_region
      %98 = vsyncadd [#allocation12], 0
      %s99 = sshll.u32 %s7, 4
      %s100 = int_to_ptr.hbm [resolvable:$true] %s99
      %s101 = sshll.u32 [#allocation11], 4
      %s102 = int_to_ptr.vmem [resolvable:$true] %s101
      %107 = dma.hbm_to_vmem [thread:$0]  %s100, 6144, %s102, [#allocation12], 384, 384, 24
    $region33: #{tpu_custom_call.1} parent=1 // pred_fallthru
      _
    // Predicated region
    $region34: #{tpu_custom_call.1} parent=1 // pred_check
      _
    $region35: #{tpu_custom_call.1} parent=1 // pred_check_branch
      %109 = sbr.rel (0) target = $region37
    $region36: #{tpu_custom_call.1} parent=1 // pred_region
      %111 = vsyncadd [#allocation12], 0
      %s112 = sshll.u32 %s8, 4
      %s113 = int_to_ptr.hbm [resolvable:$true] %s112
      %s114 = sshll.u32 [#allocation13], 4
      %s115 = int_to_ptr.vmem [resolvable:$true] %s114
      %120 = dma.hbm_to_vmem [thread:$0]  %s113, 4096, %s115, [#allocation12], 256, 256, 16
    $region37: #{tpu_custom_call.1} parent=1 // pred_fallthru
      _
    // Predicated region
    $region38: #{tpu_custom_call.1} parent=1 // pred_check
      _
    $region39: #{tpu_custom_call.1} parent=1 // pred_check_branch
      %122 = sbr.rel (0) target = $region41
    $region40: #{tpu_custom_call.1} parent=1 // pred_region
      _
    $region41: #{tpu_custom_call.1} parent=1 // pred_fallthru
      _
    // Predicated region
    $region42: #{tpu_custom_call.1} parent=1 // pred_check
      _
    $region43: #{tpu_custom_call.1} parent=1 // pred_check_branch
      %124 = sbr.rel (0) target = $region45
    $region44: #{tpu_custom_call.1} parent=1 // pred_region
      %126 = vsyncadd [#allocation15], 0
      %s127 = sshll.u32 %s10, 4
      %s128 = int_to_ptr.hbm [resolvable:$true] %s127
      %s129 = sshll.u32 [#allocation14], 4
      %s130 = int_to_ptr.vmem [resolvable:$true] %s129
      %135 = dma.hbm_to_vmem [thread:$0]  %s128, 2048, %s130, [#allocation15], 128, 128, 8
    $region45: #{tpu_custom_call.1} parent=1 // pred_fallthru
      _
    // Predicated region
    $region46: #{tpu_custom_call.1} parent=1 // pred_check
      _
    $region47: #{tpu_custom_call.1} parent=1 // pred_check_branch
      %137 = sbr.rel (0) target = $region49
    $region48: #{tpu_custom_call.1} parent=1 // pred_region
      _
    $region49: #{tpu_custom_call.1} parent=1 // pred_fallthru
      _
    // Predicated region
    $region50: #{tpu_custom_call.1} parent=1 // pred_check
      _
    $region51: #{tpu_custom_call.1} parent=1 // pred_check_branch
      %139 = sbr.rel (0) target = $region53
    $region52: #{tpu_custom_call.1} parent=1 // pred_region
      %141 = dma.done [#allocation3], 1024
    $region53: #{tpu_custom_call.1} parent=1 // pred_fallthru
      _
    // Predicated region
    $region54: #{tpu_custom_call.1} parent=1 // pred_check
      _
    $region55: #{tpu_custom_call.1} parent=1 // pred_check_branch
      %143 = sbr.rel (0) target = $region57
    $region56: #{tpu_custom_call.1} parent=1 // pred_region
      %145 = dma.done [#allocation6], 256
    $region57: #{tpu_custom_call.1} parent=1 // pred_fallthru
      _
    // Predicated region
    $region58: #{tpu_custom_call.1} parent=1 // pred_check
      _
    $region59: #{tpu_custom_call.1} parent=1 // pred_check_branch
      %147 = sbr.rel (0) target = $region61
    $region60: #{tpu_custom_call.1} parent=1 // pred_region
      %149 = dma.done [#allocation6], 6144
    $region61: #{tpu_custom_call.1} parent=1 // pred_fallthru
      _
    // Predicated region
    $region62: #{tpu_custom_call.1} parent=1 // pred_check
      _
    $region63: #{tpu_custom_call.1} parent=1 // pred_check_branch
      %151 = sbr.rel (0) target = $region65
    $region64: #{tpu_custom_call.1} parent=1 // pred_region
      %153 = dma.done [#allocation9], 4096
    $region65: #{tpu_custom_call.1} parent=1 // pred_fallthru
      _
    // Predicated region
    $region66: #{tpu_custom_call.1} parent=1 // pred_check
      _
    $region67: #{tpu_custom_call.1} parent=1 // pred_check_branch
      %155 = sbr.rel (0) target = $region69
    $region68: #{tpu_custom_call.1} parent=1 // pred_region
      %157 = dma.done [#allocation9], 2048
    $region69: #{tpu_custom_call.1} parent=1 // pred_fallthru
      _
    // Predicated region
    $region70: #{tpu_custom_call.1} parent=1 // pred_check
      _
    $region71: #{tpu_custom_call.1} parent=1 // pred_check_branch
      %159 = sbr.rel (0) target = $region73
    $region72: #{tpu_custom_call.1} parent=1 // pred_region
      %161 = dma.done [#allocation12], 6144
    $region73: #{tpu_custom_call.1} parent=1 // pred_fallthru
      _
    // Predicated region
    $region74: #{tpu_custom_call.1} parent=1 // pred_check
      _
    $region75: #{tpu_custom_call.1} parent=1 // pred_check_branch
      %163 = sbr.rel (0) target = $region77
    $region76: #{tpu_custom_call.1} parent=1 // pred_region
      %165 = dma.done [#allocation12], 4096
    $region77: #{tpu_custom_call.1} parent=1 // pred_fallthru
      _
    // Predicated region
    $region78: #{tpu_custom_call.1} parent=1 // pred_check
      _
    $region79: #{tpu_custom_call.1} parent=1 // pred_check_branch
      %167 = sbr.rel (0) target = $region81
    $region80: #{tpu_custom_call.1} parent=1 // pred_region
      %169 = dma.done [#allocation15], 2048
    $region81: #{tpu_custom_call.1} parent=1 // pred_fallthru
      _
    %p170 = scmp.eq.s32.totalorder 0, 0
    // Predicated region
    $region82: #{tpu_custom_call.1} parent=1 // pred_check
      %p171 = pneg %p170
    $region83: #{tpu_custom_call.1} parent=1 // pred_check_branch
      %173 = sbr.rel (%p171) target = $region85
    $region84: #{tpu_custom_call.1} parent=1 // pred_region
      %v174 = vld [vmem:[#allocation5] sm:$0xff]
      %v175 = vld [vmem:[#allocation5 + $0x8] sm:$0xff]
      %176 = vst [vmem:[#allocation17] sm:$0xff] %v174
      %177 = vst [vmem:[#allocation17 + $0x8] sm:$0xff] %v175
    $region85: #{tpu_custom_call.1} parent=1 // pred_fallthru
      _
    %v178 = vld [vmem:[#allocation2] sm:$0xff]
    %v179 = vld [vmem:[#allocation2 + $0x8] sm:$0xff]
    %v180 = vld [vmem:[#allocation2 + $0x10] sm:$0xff]
    %v181 = vld [vmem:[#allocation2 + $0x18] sm:$0xff]
    %v182 = vld [vmem:[#allocation2 + $0x20] sm:$0xff]
    %v183 = vld [vmem:[#allocation2 + $0x28] sm:$0xff]
    %v184 = vld [vmem:[#allocation2 + $0x30] sm:$0xff]
    %v185 = vld [vmem:[#allocation2 + $0x38] sm:$0xff]
    %v186 = vld [vmem:[#allocation7] sm:$0xff]
    %v187 = vld [vmem:[#allocation7 + $0x8] sm:$0xff]
    %v188 = vld [vmem:[#allocation7 + $0x10] sm:$0xff]
    %v189 = vld [vmem:[#allocation7 + $0x18] sm:$0xff]
    %v190 = vld [vmem:[#allocation7 + $0x20] sm:$0xff]
    %v191 = vld [vmem:[#allocation7 + $0x28] sm:$0xff]
    %v192 = vld [vmem:[#allocation7 + $0x30] sm:$0xff]
    %v193 = vld [vmem:[#allocation7 + $0x38] sm:$0xff]
    %v194 = vld [vmem:[#allocation7 + $0x40] sm:$0xff]
    %v195 = vld [vmem:[#allocation7 + $0x48] sm:$0xff]
    %v196 = vld [vmem:[#allocation7 + $0x50] sm:$0xff]
    %v197 = vld [vmem:[#allocation7 + $0x58] sm:$0xff]
    %v198 = vld [vmem:[#allocation7 + $0x60] sm:$0xff]
    %v199 = vld [vmem:[#allocation7 + $0x68] sm:$0xff]
    %v200 = vld [vmem:[#allocation7 + $0x70] sm:$0xff]
    %v201 = vld [vmem:[#allocation7 + $0x78] sm:$0xff]
    %v202 = vld [vmem:[#allocation7 + $0x80] sm:$0xff]
    %v203 = vld [vmem:[#allocation7 + $0x88] sm:$0xff]
    %v204 = vld [vmem:[#allocation7 + $0x90] sm:$0xff]
    %v205 = vld [vmem:[#allocation7 + $0x98] sm:$0xff]
    %v206 = vld [vmem:[#allocation7 + $0xa0] sm:$0xff]
    %v207 = vld [vmem:[#allocation7 + $0xa8] sm:$0xff]
    %v208 = vld [vmem:[#allocation7 + $0xb0] sm:$0xff]
    %v209 = vld [vmem:[#allocation7 + $0xb8] sm:$0xff]
    %v210 = vld [vmem:[#allocation7 + $0xc0] sm:$0xff]
    %v211 = vld [vmem:[#allocation7 + $0xc8] sm:$0xff]
    %v212 = vld [vmem:[#allocation7 + $0xd0] sm:$0xff]
    %v213 = vld [vmem:[#allocation7 + $0xd8] sm:$0xff]
    %v214 = vld [vmem:[#allocation7 + $0xe0] sm:$0xff]
    %v215 = vld [vmem:[#allocation7 + $0xe8] sm:$0xff]
    %v216 = vld [vmem:[#allocation7 + $0xf0] sm:$0xff]
    %v217 = vld [vmem:[#allocation7 + $0xf8] sm:$0xff]
    %v218 = vld [vmem:[#allocation7 + $0x100] sm:$0xff]
    %v219 = vld [vmem:[#allocation7 + $0x108] sm:$0xff]
    %v220 = vld [vmem:[#allocation7 + $0x110] sm:$0xff]
    %v221 = vld [vmem:[#allocation7 + $0x118] sm:$0xff]
    %v222 = vld [vmem:[#allocation7 + $0x120] sm:$0xff]
    %v223 = vld [vmem:[#allocation7 + $0x128] sm:$0xff]
    %v224 = vld [vmem:[#allocation7 + $0x130] sm:$0xff]
    %v225 = vld [vmem:[#allocation7 + $0x138] sm:$0xff]
    %v226 = vld [vmem:[#allocation7 + $0x140] sm:$0xff]
    %v227 = vld [vmem:[#allocation7 + $0x148] sm:$0xff]
    %v228 = vld [vmem:[#allocation7 + $0x150] sm:$0xff]
    %v229 = vld [vmem:[#allocation7 + $0x158] sm:$0xff]
    %v230 = vld [vmem:[#allocation7 + $0x160] sm:$0xff]
    %v231 = vld [vmem:[#allocation7 + $0x168] sm:$0xff]
    %v232 = vld [vmem:[#allocation7 + $0x170] sm:$0xff]
    %v233 = vld [vmem:[#allocation7 + $0x178] sm:$0xff]
    %234 = vmatpush.msra.mxu0 %v231
    %235 = vmatpush.msra.mxu0 %v228
    %236 = vmatpush.msra.mxu0 %v225
    %237 = vmatpush.msra.mxu0 %v222
    %238 = vmatpush.msra.mxu0 %v219
    %239 = vmatpush.msra.mxu0 %v216
    %240 = vmatpush.msra.mxu0 %v213
    %241 = vmatpush.msra.mxu0 %v210
    %242 = vmatpush.msra.mxu0 %v207
    %243 = vmatpush.msra.mxu0 %v204
    %244 = vmatpush.msra.mxu0 %v201
    %245 = vmatpush.msra.mxu0 %v198
    %246 = vmatpush.msra.mxu0 %v195
    %247 = vmatpush.msra.mxu0 %v192
    %248 = vmatpush.msra.mxu0 %v189
    %249 = vmatpush.msra.mxu0 %v186
    %250 = vmatmul.f32.gmra.mxu0 %v178
    %v251 = vpop.f32.mrf.mxu0
    %v252 = vadd.f32 0.0, %v251
    %253 = vmatmul.f32.gmra.mxu0 %v179
    %v254 = vpop.f32.mrf.mxu0
    %v255 = vadd.f32 0.0, %v254
    %256 = vmatmul.f32.gmra.mxu0 %v180
    %v257 = vpop.f32.mrf.mxu0
    %v258 = vadd.f32 0.0, %v257
    %259 = vmatmul.f32.gmra.mxu0 %v181
    %v260 = vpop.f32.mrf.mxu0
    %v261 = vadd.f32 0.0, %v260
    %262 = vmatmul.f32.gmra.mxu0 %v182
    %v263 = vpop.f32.mrf.mxu0
    %v264 = vadd.f32 0.0, %v263
    %265 = vmatmul.f32.gmra.mxu0 %v183
    %v266 = vpop.f32.mrf.mxu0
    %v267 = vadd.f32 0.0, %v266
    %268 = vmatmul.f32.gmra.mxu0 %v184
    %v269 = vpop.f32.mrf.mxu0
    %v270 = vadd.f32 0.0, %v269
    %271 = vmatmul.f32.gmra.mxu0 %v185
    %v272 = vpop.f32.mrf.mxu0
    %v273 = vadd.f32 0.0, %v272
    %274 = vdwg.mxu0
    %275 = vmatpush.msra.mxu0 %v232
    %276 = vmatpush.msra.mxu0 %v229
    %277 = vmatpush.msra.mxu0 %v226
    %278 = vmatpush.msra.mxu0 %v223
    %279 = vmatpush.msra.mxu0 %v220
    %280 = vmatpush.msra.mxu0 %v217
    %281 = vmatpush.msra.mxu0 %v214
    %282 = vmatpush.msra.mxu0 %v211
    %283 = vmatpush.msra.mxu0 %v208
    %284 = vmatpush.msra.mxu0 %v205
    %285 = vmatpush.msra.mxu0 %v202
    %286 = vmatpush.msra.mxu0 %v199
    %287 = vmatpush.msra.mxu0 %v196
    %288 = vmatpush.msra.mxu0 %v193
    %289 = vmatpush.msra.mxu0 %v190
    %290 = vmatpush.msra.mxu0 %v187
    %291 = vmatmul.f32.gmra.mxu0 %v178
    %v292 = vpop.f32.mrf.mxu0
    %v293 = vadd.f32 0.0, %v292
    %294 = vmatmul.f32.gmra.mxu0 %v179
    %v295 = vpop.f32.mrf.mxu0
    %v296 = vadd.f32 0.0, %v295
    %297 = vmatmul.f32.gmra.mxu0 %v180
    %v298 = vpop.f32.mrf.mxu0
    %v299 = vadd.f32 0.0, %v298
    %300 = vmatmul.f32.gmra.mxu0 %v181
    %v301 = vpop.f32.mrf.mxu0
    %v302 = vadd.f32 0.0, %v301
    %303 = vmatmul.f32.gmra.mxu0 %v182
    %v304 = vpop.f32.mrf.mxu0
    %v305 = vadd.f32 0.0, %v304
    %306 = vmatmul.f32.gmra.mxu0 %v183
    %v307 = vpop.f32.mrf.mxu0
    %v308 = vadd.f32 0.0, %v307
    %309 = vmatmul.f32.gmra.mxu0 %v184
    %v310 = vpop.f32.mrf.mxu0
    %v311 = vadd.f32 0.0, %v310
    %312 = vmatmul.f32.gmra.mxu0 %v185
    %v313 = vpop.f32.mrf.mxu0
    %v314 = vadd.f32 0.0, %v313
    %315 = vdwg.mxu0
    %316 = vmatpush.msra.mxu0 %v233
    %317 = vmatpush.msra.mxu0 %v230
    %318 = vmatpush.msra.mxu0 %v227
    %319 = vmatpush.msra.mxu0 %v224
    %320 = vmatpush.msra.mxu0 %v221
    %321 = vmatpush.msra.mxu0 %v218
    %322 = vmatpush.msra.mxu0 %v215
    %323 = vmatpush.msra.mxu0 %v212
    %324 = vmatpush.msra.mxu0 %v209
    %325 = vmatpush.msra.mxu0 %v206
    %326 = vmatpush.msra.mxu0 %v203
    %327 = vmatpush.msra.mxu0 %v200
    %328 = vmatpush.msra.mxu0 %v197
    %329 = vmatpush.msra.mxu0 %v194
    %330 = vmatpush.msra.mxu0 %v191
    %331 = vmatpush.msra.mxu0 %v188
    %332 = vmatmul.f32.gmra.mxu0 %v178
    %v333 = vpop.f32.mrf.mxu0
    %v334 = vadd.f32 0.0, %v333
    %335 = vmatmul.f32.gmra.mxu0 %v179
    %v336 = vpop.f32.mrf.mxu0
    %v337 = vadd.f32 0.0, %v336
    %338 = vmatmul.f32.gmra.mxu0 %v180
    %v339 = vpop.f32.mrf.mxu0
    %v340 = vadd.f32 0.0, %v339
    %341 = vmatmul.f32.gmra.mxu0 %v181
    %v342 = vpop.f32.mrf.mxu0
    %v343 = vadd.f32 0.0, %v342
    %344 = vmatmul.f32.gmra.mxu0 %v182
    %v345 = vpop.f32.mrf.mxu0
    %v346 = vadd.f32 0.0, %v345
    %347 = vmatmul.f32.gmra.mxu0 %v183
    %v348 = vpop.f32.mrf.mxu0
    %v349 = vadd.f32 0.0, %v348
    %350 = vmatmul.f32.gmra.mxu0 %v184
    %v351 = vpop.f32.mrf.mxu0
    %v352 = vadd.f32 0.0, %v351
    %353 = vmatmul.f32.gmra.mxu0 %v185
    %v354 = vpop.f32.mrf.mxu0
    %v355 = vadd.f32 0.0, %v354
    %356 = vdwg.mxu0
    %v357 = vld [vmem:[#allocation17] sm:$0xff]
    %v358 = vld [vmem:[#allocation8] sm:$0xff]
    %v359 = vld [vmem:[#allocation8 + $0x8] sm:$0xff]
    %v360 = vld [vmem:[#allocation8 + $0x10] sm:$0xff]
    %v361 = vld [vmem:[#allocation8 + $0x18] sm:$0xff]
    %v362 = vld [vmem:[#allocation8 + $0x20] sm:$0xff]
    %v363 = vld [vmem:[#allocation8 + $0x28] sm:$0xff]
    %v364 = vld [vmem:[#allocation8 + $0x30] sm:$0xff]
    %v365 = vld [vmem:[#allocation8 + $0x38] sm:$0xff]
    %v366 = vld [vmem:[#allocation8 + $0x40] sm:$0xff]
    %v367 = vld [vmem:[#allocation8 + $0x48] sm:$0xff]
    %v368 = vld [vmem:[#allocation8 + $0x50] sm:$0xff]
    %v369 = vld [vmem:[#allocation8 + $0x58] sm:$0xff]
    %v370 = vld [vmem:[#allocation8 + $0x60] sm:$0xff]
    %v371 = vld [vmem:[#allocation8 + $0x68] sm:$0xff]
    %v372 = vld [vmem:[#allocation8 + $0x70] sm:$0xff]
    %v373 = vld [vmem:[#allocation8 + $0x78] sm:$0xff]
    %v374 = vld [vmem:[#allocation8 + $0x80] sm:$0xff]
    %v375 = vld [vmem:[#allocation8 + $0x88] sm:$0xff]
    %v376 = vld [vmem:[#allocation8 + $0x90] sm:$0xff]
    %v377 = vld [vmem:[#allocation8 + $0x98] sm:$0xff]
    %v378 = vld [vmem:[#allocation8 + $0xa0] sm:$0xff]
    %v379 = vld [vmem:[#allocation8 + $0xa8] sm:$0xff]
    %v380 = vld [vmem:[#allocation8 + $0xb0] sm:$0xff]
    %v381 = vld [vmem:[#allocation8 + $0xb8] sm:$0xff]
    %v382 = vld [vmem:[#allocation8 + $0xc0] sm:$0xff]
    %v383 = vld [vmem:[#allocation8 + $0xc8] sm:$0xff]
    %v384 = vld [vmem:[#allocation8 + $0xd0] sm:$0xff]
    %v385 = vld [vmem:[#allocation8 + $0xd8] sm:$0xff]
    %v386 = vld [vmem:[#allocation8 + $0xe0] sm:$0xff]
    %v387 = vld [vmem:[#allocation8 + $0xe8] sm:$0xff]
    %v388 = vld [vmem:[#allocation8 + $0xf0] sm:$0xff]
    %v389 = vld [vmem:[#allocation8 + $0xf8] sm:$0xff]
    %390 = vmatpush.msra.mxu0 %v388
    %391 = vmatpush.msra.mxu0 %v386
    %392 = vmatpush.msra.mxu0 %v384
    %393 = vmatpush.msra.mxu0 %v382
    %394 = vmatpush.msra.mxu0 %v380
    %395 = vmatpush.msra.mxu0 %v378
    %396 = vmatpush.msra.mxu0 %v376
    %397 = vmatpush.msra.mxu0 %v374
    %398 = vmatpush.msra.mxu0 %v372
    %399 = vmatpush.msra.mxu0 %v370
    %400 = vmatpush.msra.mxu0 %v368
    %401 = vmatpush.msra.mxu0 %v366
    %402 = vmatpush.msra.mxu0 %v364
    %403 = vmatpush.msra.mxu0 %v362
    %404 = vmatpush.msra.mxu0 %v360
    %405 = vmatpush.msra.mxu0 %v358
    %406 = vmatmul.f32.gmra.mxu0 %v357
    %v407 = vpop.f32.mrf.mxu0
    %v408 = vadd.f32 0.0, %v407
    %409 = vdwg.mxu0
    %410 = vmatpush.msra.mxu0 %v389
    %411 = vmatpush.msra.mxu0 %v387
    %412 = vmatpush.msra.mxu0 %v385
    %413 = vmatpush.msra.mxu0 %v383
    %414 = vmatpush.msra.mxu0 %v381
    %415 = vmatpush.msra.mxu0 %v379
    %416 = vmatpush.msra.mxu0 %v377
    %417 = vmatpush.msra.mxu0 %v375
    %418 = vmatpush.msra.mxu0 %v373
    %419 = vmatpush.msra.mxu0 %v371
    %420 = vmatpush.msra.mxu0 %v369
    %421 = vmatpush.msra.mxu0 %v367
    %422 = vmatpush.msra.mxu0 %v365
    %423 = vmatpush.msra.mxu0 %v363
    %424 = vmatpush.msra.mxu0 %v361
    %425 = vmatpush.msra.mxu0 %v359
    %426 = vmatmul.f32.gmra.mxu0 %v357
    %v427 = vpop.f32.mrf.mxu0
    %v428 = vadd.f32 0.0, %v427
    %429 = vdwg.mxu0
    %v430 = vadd.f32 %v252, %v408
    %v431 = vadd.f32 %v293, %v428
    %v432 = vld [vmem:[%s4] sm:$0x3]
    %v434 = vperm.slane %v432, 0
    %v435 = vperm.slane %v432, 1
    %v438 = vadd.f32 %v430, %v434
    %v439 = vadd.f32 %v431, %v435
    %v440 = vxor.u32 %v438, 2147483648
    %v441 = vxor.u32 %v439, 2147483648
    %v442 = vmul.f32 %v440, 1.442695
    %v443 = vpow.pop %v442
    %v444 = vmul.f32 %v441, 1.442695
    %v445 = vpow.pop %v444
    %v446 = vadd.f32 %v443, 1.0
    %v447 = vadd.f32 %v445, 1.0
    %v448 = vrcp.pop %v446
    %v449 = vmul.f32 %v446, %v448
    %v450 = vsub.f32 1.0, %v449
    %v451 = vmul.f32 %v448, %v450
    %v452 = vadd.f32 %v448, %v451
    %vm453 = vweird.f32 %v446
    %vm454 = vweird.f32 %v448
    %vm455 = vmor %vm453, %vm454
    %v456 = vsel %vm455, %v448, %v452
    %v457 = vand.u32 2147483647, %v446
    %vm458 = vcmp.eq.f32.partialorder %v457, 8.507059e+37
    %v459 = vand.u32 %v446, 2147483648
    %v460 = vor.u32 1.1754944e-38, %v459
    %v461 = vsel %vm458, %v460, %v456
    %v462 = vmul.f32 1.0, %v461
    %v463 = vrcp.pop %v447
    %v464 = vmul.f32 %v447, %v463
    %v465 = vsub.f32 1.0, %v464
    %v466 = vmul.f32 %v463, %v465
    %v467 = vadd.f32 %v463, %v466
    %vm468 = vweird.f32 %v447
    %vm469 = vweird.f32 %v463
    %vm470 = vmor %vm468, %vm469
    %v471 = vsel %vm470, %v463, %v467
    %v472 = vand.u32 2147483647, %v447
    %vm473 = vcmp.eq.f32.partialorder %v472, 8.507059e+37
    %v474 = vand.u32 %v447, 2147483648
    %v475 = vor.u32 1.1754944e-38, %v474
    %v476 = vsel %vm473, %v475, %v471
    %v477 = vmul.f32 1.0, %v476
    %v478 = vmul.f32 %v477, %v357
    %v479 = vld [vmem:[#allocation10] sm:$0xff]
    %v480 = vld [vmem:[#allocation10 + $0x8] sm:$0xff]
    %v481 = vld [vmem:[#allocation10 + $0x10] sm:$0xff]
    %v482 = vld [vmem:[#allocation10 + $0x18] sm:$0xff]
    %v483 = vld [vmem:[#allocation10 + $0x20] sm:$0xff]
    %v484 = vld [vmem:[#allocation10 + $0x28] sm:$0xff]
    %v485 = vld [vmem:[#allocation10 + $0x30] sm:$0xff]
    %v486 = vld [vmem:[#allocation10 + $0x38] sm:$0xff]
    %v487 = vld [vmem:[#allocation10 + $0x40] sm:$0xff]
    %v488 = vld [vmem:[#allocation10 + $0x48] sm:$0xff]
    %v489 = vld [vmem:[#allocation10 + $0x50] sm:$0xff]
    %v490 = vld [vmem:[#allocation10 + $0x58] sm:$0xff]
    %v491 = vld [vmem:[#allocation10 + $0x60] sm:$0xff]
    %v492 = vld [vmem:[#allocation10 + $0x68] sm:$0xff]
    %v493 = vld [vmem:[#allocation10 + $0x70] sm:$0xff]
    %v494 = vld [vmem:[#allocation10 + $0x78] sm:$0xff]
    %495 = vmatpush.msra.mxu0 %v494
    %496 = vmatpush.msra.mxu0 %v493
    %497 = vmatpush.msra.mxu0 %v492
    %498 = vmatpush.msra.mxu0 %v491
    %499 = vmatpush.msra.mxu0 %v490
    %500 = vmatpush.msra.mxu0 %v489
    %501 = vmatpush.msra.mxu0 %v488
    %502 = vmatpush.msra.mxu0 %v487
    %503 = vmatpush.msra.mxu0 %v486
    %504 = vmatpush.msra.mxu0 %v485
    %505 = vmatpush.msra.mxu0 %v484
    %506 = vmatpush.msra.mxu0 %v483
    %507 = vmatpush.msra.mxu0 %v482
    %508 = vmatpush.msra.mxu0 %v481
    %509 = vmatpush.msra.mxu0 %v480
    %510 = vmatpush.msra.mxu0 %v479
    %511 = vmatmul.f32.gmra.mxu0 %v478
    %v512 = vpop.f32.mrf.mxu0
    %v513 = vadd.f32 0.0, %v512
    %514 = vdwg.mxu0
    %v515 = vadd.f32 %v334, %v513
    %v516 = vld [vmem:[%s6] sm:$0x1]
    %v518 = vperm.slane %v516, 0
    %v520 = vadd.f32 %v515, %v518
    %v521 = vtanh.pop %v520
    %v522 = vmul.f32 %v462, %v357
    %v523 = vsub.f32 1.0, %v462
    %v524 = vmul.f32 %v523, %v521
    %v525 = vadd.f32 %v522, %v524
    %526 = vst [vmem:[#allocation17] sm:$0xff] %v525
    %s527 = scalar_lea.vmem [#allocation17], 8
    %v528 = vld [vmem:[%s527] sm:$0xff]
    %v529 = vld [vmem:[#allocation11] sm:$0xff]
    %v530 = vld [vmem:[#allocation11 + $0x8] sm:$0xff]
    %v531 = vld [vmem:[#allocation11 + $0x10] sm:$0xff]
    %v532 = vld [vmem:[#allocation11 + $0x18] sm:$0xff]
    %v533 = vld [vmem:[#allocation11 + $0x20] sm:$0xff]
    %v534 = vld [vmem:[#allocation11 + $0x28] sm:$0xff]
    %v535 = vld [vmem:[#allocation11 + $0x30] sm:$0xff]
    %v536 = vld [vmem:[#allocation11 + $0x38] sm:$0xff]
    %v537 = vld [vmem:[#allocation11 + $0x40] sm:$0xff]
    %v538 = vld [vmem:[#allocation11 + $0x48] sm:$0xff]
    %v539 = vld [vmem:[#allocation11 + $0x50] sm:$0xff]
    %v540 = vld [vmem:[#allocation11 + $0x58] sm:$0xff]
    %v541 = vld [vmem:[#allocation11 + $0x60] sm:$0xff]
    %v542 = vld [vmem:[#allocation11 + $0x68] sm:$0xff]
    %v543 = vld [vmem:[#allocation11 + $0x70] sm:$0xff]
    %v544 = vld [vmem:[#allocation11 + $0x78] sm:$0xff]
    %v545 = vld [vmem:[#allocation11 + $0x80] sm:$0xff]
    %v546 = vld [vmem:[#allocation11 + $0x88] sm:$0xff]
    %v547 = vld [vmem:[#allocation11 + $0x90] sm:$0xff]
    %v548 = vld [vmem:[#allocation11 + $0x98] sm:$0xff]
    %v549 = vld [vmem:[#allocation11 + $0xa0] sm:$0xff]
    %v550 = vld [vmem:[#allocation11 + $0xa8] sm:$0xff]
    %v551 = vld [vmem:[#allocation11 + $0xb0] sm:$0xff]
    %v552 = vld [vmem:[#allocation11 + $0xb8] sm:$0xff]
    %v553 = vld [vmem:[#allocation11 + $0xc0] sm:$0xff]
    %v554 = vld [vmem:[#allocation11 + $0xc8] sm:$0xff]
    %v555 = vld [vmem:[#allocation11 + $0xd0] sm:$0xff]
    %v556 = vld [vmem:[#allocation11 + $0xd8] sm:$0xff]
    %v557 = vld [vmem:[#allocation11 + $0xe0] sm:$0xff]
    %v558 = vld [vmem:[#allocation11 + $0xe8] sm:$0xff]
    %v559 = vld [vmem:[#allocation11 + $0xf0] sm:$0xff]
    %v560 = vld [vmem:[#allocation11 + $0xf8] sm:$0xff]
    %v561 = vld [vmem:[#allocation11 + $0x100] sm:$0xff]
    %v562 = vld [vmem:[#allocation11 + $0x108] sm:$0xff]
    %v563 = vld [vmem:[#allocation11 + $0x110] sm:$0xff]
    %v564 = vld [vmem:[#allocation11 + $0x118] sm:$0xff]
    %v565 = vld [vmem:[#allocation11 + $0x120] sm:$0xff]
    %v566 = vld [vmem:[#allocation11 + $0x128] sm:$0xff]
    %v567 = vld [vmem:[#allocation11 + $0x130] sm:$0xff]
    %v568 = vld [vmem:[#allocation11 + $0x138] sm:$0xff]
    %v569 = vld [vmem:[#allocation11 + $0x140] sm:$0xff]
    %v570 = vld [vmem:[#allocation11 + $0x148] sm:$0xff]
    %v571 = vld [vmem:[#allocation11 + $0x150] sm:$0xff]
    %v572 = vld [vmem:[#allocation11 + $0x158] sm:$0xff]
    %v573 = vld [vmem:[#allocation11 + $0x160] sm:$0xff]
    %v574 = vld [vmem:[#allocation11 + $0x168] sm:$0xff]
    %v575 = vld [vmem:[#allocation11 + $0x170] sm:$0xff]
    %v576 = vld [vmem:[#allocation11 + $0x178] sm:$0xff]
    %577 = vmatpush.msra.mxu0 %v574
    %578 = vmatpush.msra.mxu0 %v571
    %579 = vmatpush.msra.mxu0 %v568
    %580 = vmatpush.msra.mxu0 %v565
    %581 = vmatpush.msra.mxu0 %v562
    %582 = vmatpush.msra.mxu0 %v559
    %583 = vmatpush.msra.mxu0 %v556
    %584 = vmatpush.msra.mxu0 %v553
    %585 = vmatpush.msra.mxu0 %v550
    %586 = vmatpush.msra.mxu0 %v547
    %587 = vmatpush.msra.mxu0 %v544
    %588 = vmatpush.msra.mxu0 %v541
    %589 = vmatpush.msra.mxu0 %v538
    %590 = vmatpush.msra.mxu0 %v535
    %591 = vmatpush.msra.mxu0 %v532
    %592 = vmatpush.msra.mxu0 %v529
    %593 = vmatmul.f32.gmra.mxu0 %v525
    %v594 = vpop.f32.mrf.mxu0
    %v595 = vadd.f32 0.0, %v594
    %596 = vdwg.mxu0
    %597 = vmatpush.msra.mxu0 %v575
    %598 = vmatpush.msra.mxu0 %v572
    %599 = vmatpush.msra.mxu0 %v569
    %600 = vmatpush.msra.mxu0 %v566
    %601 = vmatpush.msra.mxu0 %v563
    %602 = vmatpush.msra.mxu0 %v560
    %603 = vmatpush.msra.mxu0 %v557
    %604 = vmatpush.msra.mxu0 %v554
    %605 = vmatpush.msra.mxu0 %v551
    %606 = vmatpush.msra.mxu0 %v548
    %607 = vmatpush.msra.mxu0 %v545
    %608 = vmatpush.msra.mxu0 %v542
    %609 = vmatpush.msra.mxu0 %v539
    %610 = vmatpush.msra.mxu0 %v536
    %611 = vmatpush.msra.mxu0 %v533
    %612 = vmatpush.msra.mxu0 %v530
    %613 = vmatmul.f32.gmra.mxu0 %v525
    %v614 = vpop.f32.mrf.mxu0
    %v615 = vadd.f32 0.0, %v614
    %616 = vdwg.mxu0
    %617 = vmatpush.msra.mxu0 %v576
    %618 = vmatpush.msra.mxu0 %v573
    %619 = vmatpush.msra.mxu0 %v570
    %620 = vmatpush.msra.mxu0 %v567
    %621 = vmatpush.msra.mxu0 %v564
    %622 = vmatpush.msra.mxu0 %v561
    %623 = vmatpush.msra.mxu0 %v558
    %624 = vmatpush.msra.mxu0 %v555
    %625 = vmatpush.msra.mxu0 %v552
    %626 = vmatpush.msra.mxu0 %v549
    %627 = vmatpush.msra.mxu0 %v546
    %628 = vmatpush.msra.mxu0 %v543
    %629 = vmatpush.msra.mxu0 %v540
    %630 = vmatpush.msra.mxu0 %v537
    %631 = vmatpush.msra.mxu0 %v534
    %632 = vmatpush.msra.mxu0 %v531
    %633 = vmatmul.f32.gmra.mxu0 %v525
    %v634 = vpop.f32.mrf.mxu0
    %v635 = vadd.f32 0.0, %v634
    %636 = vdwg.mxu0
    %v637 = vld [vmem:[#allocation13] sm:$0xff]
    %v638 = vld [vmem:[#allocation13 + $0x8] sm:$0xff]
    %v639 = vld [vmem:[#allocation13 + $0x10] sm:$0xff]
    %v640 = vld [vmem:[#allocation13 + $0x18] sm:$0xff]
    %v641 = vld [vmem:[#allocation13 + $0x20] sm:$0xff]
    %v642 = vld [vmem:[#allocation13 + $0x28] sm:$0xff]
    %v643 = vld [vmem:[#allocation13 + $0x30] sm:$0xff]
    %v644 = vld [vmem:[#allocation13 + $0x38] sm:$0xff]
    %v645 = vld [vmem:[#allocation13 + $0x40] sm:$0xff]
    %v646 = vld [vmem:[#allocation13 + $0x48] sm:$0xff]
    %v647 = vld [vmem:[#allocation13 + $0x50] sm:$0xff]
    %v648 = vld [vmem:[#allocation13 + $0x58] sm:$0xff]
    %v649 = vld [vmem:[#allocation13 + $0x60] sm:$0xff]
    %v650 = vld [vmem:[#allocation13 + $0x68] sm:$0xff]
    %v651 = vld [vmem:[#allocation13 + $0x70] sm:$0xff]
    %v652 = vld [vmem:[#allocation13 + $0x78] sm:$0xff]
    %v653 = vld [vmem:[#allocation13 + $0x80] sm:$0xff]
    %v654 = vld [vmem:[#allocation13 + $0x88] sm:$0xff]
    %v655 = vld [vmem:[#allocation13 + $0x90] sm:$0xff]
    %v656 = vld [vmem:[#allocation13 + $0x98] sm:$0xff]
    %v657 = vld [vmem:[#allocation13 + $0xa0] sm:$0xff]
    %v658 = vld [vmem:[#allocation13 + $0xa8] sm:$0xff]
    %v659 = vld [vmem:[#allocation13 + $0xb0] sm:$0xff]
    %v660 = vld [vmem:[#allocation13 + $0xb8] sm:$0xff]
    %v661 = vld [vmem:[#allocation13 + $0xc0] sm:$0xff]
    %v662 = vld [vmem:[#allocation13 + $0xc8] sm:$0xff]
    %v663 = vld [vmem:[#allocation13 + $0xd0] sm:$0xff]
    %v664 = vld [vmem:[#allocation13 + $0xd8] sm:$0xff]
    %v665 = vld [vmem:[#allocation13 + $0xe0] sm:$0xff]
    %v666 = vld [vmem:[#allocation13 + $0xe8] sm:$0xff]
    %v667 = vld [vmem:[#allocation13 + $0xf0] sm:$0xff]
    %v668 = vld [vmem:[#allocation13 + $0xf8] sm:$0xff]
    %669 = vmatpush.msra.mxu0 %v667
    %670 = vmatpush.msra.mxu0 %v665
    %671 = vmatpush.msra.mxu0 %v663
    %672 = vmatpush.msra.mxu0 %v661
    %673 = vmatpush.msra.mxu0 %v659
    %674 = vmatpush.msra.mxu0 %v657
    %675 = vmatpush.msra.mxu0 %v655
    %676 = vmatpush.msra.mxu0 %v653
    %677 = vmatpush.msra.mxu0 %v651
    %678 = vmatpush.msra.mxu0 %v649
    %679 = vmatpush.msra.mxu0 %v647
    %680 = vmatpush.msra.mxu0 %v645
    %681 = vmatpush.msra.mxu0 %v643
    %682 = vmatpush.msra.mxu0 %v641
    %683 = vmatpush.msra.mxu0 %v639
    %684 = vmatpush.msra.mxu0 %v637
    %685 = vmatmul.f32.gmra.mxu0 %v528
    %v686 = vpop.f32.mrf.mxu0
    %v687 = vadd.f32 0.0, %v686
    %688 = vdwg.mxu0
    %689 = vmatpush.msra.mxu0 %v668
    %690 = vmatpush.msra.mxu0 %v666
    %691 = vmatpush.msra.mxu0 %v664
    %692 = vmatpush.msra.mxu0 %v662
    %693 = vmatpush.msra.mxu0 %v660
    %694 = vmatpush.msra.mxu0 %v658
    %695 = vmatpush.msra.mxu0 %v656
    %696 = vmatpush.msra.mxu0 %v654
    %697 = vmatpush.msra.mxu0 %v652
    %698 = vmatpush.msra.mxu0 %v650
    %699 = vmatpush.msra.mxu0 %v648
    %700 = vmatpush.msra.mxu0 %v646
    %701 = vmatpush.msra.mxu0 %v644
    %702 = vmatpush.msra.mxu0 %v642
    %703 = vmatpush.msra.mxu0 %v640
    %704 = vmatpush.msra.mxu0 %v638
    %705 = vmatmul.f32.gmra.mxu0 %v528
    %v706 = vpop.f32.mrf.mxu0
    %v707 = vadd.f32 0.0, %v706
    %708 = vdwg.mxu0
    %v709 = vadd.f32 %v595, %v687
    %v710 = vadd.f32 %v615, %v707
    %v711 = vld [vmem:[%s9] sm:$0x3]
    %v713 = vperm.slane %v711, 0
    %v714 = vperm.slane %v711, 1
    %v717 = vadd.f32 %v709, %v713
    %v718 = vadd.f32 %v710, %v714
    %v719 = vxor.u32 %v717, 2147483648
    %v720 = vxor.u32 %v718, 2147483648
    %v721 = vmul.f32 %v719, 1.442695
    %v722 = vpow.pop %v721
    %v723 = vmul.f32 %v720, 1.442695
    %v724 = vpow.pop %v723
    %v725 = vadd.f32 %v722, 1.0
    %v726 = vadd.f32 %v724, 1.0
    %v727 = vrcp.pop %v725
    %v728 = vmul.f32 %v725, %v727
    %v729 = vsub.f32 1.0, %v728
    %v730 = vmul.f32 %v727, %v729
    %v731 = vadd.f32 %v727, %v730
    %vm732 = vweird.f32 %v725
    %vm733 = vweird.f32 %v727
    %vm734 = vmor %vm732, %vm733
    %v735 = vsel %vm734, %v727, %v731
    %v736 = vand.u32 2147483647, %v725
    %vm737 = vcmp.eq.f32.partialorder %v736, 8.507059e+37
    %v738 = vand.u32 %v725, 2147483648
    %v739 = vor.u32 1.1754944e-38, %v738
    %v740 = vsel %vm737, %v739, %v735
    %v741 = vmul.f32 1.0, %v740
    %v742 = vrcp.pop %v726
    %v743 = vmul.f32 %v726, %v742
    %v744 = vsub.f32 1.0, %v743
    %v745 = vmul.f32 %v742, %v744
    %v746 = vadd.f32 %v742, %v745
    %vm747 = vweird.f32 %v726
    %vm748 = vweird.f32 %v742
    %vm749 = vmor %vm747, %vm748
    %v750 = vsel %vm749, %v742, %v746
    %v751 = vand.u32 2147483647, %v726
    %vm752 = vcmp.eq.f32.partialorder %v751, 8.507059e+37
    %v753 = vand.u32 %v726, 2147483648
    %v754 = vor.u32 1.1754944e-38, %v753
    %v755 = vsel %vm752, %v754, %v750
    %v756 = vmul.f32 1.0, %v755
    %v757 = vmul.f32 %v756, %v528
    %v758 = vld [vmem:[#allocation14] sm:$0xff]
    %v759 = vld [vmem:[#allocation14 + $0x8] sm:$0xff]
    %v760 = vld [vmem:[#allocation14 + $0x10] sm:$0xff]
    %v761 = vld [vmem:[#allocation14 + $0x18] sm:$0xff]
    %v762 = vld [vmem:[#allocation14 + $0x20] sm:$0xff]
    %v763 = vld [vmem:[#allocation14 + $0x28] sm:$0xff]
    %v764 = vld [vmem:[#allocation14 + $0x30] sm:$0xff]
    %v765 = vld [vmem:[#allocation14 + $0x38] sm:$0xff]
    %v766 = vld [vmem:[#allocation14 + $0x40] sm:$0xff]
    %v767 = vld [vmem:[#allocation14 + $0x48] sm:$0xff]
    %v768 = vld [vmem:[#allocation14 + $0x50] sm:$0xff]
    %v769 = vld [vmem:[#allocation14 + $0x58] sm:$0xff]
    %v770 = vld [vmem:[#allocation14 + $0x60] sm:$0xff]
    %v771 = vld [vmem:[#allocation14 + $0x68] sm:$0xff]
    %v772 = vld [vmem:[#allocation14 + $0x70] sm:$0xff]
    %v773 = vld [vmem:[#allocation14 + $0x78] sm:$0xff]
    %774 = vmatpush.msra.mxu0 %v773
    %775 = vmatpush.msra.mxu0 %v772
    %776 = vmatpush.msra.mxu0 %v771
    %777 = vmatpush.msra.mxu0 %v770
    %778 = vmatpush.msra.mxu0 %v769
    %779 = vmatpush.msra.mxu0 %v768
    %780 = vmatpush.msra.mxu0 %v767
    %781 = vmatpush.msra.mxu0 %v766
    %782 = vmatpush.msra.mxu0 %v765
    %783 = vmatpush.msra.mxu0 %v764
    %784 = vmatpush.msra.mxu0 %v763
    %785 = vmatpush.msra.mxu0 %v762
    %786 = vmatpush.msra.mxu0 %v761
    %787 = vmatpush.msra.mxu0 %v760
    %788 = vmatpush.msra.mxu0 %v759
    %789 = vmatpush.msra.mxu0 %v758
    %790 = vmatmul.f32.gmra.mxu0 %v757
    %v791 = vpop.f32.mrf.mxu0
    %v792 = vadd.f32 0.0, %v791
    %793 = vdwg.mxu0
    %v794 = vadd.f32 %v635, %v792
    %v795 = vld [vmem:[%s11] sm:$0x1]
    %v797 = vperm.slane %v795, 0
    %v799 = vadd.f32 %v794, %v797
    %v800 = vtanh.pop %v799
    %v801 = vmul.f32 %v741, %v528
    %v802 = vsub.f32 1.0, %v741
    %v803 = vmul.f32 %v802, %v800
    %v804 = vadd.f32 %v801, %v803
    %805 = vst [vmem:[%s527] sm:$0xff] %v804
    %806 = vst [vmem:[#allocation16] sm:$0xff] %v804
    %v807 = vld [vmem:[#allocation17] sm:$0xff]
    %v808 = vld [vmem:[#allocation8] sm:$0xff]
    %v809 = vld [vmem:[#allocation8 + $0x8] sm:$0xff]
    %v810 = vld [vmem:[#allocation8 + $0x10] sm:$0xff]
    %v811 = vld [vmem:[#allocation8 + $0x18] sm:$0xff]
    %v812 = vld [vmem:[#allocation8 + $0x20] sm:$0xff]
    %v813 = vld [vmem:[#allocation8 + $0x28] sm:$0xff]
    %v814 = vld [vmem:[#allocation8 + $0x30] sm:$0xff]
    %v815 = vld [vmem:[#allocation8 + $0x38] sm:$0xff]
    %v816 = vld [vmem:[#allocation8 + $0x40] sm:$0xff]
    %v817 = vld [vmem:[#allocation8 + $0x48] sm:$0xff]
    %v818 = vld [vmem:[#allocation8 + $0x50] sm:$0xff]
    %v819 = vld [vmem:[#allocation8 + $0x58] sm:$0xff]
    %v820 = vld [vmem:[#allocation8 + $0x60] sm:$0xff]
    %v821 = vld [vmem:[#allocation8 + $0x68] sm:$0xff]
    %v822 = vld [vmem:[#allocation8 + $0x70] sm:$0xff]
    %v823 = vld [vmem:[#allocation8 + $0x78] sm:$0xff]
    %v824 = vld [vmem:[#allocation8 + $0x80] sm:$0xff]
    %v825 = vld [vmem:[#allocation8 + $0x88] sm:$0xff]
    %v826 = vld [vmem:[#allocation8 + $0x90] sm:$0xff]
    %v827 = vld [vmem:[#allocation8 + $0x98] sm:$0xff]
    %v828 = vld [vmem:[#allocation8 + $0xa0] sm:$0xff]
    %v829 = vld [vmem:[#allocation8 + $0xa8] sm:$0xff]
    %v830 = vld [vmem:[#allocation8 + $0xb0] sm:$0xff]
    %v831 = vld [vmem:[#allocation8 + $0xb8] sm:$0xff]
    %v832 = vld [vmem:[#allocation8 + $0xc0] sm:$0xff]
    %v833 = vld [vmem:[#allocation8 + $0xc8] sm:$0xff]
    %v834 = vld [vmem:[#allocation8 + $0xd0] sm:$0xff]
    %v835 = vld [vmem:[#allocation8 + $0xd8] sm:$0xff]
    %v836 = vld [vmem:[#allocation8 + $0xe0] sm:$0xff]
    %v837 = vld [vmem:[#allocation8 + $0xe8] sm:$0xff]
    %v838 = vld [vmem:[#allocation8 + $0xf0] sm:$0xff]
    %v839 = vld [vmem:[#allocation8 + $0xf8] sm:$0xff]
    %840 = vmatpush.msra.mxu0 %v838
    %841 = vmatpush.msra.mxu0 %v836
    %842 = vmatpush.msra.mxu0 %v834
    %843 = vmatpush.msra.mxu0 %v832
    %844 = vmatpush.msra.mxu0 %v830
    %845 = vmatpush.msra.mxu0 %v828
    %846 = vmatpush.msra.mxu0 %v826
    %847 = vmatpush.msra.mxu0 %v824
    %848 = vmatpush.msra.mxu0 %v822
    %849 = vmatpush.msra.mxu0 %v820
    %850 = vmatpush.msra.mxu0 %v818
    %851 = vmatpush.msra.mxu0 %v816
    %852 = vmatpush.msra.mxu0 %v814
    %853 = vmatpush.msra.mxu0 %v812
    %854 = vmatpush.msra.mxu0 %v810
    %855 = vmatpush.msra.mxu0 %v808
    %856 = vmatmul.f32.gmra.mxu0 %v807
    %v857 = vpop.f32.mrf.mxu0
    %v858 = vadd.f32 0.0, %v857
    %859 = vdwg.mxu0
    %860 = vmatpush.msra.mxu0 %v839
    %861 = vmatpush.msra.mxu0 %v837
    %862 = vmatpush.msra.mxu0 %v835
    %863 = vmatpush.msra.mxu0 %v833
    %864 = vmatpush.msra.mxu0 %v831
    %865 = vmatpush.msra.mxu0 %v829
    %866 = vmatpush.msra.mxu0 %v827
    %867 = vmatpush.msra.mxu0 %v825
    %868 = vmatpush.msra.mxu0 %v823
    %869 = vmatpush.msra.mxu0 %v821
    %870 = vmatpush.msra.mxu0 %v819
    %871 = vmatpush.msra.mxu0 %v817
    %872 = vmatpush.msra.mxu0 %v815
    %873 = vmatpush.msra.mxu0 %v813
    %874 = vmatpush.msra.mxu0 %v811
    %875 = vmatpush.msra.mxu0 %v809
    %876 = vmatmul.f32.gmra.mxu0 %v807
    %v877 = vpop.f32.mrf.mxu0
    %v878 = vadd.f32 0.0, %v877
    %879 = vdwg.mxu0
    %v880 = vadd.f32 %v255, %v858
    %v881 = vadd.f32 %v296, %v878
    %v882 = vld [vmem:[%s4] sm:$0x3]
    %v884 = vperm.slane %v882, 0
    %v885 = vperm.slane %v882, 1
    %v888 = vadd.f32 %v880, %v884
    %v889 = vadd.f32 %v881, %v885
    %v890 = vxor.u32 %v888, 2147483648
    %v891 = vxor.u32 %v889, 2147483648
    %v892 = vmul.f32 %v890, 1.442695
    %v893 = vpow.pop %v892
    %v894 = vmul.f32 %v891, 1.442695
    %v895 = vpow.pop %v894
    %v896 = vadd.f32 %v893, 1.0
    %v897 = vadd.f32 %v895, 1.0
    %v898 = vrcp.pop %v896
    %v899 = vmul.f32 %v896, %v898
    %v900 = vsub.f32 1.0, %v899
    %v901 = vmul.f32 %v898, %v900
    %v902 = vadd.f32 %v898, %v901
    %vm903 = vweird.f32 %v896
    %vm904 = vweird.f32 %v898
    %vm905 = vmor %vm903, %vm904
    %v906 = vsel %vm905, %v898, %v902
    %v907 = vand.u32 2147483647, %v896
    %vm908 = vcmp.eq.f32.partialorder %v907, 8.507059e+37
    %v909 = vand.u32 %v896, 2147483648
    %v910 = vor.u32 1.1754944e-38, %v909
    %v911 = vsel %vm908, %v910, %v906
    %v912 = vmul.f32 1.0, %v911
    %v913 = vrcp.pop %v897
    %v914 = vmul.f32 %v897, %v913
    %v915 = vsub.f32 1.0, %v914
    %v916 = vmul.f32 %v913, %v915
    %v917 = vadd.f32 %v913, %v916
    %vm918 = vweird.f32 %v897
    %vm919 = vweird.f32 %v913
    %vm920 = vmor %vm918, %vm919
    %v921 = vsel %vm920, %v913, %v917
    %v922 = vand.u32 2147483647, %v897
    %vm923 = vcmp.eq.f32.partialorder %v922, 8.507059e+37
    %v924 = vand.u32 %v897, 2147483648
    %v925 = vor.u32 1.1754944e-38, %v924
    %v926 = vsel %vm923, %v925, %v921
    %v927 = vmul.f32 1.0, %v926
    %v928 = vmul.f32 %v927, %v807
    %v929 = vld [vmem:[#allocation10] sm:$0xff]
    %v930 = vld [vmem:[#allocation10 + $0x8] sm:$0xff]
    %v931 = vld [vmem:[#allocation10 + $0x10] sm:$0xff]
    %v932 = vld [vmem:[#allocation10 + $0x18] sm:$0xff]
    %v933 = vld [vmem:[#allocation10 + $0x20] sm:$0xff]
    %v934 = vld [vmem:[#allocation10 + $0x28] sm:$0xff]
    %v935 = vld [vmem:[#allocation10 + $0x30] sm:$0xff]
    %v936 = vld [vmem:[#allocation10 + $0x38] sm:$0xff]
    %v937 = vld [vmem:[#allocation10 + $0x40] sm:$0xff]
    %v938 = vld [vmem:[#allocation10 + $0x48] sm:$0xff]
    %v939 = vld [vmem:[#allocation10 + $0x50] sm:$0xff]
    %v940 = vld [vmem:[#allocation10 + $0x58] sm:$0xff]
    %v941 = vld [vmem:[#allocation10 + $0x60] sm:$0xff]
    %v942 = vld [vmem:[#allocation10 + $0x68] sm:$0xff]
    %v943 = vld [vmem:[#allocation10 + $0x70] sm:$0xff]
    %v944 = vld [vmem:[#allocation10 + $0x78] sm:$0xff]
    %945 = vmatpush.msra.mxu0 %v944
    %946 = vmatpush.msra.mxu0 %v943
    %947 = vmatpush.msra.mxu0 %v942
    %948 = vmatpush.msra.mxu0 %v941
    %949 = vmatpush.msra.mxu0 %v940
    %950 = vmatpush.msra.mxu0 %v939
    %951 = vmatpush.msra.mxu0 %v938
    %952 = vmatpush.msra.mxu0 %v937
    %953 = vmatpush.msra.mxu0 %v936
    %954 = vmatpush.msra.mxu0 %v935
    %955 = vmatpush.msra.mxu0 %v934
    %956 = vmatpush.msra.mxu0 %v933
    %957 = vmatpush.msra.mxu0 %v932
    %958 = vmatpush.msra.mxu0 %v931
    %959 = vmatpush.msra.mxu0 %v930
    %960 = vmatpush.msra.mxu0 %v929
    %961 = vmatmul.f32.gmra.mxu0 %v928
    %v962 = vpop.f32.mrf.mxu0
    %v963 = vadd.f32 0.0, %v962
    %964 = vdwg.mxu0
    %v965 = vadd.f32 %v337, %v963
    %v966 = vld [vmem:[%s6] sm:$0x1]
    %v968 = vperm.slane %v966, 0
    %v970 = vadd.f32 %v965, %v968
    %v971 = vtanh.pop %v970
    %v972 = vmul.f32 %v912, %v807
    %v973 = vsub.f32 1.0, %v912
    %v974 = vmul.f32 %v973, %v971
    %v975 = vadd.f32 %v972, %v974
    %976 = vst [vmem:[#allocation17] sm:$0xff] %v975
    %v977 = vld [vmem:[%s527] sm:$0xff]
    %v978 = vld [vmem:[#allocation11] sm:$0xff]
    %v979 = vld [vmem:[#allocation11 + $0x8] sm:$0xff]
    %v980 = vld [vmem:[#allocation11 + $0x10] sm:$0xff]
    %v981 = vld [vmem:[#allocation11 + $0x18] sm:$0xff]
    %v982 = vld [vmem:[#allocation11 + $0x20] sm:$0xff]
    %v983 = vld [vmem:[#allocation11 + $0x28] sm:$0xff]
    %v984 = vld [vmem:[#allocation11 + $0x30] sm:$0xff]
    %v985 = vld [vmem:[#allocation11 + $0x38] sm:$0xff]
    %v986 = vld [vmem:[#allocation11 + $0x40] sm:$0xff]
    %v987 = vld [vmem:[#allocation11 + $0x48] sm:$0xff]
    %v988 = vld [vmem:[#allocation11 + $0x50] sm:$0xff]
    %v989 = vld [vmem:[#allocation11 + $0x58] sm:$0xff]
    %v990 = vld [vmem:[#allocation11 + $0x60] sm:$0xff]
    %v991 = vld [vmem:[#allocation11 + $0x68] sm:$0xff]
    %v992 = vld [vmem:[#allocation11 + $0x70] sm:$0xff]
    %v993 = vld [vmem:[#allocation11 + $0x78] sm:$0xff]
    %v994 = vld [vmem:[#allocation11 + $0x80] sm:$0xff]
    %v995 = vld [vmem:[#allocation11 + $0x88] sm:$0xff]
    %v996 = vld [vmem:[#allocation11 + $0x90] sm:$0xff]
    %v997 = vld [vmem:[#allocation11 + $0x98] sm:$0xff]
    %v998 = vld [vmem:[#allocation11 + $0xa0] sm:$0xff]
    %v999 = vld [vmem:[#allocation11 + $0xa8] sm:$0xff]
    %v1000 = vld [vmem:[#allocation11 + $0xb0] sm:$0xff]
    %v1001 = vld [vmem:[#allocation11 + $0xb8] sm:$0xff]
    %v1002 = vld [vmem:[#allocation11 + $0xc0] sm:$0xff]
    %v1003 = vld [vmem:[#allocation11 + $0xc8] sm:$0xff]
    %v1004 = vld [vmem:[#allocation11 + $0xd0] sm:$0xff]
    %v1005 = vld [vmem:[#allocation11 + $0xd8] sm:$0xff]
    %v1006 = vld [vmem:[#allocation11 + $0xe0] sm:$0xff]
    %v1007 = vld [vmem:[#allocation11 + $0xe8] sm:$0xff]
    %v1008 = vld [vmem:[#allocation11 + $0xf0] sm:$0xff]
    %v1009 = vld [vmem:[#allocation11 + $0xf8] sm:$0xff]
    %v1010 = vld [vmem:[#allocation11 + $0x100] sm:$0xff]
    %v1011 = vld [vmem:[#allocation11 + $0x108] sm:$0xff]
    %v1012 = vld [vmem:[#allocation11 + $0x110] sm:$0xff]
    %v1013 = vld [vmem:[#allocation11 + $0x118] sm:$0xff]
    %v1014 = vld [vmem:[#allocation11 + $0x120] sm:$0xff]
    %v1015 = vld [vmem:[#allocation11 + $0x128] sm:$0xff]
    %v1016 = vld [vmem:[#allocation11 + $0x130] sm:$0xff]
    %v1017 = vld [vmem:[#allocation11 + $0x138] sm:$0xff]
    %v1018 = vld [vmem:[#allocation11 + $0x140] sm:$0xff]
    %v1019 = vld [vmem:[#allocation11 + $0x148] sm:$0xff]
    %v1020 = vld [vmem:[#allocation11 + $0x150] sm:$0xff]
    %v1021 = vld [vmem:[#allocation11 + $0x158] sm:$0xff]
    %v1022 = vld [vmem:[#allocation11 + $0x160] sm:$0xff]
    %v1023 = vld [vmem:[#allocation11 + $0x168] sm:$0xff]
    %v1024 = vld [vmem:[#allocation11 + $0x170] sm:$0xff]
    %v1025 = vld [vmem:[#allocation11 + $0x178] sm:$0xff]
    %1026 = vmatpush.msra.mxu0 %v1023
    %1027 = vmatpush.msra.mxu0 %v1020
    %1028 = vmatpush.msra.mxu0 %v1017
    %1029 = vmatpush.msra.mxu0 %v1014
    %1030 = vmatpush.msra.mxu0 %v1011
    %1031 = vmatpush.msra.mxu0 %v1008
    %1032 = vmatpush.msra.mxu0 %v1005
    %1033 = vmatpush.msra.mxu0 %v1002
    %1034 = vmatpush.msra.mxu0 %v999
    %1035 = vmatpush.msra.mxu0 %v996
    %1036 = vmatpush.msra.mxu0 %v993
    %1037 = vmatpush.msra.mxu0 %v990
    %1038 = vmatpush.msra.mxu0 %v987
    %1039 = vmatpush.msra.mxu0 %v984
    %1040 = vmatpush.msra.mxu0 %v981
    %1041 = vmatpush.msra.mxu0 %v978
    %1042 = vmatmul.f32.gmra.mxu0 %v975
    %v1043 = vpop.f32.mrf.mxu0
    %v1044 = vadd.f32 0.0, %v1043
    %1045 = vdwg.mxu0
    %1046 = vmatpush.msra.mxu0 %v1024
    %1047 = vmatpush.msra.mxu0 %v1021
    %1048 = vmatpush.msra.mxu0 %v1018
    %1049 = vmatpush.msra.mxu0 %v1015
    %1050 = vmatpush.msra.mxu0 %v1012
    %1051 = vmatpush.msra.mxu0 %v1009
    %1052 = vmatpush.msra.mxu0 %v1006
    %1053 = vmatpush.msra.mxu0 %v1003
    %1054 = vmatpush.msra.mxu0 %v1000
    %1055 = vmatpush.msra.mxu0 %v997
    %1056 = vmatpush.msra.mxu0 %v994
    %1057 = vmatpush.msra.mxu0 %v991
    %1058 = vmatpush.msra.mxu0 %v988
    %1059 = vmatpush.msra.mxu0 %v985
    %1060 = vmatpush.msra.mxu0 %v982
    %1061 = vmatpush.msra.mxu0 %v979
    %1062 = vmatmul.f32.gmra.mxu0 %v975
    %v1063 = vpop.f32.mrf.mxu0
    %v1064 = vadd.f32 0.0, %v1063
    %1065 = vdwg.mxu0
    %1066 = vmatpush.msra.mxu0 %v1025
    %1067 = vmatpush.msra.mxu0 %v1022
    %1068 = vmatpush.msra.mxu0 %v1019
    %1069 = vmatpush.msra.mxu0 %v1016
    %1070 = vmatpush.msra.mxu0 %v1013
    %1071 = vmatpush.msra.mxu0 %v1010
    %1072 = vmatpush.msra.mxu0 %v1007
    %1073 = vmatpush.msra.mxu0 %v1004
    %1074 = vmatpush.msra.mxu0 %v1001
    %1075 = vmatpush.msra.mxu0 %v998
    %1076 = vmatpush.msra.mxu0 %v995
    %1077 = vmatpush.msra.mxu0 %v992
    %1078 = vmatpush.msra.mxu0 %v989
    %1079 = vmatpush.msra.mxu0 %v986
    %1080 = vmatpush.msra.mxu0 %v983
    %1081 = vmatpush.msra.mxu0 %v980
    %1082 = vmatmul.f32.gmra.mxu0 %v975
    %v1083 = vpop.f32.mrf.mxu0
    %v1084 = vadd.f32 0.0, %v1083
    %1085 = vdwg.mxu0
    %v1086 = vld [vmem:[#allocation13] sm:$0xff]
    %v1087 = vld [vmem:[#allocation13 + $0x8] sm:$0xff]
    %v1088 = vld [vmem:[#allocation13 + $0x10] sm:$0xff]
    %v1089 = vld [vmem:[#allocation13 + $0x18] sm:$0xff]
    %v1090 = vld [vmem:[#allocation13 + $0x20] sm:$0xff]
    %v1091 = vld [vmem:[#allocation13 + $0x28] sm:$0xff]
    %v1092 = vld [vmem:[#allocation13 + $0x30] sm:$0xff]
    %v1093 = vld [vmem:[#allocation13 + $0x38] sm:$0xff]
    %v1094 = vld [vmem:[#allocation13 + $0x40] sm:$0xff]
    %v1095 = vld [vmem:[#allocation13 + $0x48] sm:$0xff]
    %v1096 = vld [vmem:[#allocation13 + $0x50] sm:$0xff]
    %v1097 = vld [vmem:[#allocation13 + $0x58] sm:$0xff]
    %v1098 = vld [vmem:[#allocation13 + $0x60] sm:$0xff]
    %v1099 = vld [vmem:[#allocation13 + $0x68] sm:$0xff]
    %v1100 = vld [vmem:[#allocation13 + $0x70] sm:$0xff]
    %v1101 = vld [vmem:[#allocation13 + $0x78] sm:$0xff]
    %v1102 = vld [vmem:[#allocation13 + $0x80] sm:$0xff]
    %v1103 = vld [vmem:[#allocation13 + $0x88] sm:$0xff]
    %v1104 = vld [vmem:[#allocation13 + $0x90] sm:$0xff]
    %v1105 = vld [vmem:[#allocation13 + $0x98] sm:$0xff]
    %v1106 = vld [vmem:[#allocation13 + $0xa0] sm:$0xff]
    %v1107 = vld [vmem:[#allocation13 + $0xa8] sm:$0xff]
    %v1108 = vld [vmem:[#allocation13 + $0xb0] sm:$0xff]
    %v1109 = vld [vmem:[#allocation13 + $0xb8] sm:$0xff]
    %v1110 = vld [vmem:[#allocation13 + $0xc0] sm:$0xff]
    %v1111 = vld [vmem:[#allocation13 + $0xc8] sm:$0xff]
    %v1112 = vld [vmem:[#allocation13 + $0xd0] sm:$0xff]
    %v1113 = vld [vmem:[#allocation13 + $0xd8] sm:$0xff]
    %v1114 = vld [vmem:[#allocation13 + $0xe0] sm:$0xff]
    %v1115 = vld [vmem:[#allocation13 + $0xe8] sm:$0xff]
    %v1116 = vld [vmem:[#allocation13 + $0xf0] sm:$0xff]
    %v1117 = vld [vmem:[#allocation13 + $0xf8] sm:$0xff]
    %1118 = vmatpush.msra.mxu0 %v1116
    %1119 = vmatpush.msra.mxu0 %v1114
    %1120 = vmatpush.msra.mxu0 %v1112
    %1121 = vmatpush.msra.mxu0 %v1110
    %1122 = vmatpush.msra.mxu0 %v1108
    %1123 = vmatpush.msra.mxu0 %v1106
    %1124 = vmatpush.msra.mxu0 %v1104
    %1125 = vmatpush.msra.mxu0 %v1102
    %1126 = vmatpush.msra.mxu0 %v1100
    %1127 = vmatpush.msra.mxu0 %v1098
    %1128 = vmatpush.msra.mxu0 %v1096
    %1129 = vmatpush.msra.mxu0 %v1094
    %1130 = vmatpush.msra.mxu0 %v1092
    %1131 = vmatpush.msra.mxu0 %v1090
    %1132 = vmatpush.msra.mxu0 %v1088
    %1133 = vmatpush.msra.mxu0 %v1086
    %1134 = vmatmul.f32.gmra.mxu0 %v977
    %v1135 = vpop.f32.mrf.mxu0
    %v1136 = vadd.f32 0.0, %v1135
    %1137 = vdwg.mxu0
    %1138 = vmatpush.msra.mxu0 %v1117
    %1139 = vmatpush.msra.mxu0 %v1115
    %1140 = vmatpush.msra.mxu0 %v1113
    %1141 = vmatpush.msra.mxu0 %v1111
    %1142 = vmatpush.msra.mxu0 %v1109
    %1143 = vmatpush.msra.mxu0 %v1107
    %1144 = vmatpush.msra.mxu0 %v1105
    %1145 = vmatpush.msra.mxu0 %v1103
    %1146 = vmatpush.msra.mxu0 %v1101
    %1147 = vmatpush.msra.mxu0 %v1099
    %1148 = vmatpush.msra.mxu0 %v1097
    %1149 = vmatpush.msra.mxu0 %v1095
    %1150 = vmatpush.msra.mxu0 %v1093
    %1151 = vmatpush.msra.mxu0 %v1091
    %1152 = vmatpush.msra.mxu0 %v1089
    %1153 = vmatpush.msra.mxu0 %v1087
    %1154 = vmatmul.f32.gmra.mxu0 %v977
    %v1155 = vpop.f32.mrf.mxu0
    %v1156 = vadd.f32 0.0, %v1155
    %1157 = vdwg.mxu0
    %v1158 = vadd.f32 %v1044, %v1136
    %v1159 = vadd.f32 %v1064, %v1156
    %v1160 = vld [vmem:[%s9] sm:$0x3]
    %v1162 = vperm.slane %v1160, 0
    %v1163 = vperm.slane %v1160, 1
    %v1166 = vadd.f32 %v1158, %v1162
    %v1167 = vadd.f32 %v1159, %v1163
    %v1168 = vxor.u32 %v1166, 2147483648
    %v1169 = vxor.u32 %v1167, 2147483648
    %v1170 = vmul.f32 %v1168, 1.442695
    %v1171 = vpow.pop %v1170
    %v1172 = vmul.f32 %v1169, 1.442695
    %v1173 = vpow.pop %v1172
    %v1174 = vadd.f32 %v1171, 1.0
    %v1175 = vadd.f32 %v1173, 1.0
    %v1176 = vrcp.pop %v1174
    %v1177 = vmul.f32 %v1174, %v1176
    %v1178 = vsub.f32 1.0, %v1177
    %v1179 = vmul.f32 %v1176, %v1178
    %v1180 = vadd.f32 %v1176, %v1179
    %vm1181 = vweird.f32 %v1174
    %vm1182 = vweird.f32 %v1176
    %vm1183 = vmor %vm1181, %vm1182
    %v1184 = vsel %vm1183, %v1176, %v1180
    %v1185 = vand.u32 2147483647, %v1174
    %vm1186 = vcmp.eq.f32.partialorder %v1185, 8.507059e+37
    %v1187 = vand.u32 %v1174, 2147483648
    %v1188 = vor.u32 1.1754944e-38, %v1187
    %v1189 = vsel %vm1186, %v1188, %v1184
    %v1190 = vmul.f32 1.0, %v1189
    %v1191 = vrcp.pop %v1175
    %v1192 = vmul.f32 %v1175, %v1191
    %v1193 = vsub.f32 1.0, %v1192
    %v1194 = vmul.f32 %v1191, %v1193
    %v1195 = vadd.f32 %v1191, %v1194
    %vm1196 = vweird.f32 %v1175
    %vm1197 = vweird.f32 %v1191
    %vm1198 = vmor %vm1196, %vm1197
    %v1199 = vsel %vm1198, %v1191, %v1195
    %v1200 = vand.u32 2147483647, %v1175
    %vm1201 = vcmp.eq.f32.partialorder %v1200, 8.507059e+37
    %v1202 = vand.u32 %v1175, 2147483648
    %v1203 = vor.u32 1.1754944e-38, %v1202
    %v1204 = vsel %vm1201, %v1203, %v1199
    %v1205 = vmul.f32 1.0, %v1204
    %v1206 = vmul.f32 %v1205, %v977
    %v1207 = vld [vmem:[#allocation14] sm:$0xff]
    %v1208 = vld [vmem:[#allocation14 + $0x8] sm:$0xff]
    %v1209 = vld [vmem:[#allocation14 + $0x10] sm:$0xff]
    %v1210 = vld [vmem:[#allocation14 + $0x18] sm:$0xff]
    %v1211 = vld [vmem:[#allocation14 + $0x20] sm:$0xff]
    %v1212 = vld [vmem:[#allocation14 + $0x28] sm:$0xff]
    %v1213 = vld [vmem:[#allocation14 + $0x30] sm:$0xff]
    %v1214 = vld [vmem:[#allocation14 + $0x38] sm:$0xff]
    %v1215 = vld [vmem:[#allocation14 + $0x40] sm:$0xff]
    %v1216 = vld [vmem:[#allocation14 + $0x48] sm:$0xff]
    %v1217 = vld [vmem:[#allocation14 + $0x50] sm:$0xff]
    %v1218 = vld [vmem:[#allocation14 + $0x58] sm:$0xff]
    %v1219 = vld [vmem:[#allocation14 + $0x60] sm:$0xff]
    %v1220 = vld [vmem:[#allocation14 + $0x68] sm:$0xff]
    %v1221 = vld [vmem:[#allocation14 + $0x70] sm:$0xff]
    %v1222 = vld [vmem:[#allocation14 + $0x78] sm:$0xff]
    %1223 = vmatpush.msra.mxu0 %v1222
    %1224 = vmatpush.msra.mxu0 %v1221
    %1225 = vmatpush.msra.mxu0 %v1220
    %1226 = vmatpush.msra.mxu0 %v1219
    %1227 = vmatpush.msra.mxu0 %v1218
    %1228 = vmatpush.msra.mxu0 %v1217
    %1229 = vmatpush.msra.mxu0 %v1216
    %1230 = vmatpush.msra.mxu0 %v1215
    %1231 = vmatpush.msra.mxu0 %v1214
    %1232 = vmatpush.msra.mxu0 %v1213
    %1233 = vmatpush.msra.mxu0 %v1212
    %1234 = vmatpush.msra.mxu0 %v1211
    %1235 = vmatpush.msra.mxu0 %v1210
    %1236 = vmatpush.msra.mxu0 %v1209
    %1237 = vmatpush.msra.mxu0 %v1208
    %1238 = vmatpush.msra.mxu0 %v1207
    %1239 = vmatmul.f32.gmra.mxu0 %v1206
    %v1240 = vpop.f32.mrf.mxu0
    %v1241 = vadd.f32 0.0, %v1240
    %1242 = vdwg.mxu0
    %v1243 = vadd.f32 %v1084, %v1241
    %v1244 = vld [vmem:[%s11] sm:$0x1]
    %v1246 = vperm.slane %v1244, 0
    %v1248 = vadd.f32 %v1243, %v1246
    %v1249 = vtanh.pop %v1248
    %v1250 = vmul.f32 %v1190, %v977
    %v1251 = vsub.f32 1.0, %v1190
    %v1252 = vmul.f32 %v1251, %v1249
    %v1253 = vadd.f32 %v1250, %v1252
    %1254 = vst [vmem:[%s527] sm:$0xff] %v1253
    %1255 = vst [vmem:[#allocation16 + $0x8] sm:$0xff] %v1253
    %v1256 = vld [vmem:[#allocation17] sm:$0xff]
    %v1257 = vld [vmem:[#allocation8] sm:$0xff]
    %v1258 = vld [vmem:[#allocation8 + $0x8] sm:$0xff]
    %v1259 = vld [vmem:[#allocation8 + $0x10] sm:$0xff]
    %v1260 = vld [vmem:[#allocation8 + $0x18] sm:$0xff]
    %v1261 = vld [vmem:[#allocation8 + $0x20] sm:$0xff]
    %v1262 = vld [vmem:[#allocation8 + $0x28] sm:$0xff]
    %v1263 = vld [vmem:[#allocation8 + $0x30] sm:$0xff]
    %v1264 = vld [vmem:[#allocation8 + $0x38] sm:$0xff]
    %v1265 = vld [vmem:[#allocation8 + $0x40] sm:$0xff]
    %v1266 = vld [vmem:[#allocation8 + $0x48] sm:$0xff]
    %v1267 = vld [vmem:[#allocation8 + $0x50] sm:$0xff]
    %v1268 = vld [vmem:[#allocation8 + $0x58] sm:$0xff]
    %v1269 = vld [vmem:[#allocation8 + $0x60] sm:$0xff]
    %v1270 = vld [vmem:[#allocation8 + $0x68] sm:$0xff]
    %v1271 = vld [vmem:[#allocation8 + $0x70] sm:$0xff]
    %v1272 = vld [vmem:[#allocation8 + $0x78] sm:$0xff]
    %v1273 = vld [vmem:[#allocation8 + $0x80] sm:$0xff]
    %v1274 = vld [vmem:[#allocation8 + $0x88] sm:$0xff]
    %v1275 = vld [vmem:[#allocation8 + $0x90] sm:$0xff]
    %v1276 = vld [vmem:[#allocation8 + $0x98] sm:$0xff]
    %v1277 = vld [vmem:[#allocation8 + $0xa0] sm:$0xff]
    %v1278 = vld [vmem:[#allocation8 + $0xa8] sm:$0xff]
    %v1279 = vld [vmem:[#allocation8 + $0xb0] sm:$0xff]
    %v1280 = vld [vmem:[#allocation8 + $0xb8] sm:$0xff]
    %v1281 = vld [vmem:[#allocation8 + $0xc0] sm:$0xff]
    %v1282 = vld [vmem:[#allocation8 + $0xc8] sm:$0xff]
    %v1283 = vld [vmem:[#allocation8 + $0xd0] sm:$0xff]
    %v1284 = vld [vmem:[#allocation8 + $0xd8] sm:$0xff]
    %v1285 = vld [vmem:[#allocation8 + $0xe0] sm:$0xff]
    %v1286 = vld [vmem:[#allocation8 + $0xe8] sm:$0xff]
    %v1287 = vld [vmem:[#allocation8 + $0xf0] sm:$0xff]
    %v1288 = vld [vmem:[#allocation8 + $0xf8] sm:$0xff]
    %1289 = vmatpush.msra.mxu0 %v1287
    %1290 = vmatpush.msra.mxu0 %v1285
    %1291 = vmatpush.msra.mxu0 %v1283
    %1292 = vmatpush.msra.mxu0 %v1281
    %1293 = vmatpush.msra.mxu0 %v1279
    %1294 = vmatpush.msra.mxu0 %v1277
    %1295 = vmatpush.msra.mxu0 %v1275
    %1296 = vmatpush.msra.mxu0 %v1273
    %1297 = vmatpush.msra.mxu0 %v1271
    %1298 = vmatpush.msra.mxu0 %v1269
    %1299 = vmatpush.msra.mxu0 %v1267
    %1300 = vmatpush.msra.mxu0 %v1265
    %1301 = vmatpush.msra.mxu0 %v1263
    %1302 = vmatpush.msra.mxu0 %v1261
    %1303 = vmatpush.msra.mxu0 %v1259
    %1304 = vmatpush.msra.mxu0 %v1257
    %1305 = vmatmul.f32.gmra.mxu0 %v1256
    %v1306 = vpop.f32.mrf.mxu0
    %v1307 = vadd.f32 0.0, %v1306
    %1308 = vdwg.mxu0
    %1309 = vmatpush.msra.mxu0 %v1288
    %1310 = vmatpush.msra.mxu0 %v1286
    %1311 = vmatpush.msra.mxu0 %v1284
    %1312 = vmatpush.msra.mxu0 %v1282
    %1313 = vmatpush.msra.mxu0 %v1280
    %1314 = vmatpush.msra.mxu0 %v1278
    %1315 = vmatpush.msra.mxu0 %v1276
    %1316 = vmatpush.msra.mxu0 %v1274
    %1317 = vmatpush.msra.mxu0 %v1272
    %1318 = vmatpush.msra.mxu0 %v1270
    %1319 = vmatpush.msra.mxu0 %v1268
    %1320 = vmatpush.msra.mxu0 %v1266
    %1321 = vmatpush.msra.mxu0 %v1264
    %1322 = vmatpush.msra.mxu0 %v1262
    %1323 = vmatpush.msra.mxu0 %v1260
    %1324 = vmatpush.msra.mxu0 %v1258
    %1325 = vmatmul.f32.gmra.mxu0 %v1256
    %v1326 = vpop.f32.mrf.mxu0
    %v1327 = vadd.f32 0.0, %v1326
    %1328 = vdwg.mxu0
    %v1329 = vadd.f32 %v258, %v1307
    %v1330 = vadd.f32 %v299, %v1327
    %v1331 = vld [vmem:[%s4] sm:$0x3]
    %v1333 = vperm.slane %v1331, 0
    %v1334 = vperm.slane %v1331, 1
    %v1337 = vadd.f32 %v1329, %v1333
    %v1338 = vadd.f32 %v1330, %v1334
    %v1339 = vxor.u32 %v1337, 2147483648
    %v1340 = vxor.u32 %v1338, 2147483648
    %v1341 = vmul.f32 %v1339, 1.442695
    %v1342 = vpow.pop %v1341
    %v1343 = vmul.f32 %v1340, 1.442695
    %v1344 = vpow.pop %v1343
    %v1345 = vadd.f32 %v1342, 1.0
    %v1346 = vadd.f32 %v1344, 1.0
    %v1347 = vrcp.pop %v1345
    %v1348 = vmul.f32 %v1345, %v1347
    %v1349 = vsub.f32 1.0, %v1348
    %v1350 = vmul.f32 %v1347, %v1349
    %v1351 = vadd.f32 %v1347, %v1350
    %vm1352 = vweird.f32 %v1345
    %vm1353 = vweird.f32 %v1347
    %vm1354 = vmor %vm1352, %vm1353
    %v1355 = vsel %vm1354, %v1347, %v1351
    %v1356 = vand.u32 2147483647, %v1345
    %vm1357 = vcmp.eq.f32.partialorder %v1356, 8.507059e+37
    %v1358 = vand.u32 %v1345, 2147483648
    %v1359 = vor.u32 1.1754944e-38, %v1358
    %v1360 = vsel %vm1357, %v1359, %v1355
    %v1361 = vmul.f32 1.0, %v1360
    %v1362 = vrcp.pop %v1346
    %v1363 = vmul.f32 %v1346, %v1362
    %v1364 = vsub.f32 1.0, %v1363
    %v1365 = vmul.f32 %v1362, %v1364
    %v1366 = vadd.f32 %v1362, %v1365
    %vm1367 = vweird.f32 %v1346
    %vm1368 = vweird.f32 %v1362
    %vm1369 = vmor %vm1367, %vm1368
    %v1370 = vsel %vm1369, %v1362, %v1366
    %v1371 = vand.u32 2147483647, %v1346
    %vm1372 = vcmp.eq.f32.partialorder %v1371, 8.507059e+37
    %v1373 = vand.u32 %v1346, 2147483648
    %v1374 = vor.u32 1.1754944e-38, %v1373
    %v1375 = vsel %vm1372, %v1374, %v1370
    %v1376 = vmul.f32 1.0, %v1375
    %v1377 = vmul.f32 %v1376, %v1256
    %v1378 = vld [vmem:[#allocation10] sm:$0xff]
    %v1379 = vld [vmem:[#allocation10 + $0x8] sm:$0xff]
    %v1380 = vld [vmem:[#allocation10 + $0x10] sm:$0xff]
    %v1381 = vld [vmem:[#allocation10 + $0x18] sm:$0xff]
    %v1382 = vld [vmem:[#allocation10 + $0x20] sm:$0xff]
    %v1383 = vld [vmem:[#allocation10 + $0x28] sm:$0xff]
    %v1384 = vld [vmem:[#allocation10 + $0x30] sm:$0xff]
    %v1385 = vld [vmem:[#allocation10 + $0x38] sm:$0xff]
    %v1386 = vld [vmem:[#allocation10 + $0x40] sm:$0xff]
    %v1387 = vld [vmem:[#allocation10 + $0x48] sm:$0xff]
    %v1388 = vld [vmem:[#allocation10 + $0x50] sm:$0xff]
    %v1389 = vld [vmem:[#allocation10 + $0x58] sm:$0xff]
    %v1390 = vld [vmem:[#allocation10 + $0x60] sm:$0xff]
    %v1391 = vld [vmem:[#allocation10 + $0x68] sm:$0xff]
    %v1392 = vld [vmem:[#allocation10 + $0x70] sm:$0xff]
    %v1393 = vld [vmem:[#allocation10 + $0x78] sm:$0xff]
    %1394 = vmatpush.msra.mxu0 %v1393
    %1395 = vmatpush.msra.mxu0 %v1392
    %1396 = vmatpush.msra.mxu0 %v1391
    %1397 = vmatpush.msra.mxu0 %v1390
    %1398 = vmatpush.msra.mxu0 %v1389
    %1399 = vmatpush.msra.mxu0 %v1388
    %1400 = vmatpush.msra.mxu0 %v1387
    %1401 = vmatpush.msra.mxu0 %v1386
    %1402 = vmatpush.msra.mxu0 %v1385
    %1403 = vmatpush.msra.mxu0 %v1384
    %1404 = vmatpush.msra.mxu0 %v1383
    %1405 = vmatpush.msra.mxu0 %v1382
    %1406 = vmatpush.msra.mxu0 %v1381
    %1407 = vmatpush.msra.mxu0 %v1380
    %1408 = vmatpush.msra.mxu0 %v1379
    %1409 = vmatpush.msra.mxu0 %v1378
    %1410 = vmatmul.f32.gmra.mxu0 %v1377
    %v1411 = vpop.f32.mrf.mxu0
    %v1412 = vadd.f32 0.0, %v1411
    %1413 = vdwg.mxu0
    %v1414 = vadd.f32 %v340, %v1412
    %v1415 = vld [vmem:[%s6] sm:$0x1]
    %v1417 = vperm.slane %v1415, 0
    %v1419 = vadd.f32 %v1414, %v1417
    %v1420 = vtanh.pop %v1419
    %v1421 = vmul.f32 %v1361, %v1256
    %v1422 = vsub.f32 1.0, %v1361
    %v1423 = vmul.f32 %v1422, %v1420
    %v1424 = vadd.f32 %v1421, %v1423
    %1425 = vst [vmem:[#allocation17] sm:$0xff] %v1424
    %v1426 = vld [vmem:[%s527] sm:$0xff]
    %v1427 = vld [vmem:[#allocation11] sm:$0xff]
    %v1428 = vld [vmem:[#allocation11 + $0x8] sm:$0xff]
    %v1429 = vld [vmem:[#allocation11 + $0x10] sm:$0xff]
    %v1430 = vld [vmem:[#allocation11 + $0x18] sm:$0xff]
    %v1431 = vld [vmem:[#allocation11 + $0x20] sm:$0xff]
    %v1432 = vld [vmem:[#allocation11 + $0x28] sm:$0xff]
    %v1433 = vld [vmem:[#allocation11 + $0x30] sm:$0xff]
    %v1434 = vld [vmem:[#allocation11 + $0x38] sm:$0xff]
    %v1435 = vld [vmem:[#allocation11 + $0x40] sm:$0xff]
    %v1436 = vld [vmem:[#allocation11 + $0x48] sm:$0xff]
    %v1437 = vld [vmem:[#allocation11 + $0x50] sm:$0xff]
    %v1438 = vld [vmem:[#allocation11 + $0x58] sm:$0xff]
    %v1439 = vld [vmem:[#allocation11 + $0x60] sm:$0xff]
    %v1440 = vld [vmem:[#allocation11 + $0x68] sm:$0xff]
    %v1441 = vld [vmem:[#allocation11 + $0x70] sm:$0xff]
    %v1442 = vld [vmem:[#allocation11 + $0x78] sm:$0xff]
    %v1443 = vld [vmem:[#allocation11 + $0x80] sm:$0xff]
    %v1444 = vld [vmem:[#allocation11 + $0x88] sm:$0xff]
    %v1445 = vld [vmem:[#allocation11 + $0x90] sm:$0xff]
    %v1446 = vld [vmem:[#allocation11 + $0x98] sm:$0xff]
    %v1447 = vld [vmem:[#allocation11 + $0xa0] sm:$0xff]
    %v1448 = vld [vmem:[#allocation11 + $0xa8] sm:$0xff]
    %v1449 = vld [vmem:[#allocation11 + $0xb0] sm:$0xff]
    %v1450 = vld [vmem:[#allocation11 + $0xb8] sm:$0xff]
    %v1451 = vld [vmem:[#allocation11 + $0xc0] sm:$0xff]
    %v1452 = vld [vmem:[#allocation11 + $0xc8] sm:$0xff]
    %v1453 = vld [vmem:[#allocation11 + $0xd0] sm:$0xff]
    %v1454 = vld [vmem:[#allocation11 + $0xd8] sm:$0xff]
    %v1455 = vld [vmem:[#allocation11 + $0xe0] sm:$0xff]
    %v1456 = vld [vmem:[#allocation11 + $0xe8] sm:$0xff]
    %v1457 = vld [vmem:[#allocation11 + $0xf0] sm:$0xff]
    %v1458 = vld [vmem:[#allocation11 + $0xf8] sm:$0xff]
    %v1459 = vld [vmem:[#allocation11 + $0x100] sm:$0xff]
    %v1460 = vld [vmem:[#allocation11 + $0x108] sm:$0xff]
    %v1461 = vld [vmem:[#allocation11 + $0x110] sm:$0xff]
    %v1462 = vld [vmem:[#allocation11 + $0x118] sm:$0xff]
    %v1463 = vld [vmem:[#allocation11 + $0x120] sm:$0xff]
    %v1464 = vld [vmem:[#allocation11 + $0x128] sm:$0xff]
    %v1465 = vld [vmem:[#allocation11 + $0x130] sm:$0xff]
    %v1466 = vld [vmem:[#allocation11 + $0x138] sm:$0xff]
    %v1467 = vld [vmem:[#allocation11 + $0x140] sm:$0xff]
    %v1468 = vld [vmem:[#allocation11 + $0x148] sm:$0xff]
    %v1469 = vld [vmem:[#allocation11 + $0x150] sm:$0xff]
    %v1470 = vld [vmem:[#allocation11 + $0x158] sm:$0xff]
    %v1471 = vld [vmem:[#allocation11 + $0x160] sm:$0xff]
    %v1472 = vld [vmem:[#allocation11 + $0x168] sm:$0xff]
    %v1473 = vld [vmem:[#allocation11 + $0x170] sm:$0xff]
    %v1474 = vld [vmem:[#allocation11 + $0x178] sm:$0xff]
    %1475 = vmatpush.msra.mxu0 %v1472
    %1476 = vmatpush.msra.mxu0 %v1469
    %1477 = vmatpush.msra.mxu0 %v1466
    %1478 = vmatpush.msra.mxu0 %v1463
    %1479 = vmatpush.msra.mxu0 %v1460
    %1480 = vmatpush.msra.mxu0 %v1457
    %1481 = vmatpush.msra.mxu0 %v1454
    %1482 = vmatpush.msra.mxu0 %v1451
    %1483 = vmatpush.msra.mxu0 %v1448
    %1484 = vmatpush.msra.mxu0 %v1445
    %1485 = vmatpush.msra.mxu0 %v1442
    %1486 = vmatpush.msra.mxu0 %v1439
    %1487 = vmatpush.msra.mxu0 %v1436
    %1488 = vmatpush.msra.mxu0 %v1433
    %1489 = vmatpush.msra.mxu0 %v1430
    %1490 = vmatpush.msra.mxu0 %v1427
    %1491 = vmatmul.f32.gmra.mxu0 %v1424
    %v1492 = vpop.f32.mrf.mxu0
    %v1493 = vadd.f32 0.0, %v1492
    %1494 = vdwg.mxu0
    %1495 = vmatpush.msra.mxu0 %v1473
    %1496 = vmatpush.msra.mxu0 %v1470
    %1497 = vmatpush.msra.mxu0 %v1467
    %1498 = vmatpush.msra.mxu0 %v1464
    %1499 = vmatpush.msra.mxu0 %v1461
    %1500 = vmatpush.msra.mxu0 %v1458
    %1501 = vmatpush.msra.mxu0 %v1455
    %1502 = vmatpush.msra.mxu0 %v1452
    %1503 = vmatpush.msra.mxu0 %v1449
    %1504 = vmatpush.msra.mxu0 %v1446
    %1505 = vmatpush.msra.mxu0 %v1443
    %1506 = vmatpush.msra.mxu0 %v1440
    %1507 = vmatpush.msra.mxu0 %v1437
    %1508 = vmatpush.msra.mxu0 %v1434
    %1509 = vmatpush.msra.mxu0 %v1431
    %1510 = vmatpush.msra.mxu0 %v1428
    %1511 = vmatmul.f32.gmra.mxu0 %v1424
    %v1512 = vpop.f32.mrf.mxu0
    %v1513 = vadd.f32 0.0, %v1512
    %1514 = vdwg.mxu0
    %1515 = vmatpush.msra.mxu0 %v1474
    %1516 = vmatpush.msra.mxu0 %v1471
    %1517 = vmatpush.msra.mxu0 %v1468
    %1518 = vmatpush.msra.mxu0 %v1465
    %1519 = vmatpush.msra.mxu0 %v1462
    %1520 = vmatpush.msra.mxu0 %v1459
    %1521 = vmatpush.msra.mxu0 %v1456
    %1522 = vmatpush.msra.mxu0 %v1453
    %1523 = vmatpush.msra.mxu0 %v1450
    %1524 = vmatpush.msra.mxu0 %v1447
    %1525 = vmatpush.msra.mxu0 %v1444
    %1526 = vmatpush.msra.mxu0 %v1441
    %1527 = vmatpush.msra.mxu0 %v1438
    %1528 = vmatpush.msra.mxu0 %v1435
    %1529 = vmatpush.msra.mxu0 %v1432
    %1530 = vmatpush.msra.mxu0 %v1429
    %1531 = vmatmul.f32.gmra.mxu0 %v1424
    %v1532 = vpop.f32.mrf.mxu0
    %v1533 = vadd.f32 0.0, %v1532
    %1534 = vdwg.mxu0
    %v1535 = vld [vmem:[#allocation13] sm:$0xff]
    %v1536 = vld [vmem:[#allocation13 + $0x8] sm:$0xff]
    %v1537 = vld [vmem:[#allocation13 + $0x10] sm:$0xff]
    %v1538 = vld [vmem:[#allocation13 + $0x18] sm:$0xff]
    %v1539 = vld [vmem:[#allocation13 + $0x20] sm:$0xff]
    %v1540 = vld [vmem:[#allocation13 + $0x28] sm:$0xff]
    %v1541 = vld [vmem:[#allocation13 + $0x30] sm:$0xff]
    %v1542 = vld [vmem:[#allocation13 + $0x38] sm:$0xff]
    %v1543 = vld [vmem:[#allocation13 + $0x40] sm:$0xff]
    %v1544 = vld [vmem:[#allocation13 + $0x48] sm:$0xff]
    %v1545 = vld [vmem:[#allocation13 + $0x50] sm:$0xff]
    %v1546 = vld [vmem:[#allocation13 + $0x58] sm:$0xff]
    %v1547 = vld [vmem:[#allocation13 + $0x60] sm:$0xff]
    %v1548 = vld [vmem:[#allocation13 + $0x68] sm:$0xff]
    %v1549 = vld [vmem:[#allocation13 + $0x70] sm:$0xff]
    %v1550 = vld [vmem:[#allocation13 + $0x78] sm:$0xff]
    %v1551 = vld [vmem:[#allocation13 + $0x80] sm:$0xff]
    %v1552 = vld [vmem:[#allocation13 + $0x88] sm:$0xff]
    %v1553 = vld [vmem:[#allocation13 + $0x90] sm:$0xff]
    %v1554 = vld [vmem:[#allocation13 + $0x98] sm:$0xff]
    %v1555 = vld [vmem:[#allocation13 + $0xa0] sm:$0xff]
    %v1556 = vld [vmem:[#allocation13 + $0xa8] sm:$0xff]
    %v1557 = vld [vmem:[#allocation13 + $0xb0] sm:$0xff]
    %v1558 = vld [vmem:[#allocation13 + $0xb8] sm:$0xff]
    %v1559 = vld [vmem:[#allocation13 + $0xc0] sm:$0xff]
    %v1560 = vld [vmem:[#allocation13 + $0xc8] sm:$0xff]
    %v1561 = vld [vmem:[#allocation13 + $0xd0] sm:$0xff]
    %v1562 = vld [vmem:[#allocation13 + $0xd8] sm:$0xff]
    %v1563 = vld [vmem:[#allocation13 + $0xe0] sm:$0xff]
    %v1564 = vld [vmem:[#allocation13 + $0xe8] sm:$0xff]
    %v1565 = vld [vmem:[#allocation13 + $0xf0] sm:$0xff]
    %v1566 = vld [vmem:[#allocation13 + $0xf8] sm:$0xff]
    %1567 = vmatpush.msra.mxu0 %v1565
    %1568 = vmatpush.msra.mxu0 %v1563
    %1569 = vmatpush.msra.mxu0 %v1561
    %1570 = vmatpush.msra.mxu0 %v1559
    %1571 = vmatpush.msra.mxu0 %v1557
    %1572 = vmatpush.msra.mxu0 %v1555
    %1573 = vmatpush.msra.mxu0 %v1553
    %1574 = vmatpush.msra.mxu0 %v1551
    %1575 = vmatpush.msra.mxu0 %v1549
    %1576 = vmatpush.msra.mxu0 %v1547
    %1577 = vmatpush.msra.mxu0 %v1545
    %1578 = vmatpush.msra.mxu0 %v1543
    %1579 = vmatpush.msra.mxu0 %v1541
    %1580 = vmatpush.msra.mxu0 %v1539
    %1581 = vmatpush.msra.mxu0 %v1537
    %1582 = vmatpush.msra.mxu0 %v1535
    %1583 = vmatmul.f32.gmra.mxu0 %v1426
    %v1584 = vpop.f32.mrf.mxu0
    %v1585 = vadd.f32 0.0, %v1584
    %1586 = vdwg.mxu0
    %1587 = vmatpush.msra.mxu0 %v1566
    %1588 = vmatpush.msra.mxu0 %v1564
    %1589 = vmatpush.msra.mxu0 %v1562
    %1590 = vmatpush.msra.mxu0 %v1560
    %1591 = vmatpush.msra.mxu0 %v1558
    %1592 = vmatpush.msra.mxu0 %v1556
    %1593 = vmatpush.msra.mxu0 %v1554
    %1594 = vmatpush.msra.mxu0 %v1552
    %1595 = vmatpush.msra.mxu0 %v1550
    %1596 = vmatpush.msra.mxu0 %v1548
    %1597 = vmatpush.msra.mxu0 %v1546
    %1598 = vmatpush.msra.mxu0 %v1544
    %1599 = vmatpush.msra.mxu0 %v1542
    %1600 = vmatpush.msra.mxu0 %v1540
    %1601 = vmatpush.msra.mxu0 %v1538
    %1602 = vmatpush.msra.mxu0 %v1536
    %1603 = vmatmul.f32.gmra.mxu0 %v1426
    %v1604 = vpop.f32.mrf.mxu0
    %v1605 = vadd.f32 0.0, %v1604
    %1606 = vdwg.mxu0
    %v1607 = vadd.f32 %v1493, %v1585
    %v1608 = vadd.f32 %v1513, %v1605
    %v1609 = vld [vmem:[%s9] sm:$0x3]
    %v1611 = vperm.slane %v1609, 0
    %v1612 = vperm.slane %v1609, 1
    %v1615 = vadd.f32 %v1607, %v1611
    %v1616 = vadd.f32 %v1608, %v1612
    %v1617 = vxor.u32 %v1615, 2147483648
    %v1618 = vxor.u32 %v1616, 2147483648
    %v1619 = vmul.f32 %v1617, 1.442695
    %v1620 = vpow.pop %v1619
    %v1621 = vmul.f32 %v1618, 1.442695
    %v1622 = vpow.pop %v1621
    %v1623 = vadd.f32 %v1620, 1.0
    %v1624 = vadd.f32 %v1622, 1.0
    %v1625 = vrcp.pop %v1623
    %v1626 = vmul.f32 %v1623, %v1625
    %v1627 = vsub.f32 1.0, %v1626
    %v1628 = vmul.f32 %v1625, %v1627
    %v1629 = vadd.f32 %v1625, %v1628
    %vm1630 = vweird.f32 %v1623
    %vm1631 = vweird.f32 %v1625
    %vm1632 = vmor %vm1630, %vm1631
    %v1633 = vsel %vm1632, %v1625, %v1629
    %v1634 = vand.u32 2147483647, %v1623
    %vm1635 = vcmp.eq.f32.partialorder %v1634, 8.507059e+37
    %v1636 = vand.u32 %v1623, 2147483648
    %v1637 = vor.u32 1.1754944e-38, %v1636
    %v1638 = vsel %vm1635, %v1637, %v1633
    %v1639 = vmul.f32 1.0, %v1638
    %v1640 = vrcp.pop %v1624
    %v1641 = vmul.f32 %v1624, %v1640
    %v1642 = vsub.f32 1.0, %v1641
    %v1643 = vmul.f32 %v1640, %v1642
    %v1644 = vadd.f32 %v1640, %v1643
    %vm1645 = vweird.f32 %v1624
    %vm1646 = vweird.f32 %v1640
    %vm1647 = vmor %vm1645, %vm1646
    %v1648 = vsel %vm1647, %v1640, %v1644
    %v1649 = vand.u32 2147483647, %v1624
    %vm1650 = vcmp.eq.f32.partialorder %v1649, 8.507059e+37
    %v1651 = vand.u32 %v1624, 2147483648
    %v1652 = vor.u32 1.1754944e-38, %v1651
    %v1653 = vsel %vm1650, %v1652, %v1648
    %v1654 = vmul.f32 1.0, %v1653
    %v1655 = vmul.f32 %v1654, %v1426
    %v1656 = vld [vmem:[#allocation14] sm:$0xff]
    %v1657 = vld [vmem:[#allocation14 + $0x8] sm:$0xff]
    %v1658 = vld [vmem:[#allocation14 + $0x10] sm:$0xff]
    %v1659 = vld [vmem:[#allocation14 + $0x18] sm:$0xff]
    %v1660 = vld [vmem:[#allocation14 + $0x20] sm:$0xff]
    %v1661 = vld [vmem:[#allocation14 + $0x28] sm:$0xff]
    %v1662 = vld [vmem:[#allocation14 + $0x30] sm:$0xff]
    %v1663 = vld [vmem:[#allocation14 + $0x38] sm:$0xff]
    %v1664 = vld [vmem:[#allocation14 + $0x40] sm:$0xff]
    %v1665 = vld [vmem:[#allocation14 + $0x48] sm:$0xff]
    %v1666 = vld [vmem:[#allocation14 + $0x50] sm:$0xff]
    %v1667 = vld [vmem:[#allocation14 + $0x58] sm:$0xff]
    %v1668 = vld [vmem:[#allocation14 + $0x60] sm:$0xff]
    %v1669 = vld [vmem:[#allocation14 + $0x68] sm:$0xff]
    %v1670 = vld [vmem:[#allocation14 + $0x70] sm:$0xff]
    %v1671 = vld [vmem:[#allocation14 + $0x78] sm:$0xff]
    %1672 = vmatpush.msra.mxu0 %v1671
    %1673 = vmatpush.msra.mxu0 %v1670
    %1674 = vmatpush.msra.mxu0 %v1669
    %1675 = vmatpush.msra.mxu0 %v1668
    %1676 = vmatpush.msra.mxu0 %v1667
    %1677 = vmatpush.msra.mxu0 %v1666
    %1678 = vmatpush.msra.mxu0 %v1665
    %1679 = vmatpush.msra.mxu0 %v1664
    %1680 = vmatpush.msra.mxu0 %v1663
    %1681 = vmatpush.msra.mxu0 %v1662
    %1682 = vmatpush.msra.mxu0 %v1661
    %1683 = vmatpush.msra.mxu0 %v1660
    %1684 = vmatpush.msra.mxu0 %v1659
    %1685 = vmatpush.msra.mxu0 %v1658
    %1686 = vmatpush.msra.mxu0 %v1657
    %1687 = vmatpush.msra.mxu0 %v1656
    %1688 = vmatmul.f32.gmra.mxu0 %v1655
    %v1689 = vpop.f32.mrf.mxu0
    %v1690 = vadd.f32 0.0, %v1689
    %1691 = vdwg.mxu0
    %v1692 = vadd.f32 %v1533, %v1690
    %v1693 = vld [vmem:[%s11] sm:$0x1]
    %v1695 = vperm.slane %v1693, 0
    %v1697 = vadd.f32 %v1692, %v1695
    %v1698 = vtanh.pop %v1697
    %v1699 = vmul.f32 %v1639, %v1426
    %v1700 = vsub.f32 1.0, %v1639
    %v1701 = vmul.f32 %v1700, %v1698
    %v1702 = vadd.f32 %v1699, %v1701
    %1703 = vst [vmem:[%s527] sm:$0xff] %v1702
    %1704 = vst [vmem:[#allocation16 + $0x10] sm:$0xff] %v1702
    %v1705 = vld [vmem:[#allocation17] sm:$0xff]
    %v1706 = vld [vmem:[#allocation8] sm:$0xff]
    %v1707 = vld [vmem:[#allocation8 + $0x8] sm:$0xff]
    %v1708 = vld [vmem:[#allocation8 + $0x10] sm:$0xff]
    %v1709 = vld [vmem:[#allocation8 + $0x18] sm:$0xff]
    %v1710 = vld [vmem:[#allocation8 + $0x20] sm:$0xff]
    %v1711 = vld [vmem:[#allocation8 + $0x28] sm:$0xff]
    %v1712 = vld [vmem:[#allocation8 + $0x30] sm:$0xff]
    %v1713 = vld [vmem:[#allocation8 + $0x38] sm:$0xff]
    %v1714 = vld [vmem:[#allocation8 + $0x40] sm:$0xff]
    %v1715 = vld [vmem:[#allocation8 + $0x48] sm:$0xff]
    %v1716 = vld [vmem:[#allocation8 + $0x50] sm:$0xff]
    %v1717 = vld [vmem:[#allocation8 + $0x58] sm:$0xff]
    %v1718 = vld [vmem:[#allocation8 + $0x60] sm:$0xff]
    %v1719 = vld [vmem:[#allocation8 + $0x68] sm:$0xff]
    %v1720 = vld [vmem:[#allocation8 + $0x70] sm:$0xff]
    %v1721 = vld [vmem:[#allocation8 + $0x78] sm:$0xff]
    %v1722 = vld [vmem:[#allocation8 + $0x80] sm:$0xff]
    %v1723 = vld [vmem:[#allocation8 + $0x88] sm:$0xff]
    %v1724 = vld [vmem:[#allocation8 + $0x90] sm:$0xff]
    %v1725 = vld [vmem:[#allocation8 + $0x98] sm:$0xff]
    %v1726 = vld [vmem:[#allocation8 + $0xa0] sm:$0xff]
    %v1727 = vld [vmem:[#allocation8 + $0xa8] sm:$0xff]
    %v1728 = vld [vmem:[#allocation8 + $0xb0] sm:$0xff]
    %v1729 = vld [vmem:[#allocation8 + $0xb8] sm:$0xff]
    %v1730 = vld [vmem:[#allocation8 + $0xc0] sm:$0xff]
    %v1731 = vld [vmem:[#allocation8 + $0xc8] sm:$0xff]
    %v1732 = vld [vmem:[#allocation8 + $0xd0] sm:$0xff]
    %v1733 = vld [vmem:[#allocation8 + $0xd8] sm:$0xff]
    %v1734 = vld [vmem:[#allocation8 + $0xe0] sm:$0xff]
    %v1735 = vld [vmem:[#allocation8 + $0xe8] sm:$0xff]
    %v1736 = vld [vmem:[#allocation8 + $0xf0] sm:$0xff]
    %v1737 = vld [vmem:[#allocation8 + $0xf8] sm:$0xff]
    %1738 = vmatpush.msra.mxu0 %v1736
    %1739 = vmatpush.msra.mxu0 %v1734
    %1740 = vmatpush.msra.mxu0 %v1732
    %1741 = vmatpush.msra.mxu0 %v1730
    %1742 = vmatpush.msra.mxu0 %v1728
    %1743 = vmatpush.msra.mxu0 %v1726
    %1744 = vmatpush.msra.mxu0 %v1724
    %1745 = vmatpush.msra.mxu0 %v1722
    %1746 = vmatpush.msra.mxu0 %v1720
    %1747 = vmatpush.msra.mxu0 %v1718
    %1748 = vmatpush.msra.mxu0 %v1716
    %1749 = vmatpush.msra.mxu0 %v1714
    %1750 = vmatpush.msra.mxu0 %v1712
    %1751 = vmatpush.msra.mxu0 %v1710
    %1752 = vmatpush.msra.mxu0 %v1708
    %1753 = vmatpush.msra.mxu0 %v1706
    %1754 = vmatmul.f32.gmra.mxu0 %v1705
    %v1755 = vpop.f32.mrf.mxu0
    %v1756 = vadd.f32 0.0, %v1755
    %1757 = vdwg.mxu0
    %1758 = vmatpush.msra.mxu0 %v1737
    %1759 = vmatpush.msra.mxu0 %v1735
    %1760 = vmatpush.msra.mxu0 %v1733
    %1761 = vmatpush.msra.mxu0 %v1731
    %1762 = vmatpush.msra.mxu0 %v1729
    %1763 = vmatpush.msra.mxu0 %v1727
    %1764 = vmatpush.msra.mxu0 %v1725
    %1765 = vmatpush.msra.mxu0 %v1723
    %1766 = vmatpush.msra.mxu0 %v1721
    %1767 = vmatpush.msra.mxu0 %v1719
    %1768 = vmatpush.msra.mxu0 %v1717
    %1769 = vmatpush.msra.mxu0 %v1715
    %1770 = vmatpush.msra.mxu0 %v1713
    %1771 = vmatpush.msra.mxu0 %v1711
    %1772 = vmatpush.msra.mxu0 %v1709
    %1773 = vmatpush.msra.mxu0 %v1707
    %1774 = vmatmul.f32.gmra.mxu0 %v1705
    %v1775 = vpop.f32.mrf.mxu0
    %v1776 = vadd.f32 0.0, %v1775
    %1777 = vdwg.mxu0
    %v1778 = vadd.f32 %v261, %v1756
    %v1779 = vadd.f32 %v302, %v1776
    %v1780 = vld [vmem:[%s4] sm:$0x3]
    %v1782 = vperm.slane %v1780, 0
    %v1783 = vperm.slane %v1780, 1
    %v1786 = vadd.f32 %v1778, %v1782
    %v1787 = vadd.f32 %v1779, %v1783
    %v1788 = vxor.u32 %v1786, 2147483648
    %v1789 = vxor.u32 %v1787, 2147483648
    %v1790 = vmul.f32 %v1788, 1.442695
    %v1791 = vpow.pop %v1790
    %v1792 = vmul.f32 %v1789, 1.442695
    %v1793 = vpow.pop %v1792
    %v1794 = vadd.f32 %v1791, 1.0
    %v1795 = vadd.f32 %v1793, 1.0
    %v1796 = vrcp.pop %v1794
    %v1797 = vmul.f32 %v1794, %v1796
    %v1798 = vsub.f32 1.0, %v1797
    %v1799 = vmul.f32 %v1796, %v1798
    %v1800 = vadd.f32 %v1796, %v1799
    %vm1801 = vweird.f32 %v1794
    %vm1802 = vweird.f32 %v1796
    %vm1803 = vmor %vm1801, %vm1802
    %v1804 = vsel %vm1803, %v1796, %v1800
    %v1805 = vand.u32 2147483647, %v1794
    %vm1806 = vcmp.eq.f32.partialorder %v1805, 8.507059e+37
    %v1807 = vand.u32 %v1794, 2147483648
    %v1808 = vor.u32 1.1754944e-38, %v1807
    %v1809 = vsel %vm1806, %v1808, %v1804
    %v1810 = vmul.f32 1.0, %v1809
    %v1811 = vrcp.pop %v1795
    %v1812 = vmul.f32 %v1795, %v1811
    %v1813 = vsub.f32 1.0, %v1812
    %v1814 = vmul.f32 %v1811, %v1813
    %v1815 = vadd.f32 %v1811, %v1814
    %vm1816 = vweird.f32 %v1795
    %vm1817 = vweird.f32 %v1811
    %vm1818 = vmor %vm1816, %vm1817
    %v1819 = vsel %vm1818, %v1811, %v1815
    %v1820 = vand.u32 2147483647, %v1795
    %vm1821 = vcmp.eq.f32.partialorder %v1820, 8.507059e+37
    %v1822 = vand.u32 %v1795, 2147483648
    %v1823 = vor.u32 1.1754944e-38, %v1822
    %v1824 = vsel %vm1821, %v1823, %v1819
    %v1825 = vmul.f32 1.0, %v1824
    %v1826 = vmul.f32 %v1825, %v1705
    %v1827 = vld [vmem:[#allocation10] sm:$0xff]
    %v1828 = vld [vmem:[#allocation10 + $0x8] sm:$0xff]
    %v1829 = vld [vmem:[#allocation10 + $0x10] sm:$0xff]
    %v1830 = vld [vmem:[#allocation10 + $0x18] sm:$0xff]
    %v1831 = vld [vmem:[#allocation10 + $0x20] sm:$0xff]
    %v1832 = vld [vmem:[#allocation10 + $0x28] sm:$0xff]
    %v1833 = vld [vmem:[#allocation10 + $0x30] sm:$0xff]
    %v1834 = vld [vmem:[#allocation10 + $0x38] sm:$0xff]
    %v1835 = vld [vmem:[#allocation10 + $0x40] sm:$0xff]
    %v1836 = vld [vmem:[#allocation10 + $0x48] sm:$0xff]
    %v1837 = vld [vmem:[#allocation10 + $0x50] sm:$0xff]
    %v1838 = vld [vmem:[#allocation10 + $0x58] sm:$0xff]
    %v1839 = vld [vmem:[#allocation10 + $0x60] sm:$0xff]
    %v1840 = vld [vmem:[#allocation10 + $0x68] sm:$0xff]
    %v1841 = vld [vmem:[#allocation10 + $0x70] sm:$0xff]
    %v1842 = vld [vmem:[#allocation10 + $0x78] sm:$0xff]
    %1843 = vmatpush.msra.mxu0 %v1842
    %1844 = vmatpush.msra.mxu0 %v1841
    %1845 = vmatpush.msra.mxu0 %v1840
    %1846 = vmatpush.msra.mxu0 %v1839
    %1847 = vmatpush.msra.mxu0 %v1838
    %1848 = vmatpush.msra.mxu0 %v1837
    %1849 = vmatpush.msra.mxu0 %v1836
    %1850 = vmatpush.msra.mxu0 %v1835
    %1851 = vmatpush.msra.mxu0 %v1834
    %1852 = vmatpush.msra.mxu0 %v1833
    %1853 = vmatpush.msra.mxu0 %v1832
    %1854 = vmatpush.msra.mxu0 %v1831
    %1855 = vmatpush.msra.mxu0 %v1830
    %1856 = vmatpush.msra.mxu0 %v1829
    %1857 = vmatpush.msra.mxu0 %v1828
    %1858 = vmatpush.msra.mxu0 %v1827
    %1859 = vmatmul.f32.gmra.mxu0 %v1826
    %v1860 = vpop.f32.mrf.mxu0
    %v1861 = vadd.f32 0.0, %v1860
    %1862 = vdwg.mxu0
    %v1863 = vadd.f32 %v343, %v1861
    %v1864 = vld [vmem:[%s6] sm:$0x1]
    %v1866 = vperm.slane %v1864, 0
    %v1868 = vadd.f32 %v1863, %v1866
    %v1869 = vtanh.pop %v1868
    %v1870 = vmul.f32 %v1810, %v1705
    %v1871 = vsub.f32 1.0, %v1810
    %v1872 = vmul.f32 %v1871, %v1869
    %v1873 = vadd.f32 %v1870, %v1872
    %1874 = vst [vmem:[#allocation17] sm:$0xff] %v1873
    %v1875 = vld [vmem:[%s527] sm:$0xff]
    %v1876 = vld [vmem:[#allocation11] sm:$0xff]
    %v1877 = vld [vmem:[#allocation11 + $0x8] sm:$0xff]
    %v1878 = vld [vmem:[#allocation11 + $0x10] sm:$0xff]
    %v1879 = vld [vmem:[#allocation11 + $0x18] sm:$0xff]
    %v1880 = vld [vmem:[#allocation11 + $0x20] sm:$0xff]
    %v1881 = vld [vmem:[#allocation11 + $0x28] sm:$0xff]
    %v1882 = vld [vmem:[#allocation11 + $0x30] sm:$0xff]
    %v1883 = vld [vmem:[#allocation11 + $0x38] sm:$0xff]
    %v1884 = vld [vmem:[#allocation11 + $0x40] sm:$0xff]
    %v1885 = vld [vmem:[#allocation11 + $0x48] sm:$0xff]
    %v1886 = vld [vmem:[#allocation11 + $0x50] sm:$0xff]
    %v1887 = vld [vmem:[#allocation11 + $0x58] sm:$0xff]
    %v1888 = vld [vmem:[#allocation11 + $0x60] sm:$0xff]
    %v1889 = vld [vmem:[#allocation11 + $0x68] sm:$0xff]
    %v1890 = vld [vmem:[#allocation11 + $0x70] sm:$0xff]
    %v1891 = vld [vmem:[#allocation11 + $0x78] sm:$0xff]
    %v1892 = vld [vmem:[#allocation11 + $0x80] sm:$0xff]
    %v1893 = vld [vmem:[#allocation11 + $0x88] sm:$0xff]
    %v1894 = vld [vmem:[#allocation11 + $0x90] sm:$0xff]
    %v1895 = vld [vmem:[#allocation11 + $0x98] sm:$0xff]
    %v1896 = vld [vmem:[#allocation11 + $0xa0] sm:$0xff]
    %v1897 = vld [vmem:[#allocation11 + $0xa8] sm:$0xff]
    %v1898 = vld [vmem:[#allocation11 + $0xb0] sm:$0xff]
    %v1899 = vld [vmem:[#allocation11 + $0xb8] sm:$0xff]
    %v1900 = vld [vmem:[#allocation11 + $0xc0] sm:$0xff]
    %v1901 = vld [vmem:[#allocation11 + $0xc8] sm:$0xff]
    %v1902 = vld [vmem:[#allocation11 + $0xd0] sm:$0xff]
    %v1903 = vld [vmem:[#allocation11 + $0xd8] sm:$0xff]
    %v1904 = vld [vmem:[#allocation11 + $0xe0] sm:$0xff]
    %v1905 = vld [vmem:[#allocation11 + $0xe8] sm:$0xff]
    %v1906 = vld [vmem:[#allocation11 + $0xf0] sm:$0xff]
    %v1907 = vld [vmem:[#allocation11 + $0xf8] sm:$0xff]
    %v1908 = vld [vmem:[#allocation11 + $0x100] sm:$0xff]
    %v1909 = vld [vmem:[#allocation11 + $0x108] sm:$0xff]
    %v1910 = vld [vmem:[#allocation11 + $0x110] sm:$0xff]
    %v1911 = vld [vmem:[#allocation11 + $0x118] sm:$0xff]
    %v1912 = vld [vmem:[#allocation11 + $0x120] sm:$0xff]
    %v1913 = vld [vmem:[#allocation11 + $0x128] sm:$0xff]
    %v1914 = vld [vmem:[#allocation11 + $0x130] sm:$0xff]
    %v1915 = vld [vmem:[#allocation11 + $0x138] sm:$0xff]
    %v1916 = vld [vmem:[#allocation11 + $0x140] sm:$0xff]
    %v1917 = vld [vmem:[#allocation11 + $0x148] sm:$0xff]
    %v1918 = vld [vmem:[#allocation11 + $0x150] sm:$0xff]
    %v1919 = vld [vmem:[#allocation11 + $0x158] sm:$0xff]
    %v1920 = vld [vmem:[#allocation11 + $0x160] sm:$0xff]
    %v1921 = vld [vmem:[#allocation11 + $0x168] sm:$0xff]
    %v1922 = vld [vmem:[#allocation11 + $0x170] sm:$0xff]
    %v1923 = vld [vmem:[#allocation11 + $0x178] sm:$0xff]
    %1924 = vmatpush.msra.mxu0 %v1921
    %1925 = vmatpush.msra.mxu0 %v1918
    %1926 = vmatpush.msra.mxu0 %v1915
    %1927 = vmatpush.msra.mxu0 %v1912
    %1928 = vmatpush.msra.mxu0 %v1909
    %1929 = vmatpush.msra.mxu0 %v1906
    %1930 = vmatpush.msra.mxu0 %v1903
    %1931 = vmatpush.msra.mxu0 %v1900
    %1932 = vmatpush.msra.mxu0 %v1897
    %1933 = vmatpush.msra.mxu0 %v1894
    %1934 = vmatpush.msra.mxu0 %v1891
    %1935 = vmatpush.msra.mxu0 %v1888
    %1936 = vmatpush.msra.mxu0 %v1885
    %1937 = vmatpush.msra.mxu0 %v1882
    %1938 = vmatpush.msra.mxu0 %v1879
    %1939 = vmatpush.msra.mxu0 %v1876
    %1940 = vmatmul.f32.gmra.mxu0 %v1873
    %v1941 = vpop.f32.mrf.mxu0
    %v1942 = vadd.f32 0.0, %v1941
    %1943 = vdwg.mxu0
    %1944 = vmatpush.msra.mxu0 %v1922
    %1945 = vmatpush.msra.mxu0 %v1919
    %1946 = vmatpush.msra.mxu0 %v1916
    %1947 = vmatpush.msra.mxu0 %v1913
    %1948 = vmatpush.msra.mxu0 %v1910
    %1949 = vmatpush.msra.mxu0 %v1907
    %1950 = vmatpush.msra.mxu0 %v1904
    %1951 = vmatpush.msra.mxu0 %v1901
    %1952 = vmatpush.msra.mxu0 %v1898
    %1953 = vmatpush.msra.mxu0 %v1895
    %1954 = vmatpush.msra.mxu0 %v1892
    %1955 = vmatpush.msra.mxu0 %v1889
    %1956 = vmatpush.msra.mxu0 %v1886
    %1957 = vmatpush.msra.mxu0 %v1883
    %1958 = vmatpush.msra.mxu0 %v1880
    %1959 = vmatpush.msra.mxu0 %v1877
    %1960 = vmatmul.f32.gmra.mxu0 %v1873
    %v1961 = vpop.f32.mrf.mxu0
    %v1962 = vadd.f32 0.0, %v1961
    %1963 = vdwg.mxu0
    %1964 = vmatpush.msra.mxu0 %v1923
    %1965 = vmatpush.msra.mxu0 %v1920
    %1966 = vmatpush.msra.mxu0 %v1917
    %1967 = vmatpush.msra.mxu0 %v1914
    %1968 = vmatpush.msra.mxu0 %v1911
    %1969 = vmatpush.msra.mxu0 %v1908
    %1970 = vmatpush.msra.mxu0 %v1905
    %1971 = vmatpush.msra.mxu0 %v1902
    %1972 = vmatpush.msra.mxu0 %v1899
    %1973 = vmatpush.msra.mxu0 %v1896
    %1974 = vmatpush.msra.mxu0 %v1893
    %1975 = vmatpush.msra.mxu0 %v1890
    %1976 = vmatpush.msra.mxu0 %v1887
    %1977 = vmatpush.msra.mxu0 %v1884
    %1978 = vmatpush.msra.mxu0 %v1881
    %1979 = vmatpush.msra.mxu0 %v1878
    %1980 = vmatmul.f32.gmra.mxu0 %v1873
    %v1981 = vpop.f32.mrf.mxu0
    %v1982 = vadd.f32 0.0, %v1981
    %1983 = vdwg.mxu0
    %v1984 = vld [vmem:[#allocation13] sm:$0xff]
    %v1985 = vld [vmem:[#allocation13 + $0x8] sm:$0xff]
    %v1986 = vld [vmem:[#allocation13 + $0x10] sm:$0xff]
    %v1987 = vld [vmem:[#allocation13 + $0x18] sm:$0xff]
    %v1988 = vld [vmem:[#allocation13 + $0x20] sm:$0xff]
    %v1989 = vld [vmem:[#allocation13 + $0x28] sm:$0xff]
    %v1990 = vld [vmem:[#allocation13 + $0x30] sm:$0xff]
    %v1991 = vld [vmem:[#allocation13 + $0x38] sm:$0xff]
    %v1992 = vld [vmem:[#allocation13 + $0x40] sm:$0xff]
    %v1993 = vld [vmem:[#allocation13 + $0x48] sm:$0xff]
    %v1994 = vld [vmem:[#allocation13 + $0x50] sm:$0xff]
    %v1995 = vld [vmem:[#allocation13 + $0x58] sm:$0xff]
    %v1996 = vld [vmem:[#allocation13 + $0x60] sm:$0xff]
    %v1997 = vld [vmem:[#allocation13 + $0x68] sm:$0xff]
    %v1998 = vld [vmem:[#allocation13 + $0x70] sm:$0xff]
    %v1999 = vld [vmem:[#allocation13 + $0x78] sm:$0xff]
    %v2000 = vld [vmem:[#allocation13 + $0x80] sm:$0xff]
    %v2001 = vld [vmem:[#allocation13 + $0x88] sm:$0xff]
    %v2002 = vld [vmem:[#allocation13 + $0x90] sm:$0xff]
    %v2003 = vld [vmem:[#allocation13 + $0x98] sm:$0xff]
    %v2004 = vld [vmem:[#allocation13 + $0xa0] sm:$0xff]
    %v2005 = vld [vmem:[#allocation13 + $0xa8] sm:$0xff]
    %v2006 = vld [vmem:[#allocation13 + $0xb0] sm:$0xff]
    %v2007 = vld [vmem:[#allocation13 + $0xb8] sm:$0xff]
    %v2008 = vld [vmem:[#allocation13 + $0xc0] sm:$0xff]
    %v2009 = vld [vmem:[#allocation13 + $0xc8] sm:$0xff]
    %v2010 = vld [vmem:[#allocation13 + $0xd0] sm:$0xff]
    %v2011 = vld [vmem:[#allocation13 + $0xd8] sm:$0xff]
    %v2012 = vld [vmem:[#allocation13 + $0xe0] sm:$0xff]
    %v2013 = vld [vmem:[#allocation13 + $0xe8] sm:$0xff]
    %v2014 = vld [vmem:[#allocation13 + $0xf0] sm:$0xff]
    %v2015 = vld [vmem:[#allocation13 + $0xf8] sm:$0xff]
    %2016 = vmatpush.msra.mxu0 %v2014
    %2017 = vmatpush.msra.mxu0 %v2012
    %2018 = vmatpush.msra.mxu0 %v2010
    %2019 = vmatpush.msra.mxu0 %v2008
    %2020 = vmatpush.msra.mxu0 %v2006
    %2021 = vmatpush.msra.mxu0 %v2004
    %2022 = vmatpush.msra.mxu0 %v2002
    %2023 = vmatpush.msra.mxu0 %v2000
    %2024 = vmatpush.msra.mxu0 %v1998
    %2025 = vmatpush.msra.mxu0 %v1996
    %2026 = vmatpush.msra.mxu0 %v1994
    %2027 = vmatpush.msra.mxu0 %v1992
    %2028 = vmatpush.msra.mxu0 %v1990
    %2029 = vmatpush.msra.mxu0 %v1988
    %2030 = vmatpush.msra.mxu0 %v1986
    %2031 = vmatpush.msra.mxu0 %v1984
    %2032 = vmatmul.f32.gmra.mxu0 %v1875
    %v2033 = vpop.f32.mrf.mxu0
    %v2034 = vadd.f32 0.0, %v2033
    %2035 = vdwg.mxu0
    %2036 = vmatpush.msra.mxu0 %v2015
    %2037 = vmatpush.msra.mxu0 %v2013
    %2038 = vmatpush.msra.mxu0 %v2011
    %2039 = vmatpush.msra.mxu0 %v2009
    %2040 = vmatpush.msra.mxu0 %v2007
    %2041 = vmatpush.msra.mxu0 %v2005
    %2042 = vmatpush.msra.mxu0 %v2003
    %2043 = vmatpush.msra.mxu0 %v2001
    %2044 = vmatpush.msra.mxu0 %v1999
    %2045 = vmatpush.msra.mxu0 %v1997
    %2046 = vmatpush.msra.mxu0 %v1995
    %2047 = vmatpush.msra.mxu0 %v1993
    %2048 = vmatpush.msra.mxu0 %v1991
    %2049 = vmatpush.msra.mxu0 %v1989
    %2050 = vmatpush.msra.mxu0 %v1987
    %2051 = vmatpush.msra.mxu0 %v1985
    %2052 = vmatmul.f32.gmra.mxu0 %v1875
    %v2053 = vpop.f32.mrf.mxu0
    %v2054 = vadd.f32 0.0, %v2053
    %2055 = vdwg.mxu0
    %v2056 = vadd.f32 %v1942, %v2034
    %v2057 = vadd.f32 %v1962, %v2054
    %v2058 = vld [vmem:[%s9] sm:$0x3]
    %v2060 = vperm.slane %v2058, 0
    %v2061 = vperm.slane %v2058, 1
    %v2064 = vadd.f32 %v2056, %v2060
    %v2065 = vadd.f32 %v2057, %v2061
    %v2066 = vxor.u32 %v2064, 2147483648
    %v2067 = vxor.u32 %v2065, 2147483648
    %v2068 = vmul.f32 %v2066, 1.442695
    %v2069 = vpow.pop %v2068
    %v2070 = vmul.f32 %v2067, 1.442695
    %v2071 = vpow.pop %v2070
    %v2072 = vadd.f32 %v2069, 1.0
    %v2073 = vadd.f32 %v2071, 1.0
    %v2074 = vrcp.pop %v2072
    %v2075 = vmul.f32 %v2072, %v2074
    %v2076 = vsub.f32 1.0, %v2075
    %v2077 = vmul.f32 %v2074, %v2076
    %v2078 = vadd.f32 %v2074, %v2077
    %vm2079 = vweird.f32 %v2072
    %vm2080 = vweird.f32 %v2074
    %vm2081 = vmor %vm2079, %vm2080
    %v2082 = vsel %vm2081, %v2074, %v2078
    %v2083 = vand.u32 2147483647, %v2072
    %vm2084 = vcmp.eq.f32.partialorder %v2083, 8.507059e+37
    %v2085 = vand.u32 %v2072, 2147483648
    %v2086 = vor.u32 1.1754944e-38, %v2085
    %v2087 = vsel %vm2084, %v2086, %v2082
    %v2088 = vmul.f32 1.0, %v2087
    %v2089 = vrcp.pop %v2073
    %v2090 = vmul.f32 %v2073, %v2089
    %v2091 = vsub.f32 1.0, %v2090
    %v2092 = vmul.f32 %v2089, %v2091
    %v2093 = vadd.f32 %v2089, %v2092
    %vm2094 = vweird.f32 %v2073
    %vm2095 = vweird.f32 %v2089
    %vm2096 = vmor %vm2094, %vm2095
    %v2097 = vsel %vm2096, %v2089, %v2093
    %v2098 = vand.u32 2147483647, %v2073
    %vm2099 = vcmp.eq.f32.partialorder %v2098, 8.507059e+37
    %v2100 = vand.u32 %v2073, 2147483648
    %v2101 = vor.u32 1.1754944e-38, %v2100
    %v2102 = vsel %vm2099, %v2101, %v2097
    %v2103 = vmul.f32 1.0, %v2102
    %v2104 = vmul.f32 %v2103, %v1875
    %v2105 = vld [vmem:[#allocation14] sm:$0xff]
    %v2106 = vld [vmem:[#allocation14 + $0x8] sm:$0xff]
    %v2107 = vld [vmem:[#allocation14 + $0x10] sm:$0xff]
    %v2108 = vld [vmem:[#allocation14 + $0x18] sm:$0xff]
    %v2109 = vld [vmem:[#allocation14 + $0x20] sm:$0xff]
    %v2110 = vld [vmem:[#allocation14 + $0x28] sm:$0xff]
    %v2111 = vld [vmem:[#allocation14 + $0x30] sm:$0xff]
    %v2112 = vld [vmem:[#allocation14 + $0x38] sm:$0xff]
    %v2113 = vld [vmem:[#allocation14 + $0x40] sm:$0xff]
    %v2114 = vld [vmem:[#allocation14 + $0x48] sm:$0xff]
    %v2115 = vld [vmem:[#allocation14 + $0x50] sm:$0xff]
    %v2116 = vld [vmem:[#allocation14 + $0x58] sm:$0xff]
    %v2117 = vld [vmem:[#allocation14 + $0x60] sm:$0xff]
    %v2118 = vld [vmem:[#allocation14 + $0x68] sm:$0xff]
    %v2119 = vld [vmem:[#allocation14 + $0x70] sm:$0xff]
    %v2120 = vld [vmem:[#allocation14 + $0x78] sm:$0xff]
    %2121 = vmatpush.msra.mxu0 %v2120
    %2122 = vmatpush.msra.mxu0 %v2119
    %2123 = vmatpush.msra.mxu0 %v2118
    %2124 = vmatpush.msra.mxu0 %v2117
    %2125 = vmatpush.msra.mxu0 %v2116
    %2126 = vmatpush.msra.mxu0 %v2115
    %2127 = vmatpush.msra.mxu0 %v2114
    %2128 = vmatpush.msra.mxu0 %v2113
    %2129 = vmatpush.msra.mxu0 %v2112
    %2130 = vmatpush.msra.mxu0 %v2111
    %2131 = vmatpush.msra.mxu0 %v2110
    %2132 = vmatpush.msra.mxu0 %v2109
    %2133 = vmatpush.msra.mxu0 %v2108
    %2134 = vmatpush.msra.mxu0 %v2107
    %2135 = vmatpush.msra.mxu0 %v2106
    %2136 = vmatpush.msra.mxu0 %v2105
    %2137 = vmatmul.f32.gmra.mxu0 %v2104
    %v2138 = vpop.f32.mrf.mxu0
    %v2139 = vadd.f32 0.0, %v2138
    %2140 = vdwg.mxu0
    %v2141 = vadd.f32 %v1982, %v2139
    %v2142 = vld [vmem:[%s11] sm:$0x1]
    %v2144 = vperm.slane %v2142, 0
    %v2146 = vadd.f32 %v2141, %v2144
    %v2147 = vtanh.pop %v2146
    %v2148 = vmul.f32 %v2088, %v1875
    %v2149 = vsub.f32 1.0, %v2088
    %v2150 = vmul.f32 %v2149, %v2147
    %v2151 = vadd.f32 %v2148, %v2150
    %2152 = vst [vmem:[%s527] sm:$0xff] %v2151
    %2153 = vst [vmem:[#allocation16 + $0x18] sm:$0xff] %v2151
    %v2154 = vld [vmem:[#allocation17] sm:$0xff]
    %v2155 = vld [vmem:[#allocation8] sm:$0xff]
    %v2156 = vld [vmem:[#allocation8 + $0x8] sm:$0xff]
    %v2157 = vld [vmem:[#allocation8 + $0x10] sm:$0xff]
    %v2158 = vld [vmem:[#allocation8 + $0x18] sm:$0xff]
    %v2159 = vld [vmem:[#allocation8 + $0x20] sm:$0xff]
    %v2160 = vld [vmem:[#allocation8 + $0x28] sm:$0xff]
    %v2161 = vld [vmem:[#allocation8 + $0x30] sm:$0xff]
    %v2162 = vld [vmem:[#allocation8 + $0x38] sm:$0xff]
    %v2163 = vld [vmem:[#allocation8 + $0x40] sm:$0xff]
    %v2164 = vld [vmem:[#allocation8 + $0x48] sm:$0xff]
    %v2165 = vld [vmem:[#allocation8 + $0x50] sm:$0xff]
    %v2166 = vld [vmem:[#allocation8 + $0x58] sm:$0xff]
    %v2167 = vld [vmem:[#allocation8 + $0x60] sm:$0xff]
    %v2168 = vld [vmem:[#allocation8 + $0x68] sm:$0xff]
    %v2169 = vld [vmem:[#allocation8 + $0x70] sm:$0xff]
    %v2170 = vld [vmem:[#allocation8 + $0x78] sm:$0xff]
    %v2171 = vld [vmem:[#allocation8 + $0x80] sm:$0xff]
    %v2172 = vld [vmem:[#allocation8 + $0x88] sm:$0xff]
    %v2173 = vld [vmem:[#allocation8 + $0x90] sm:$0xff]
    %v2174 = vld [vmem:[#allocation8 + $0x98] sm:$0xff]
    %v2175 = vld [vmem:[#allocation8 + $0xa0] sm:$0xff]
    %v2176 = vld [vmem:[#allocation8 + $0xa8] sm:$0xff]
    %v2177 = vld [vmem:[#allocation8 + $0xb0] sm:$0xff]
    %v2178 = vld [vmem:[#allocation8 + $0xb8] sm:$0xff]
    %v2179 = vld [vmem:[#allocation8 + $0xc0] sm:$0xff]
    %v2180 = vld [vmem:[#allocation8 + $0xc8] sm:$0xff]
    %v2181 = vld [vmem:[#allocation8 + $0xd0] sm:$0xff]
    %v2182 = vld [vmem:[#allocation8 + $0xd8] sm:$0xff]
    %v2183 = vld [vmem:[#allocation8 + $0xe0] sm:$0xff]
    %v2184 = vld [vmem:[#allocation8 + $0xe8] sm:$0xff]
    %v2185 = vld [vmem:[#allocation8 + $0xf0] sm:$0xff]
    %v2186 = vld [vmem:[#allocation8 + $0xf8] sm:$0xff]
    %2187 = vmatpush.msra.mxu0 %v2185
    %2188 = vmatpush.msra.mxu0 %v2183
    %2189 = vmatpush.msra.mxu0 %v2181
    %2190 = vmatpush.msra.mxu0 %v2179
    %2191 = vmatpush.msra.mxu0 %v2177
    %2192 = vmatpush.msra.mxu0 %v2175
    %2193 = vmatpush.msra.mxu0 %v2173
    %2194 = vmatpush.msra.mxu0 %v2171
    %2195 = vmatpush.msra.mxu0 %v2169
    %2196 = vmatpush.msra.mxu0 %v2167
    %2197 = vmatpush.msra.mxu0 %v2165
    %2198 = vmatpush.msra.mxu0 %v2163
    %2199 = vmatpush.msra.mxu0 %v2161
    %2200 = vmatpush.msra.mxu0 %v2159
    %2201 = vmatpush.msra.mxu0 %v2157
    %2202 = vmatpush.msra.mxu0 %v2155
    %2203 = vmatmul.f32.gmra.mxu0 %v2154
    %v2204 = vpop.f32.mrf.mxu0
    %v2205 = vadd.f32 0.0, %v2204
    %2206 = vdwg.mxu0
    %2207 = vmatpush.msra.mxu0 %v2186
    %2208 = vmatpush.msra.mxu0 %v2184
    %2209 = vmatpush.msra.mxu0 %v2182
    %2210 = vmatpush.msra.mxu0 %v2180
    %2211 = vmatpush.msra.mxu0 %v2178
    %2212 = vmatpush.msra.mxu0 %v2176
    %2213 = vmatpush.msra.mxu0 %v2174
    %2214 = vmatpush.msra.mxu0 %v2172
    %2215 = vmatpush.msra.mxu0 %v2170
    %2216 = vmatpush.msra.mxu0 %v2168
    %2217 = vmatpush.msra.mxu0 %v2166
    %2218 = vmatpush.msra.mxu0 %v2164
    %2219 = vmatpush.msra.mxu0 %v2162
    %2220 = vmatpush.msra.mxu0 %v2160
    %2221 = vmatpush.msra.mxu0 %v2158
    %2222 = vmatpush.msra.mxu0 %v2156
    %2223 = vmatmul.f32.gmra.mxu0 %v2154
    %v2224 = vpop.f32.mrf.mxu0
    %v2225 = vadd.f32 0.0, %v2224
    %2226 = vdwg.mxu0
    %v2227 = vadd.f32 %v264, %v2205
    %v2228 = vadd.f32 %v305, %v2225
    %v2229 = vld [vmem:[%s4] sm:$0x3]
    %v2231 = vperm.slane %v2229, 0
    %v2232 = vperm.slane %v2229, 1
    %v2235 = vadd.f32 %v2227, %v2231
    %v2236 = vadd.f32 %v2228, %v2232
    %v2237 = vxor.u32 %v2235, 2147483648
    %v2238 = vxor.u32 %v2236, 2147483648
    %v2239 = vmul.f32 %v2237, 1.442695
    %v2240 = vpow.pop %v2239
    %v2241 = vmul.f32 %v2238, 1.442695
    %v2242 = vpow.pop %v2241
    %v2243 = vadd.f32 %v2240, 1.0
    %v2244 = vadd.f32 %v2242, 1.0
    %v2245 = vrcp.pop %v2243
    %v2246 = vmul.f32 %v2243, %v2245
    %v2247 = vsub.f32 1.0, %v2246
    %v2248 = vmul.f32 %v2245, %v2247
    %v2249 = vadd.f32 %v2245, %v2248
    %vm2250 = vweird.f32 %v2243
    %vm2251 = vweird.f32 %v2245
    %vm2252 = vmor %vm2250, %vm2251
    %v2253 = vsel %vm2252, %v2245, %v2249
    %v2254 = vand.u32 2147483647, %v2243
    %vm2255 = vcmp.eq.f32.partialorder %v2254, 8.507059e+37
    %v2256 = vand.u32 %v2243, 2147483648
    %v2257 = vor.u32 1.1754944e-38, %v2256
    %v2258 = vsel %vm2255, %v2257, %v2253
    %v2259 = vmul.f32 1.0, %v2258
    %v2260 = vrcp.pop %v2244
    %v2261 = vmul.f32 %v2244, %v2260
    %v2262 = vsub.f32 1.0, %v2261
    %v2263 = vmul.f32 %v2260, %v2262
    %v2264 = vadd.f32 %v2260, %v2263
    %vm2265 = vweird.f32 %v2244
    %vm2266 = vweird.f32 %v2260
    %vm2267 = vmor %vm2265, %vm2266
    %v2268 = vsel %vm2267, %v2260, %v2264
    %v2269 = vand.u32 2147483647, %v2244
    %vm2270 = vcmp.eq.f32.partialorder %v2269, 8.507059e+37
    %v2271 = vand.u32 %v2244, 2147483648
    %v2272 = vor.u32 1.1754944e-38, %v2271
    %v2273 = vsel %vm2270, %v2272, %v2268
    %v2274 = vmul.f32 1.0, %v2273
    %v2275 = vmul.f32 %v2274, %v2154
    %v2276 = vld [vmem:[#allocation10] sm:$0xff]
    %v2277 = vld [vmem:[#allocation10 + $0x8] sm:$0xff]
    %v2278 = vld [vmem:[#allocation10 + $0x10] sm:$0xff]
    %v2279 = vld [vmem:[#allocation10 + $0x18] sm:$0xff]
    %v2280 = vld [vmem:[#allocation10 + $0x20] sm:$0xff]
    %v2281 = vld [vmem:[#allocation10 + $0x28] sm:$0xff]
    %v2282 = vld [vmem:[#allocation10 + $0x30] sm:$0xff]
    %v2283 = vld [vmem:[#allocation10 + $0x38] sm:$0xff]
    %v2284 = vld [vmem:[#allocation10 + $0x40] sm:$0xff]
    %v2285 = vld [vmem:[#allocation10 + $0x48] sm:$0xff]
    %v2286 = vld [vmem:[#allocation10 + $0x50] sm:$0xff]
    %v2287 = vld [vmem:[#allocation10 + $0x58] sm:$0xff]
    %v2288 = vld [vmem:[#allocation10 + $0x60] sm:$0xff]
    %v2289 = vld [vmem:[#allocation10 + $0x68] sm:$0xff]
    %v2290 = vld [vmem:[#allocation10 + $0x70] sm:$0xff]
    %v2291 = vld [vmem:[#allocation10 + $0x78] sm:$0xff]
    %2292 = vmatpush.msra.mxu0 %v2291
    %2293 = vmatpush.msra.mxu0 %v2290
    %2294 = vmatpush.msra.mxu0 %v2289
    %2295 = vmatpush.msra.mxu0 %v2288
    %2296 = vmatpush.msra.mxu0 %v2287
    %2297 = vmatpush.msra.mxu0 %v2286
    %2298 = vmatpush.msra.mxu0 %v2285
    %2299 = vmatpush.msra.mxu0 %v2284
    %2300 = vmatpush.msra.mxu0 %v2283
    %2301 = vmatpush.msra.mxu0 %v2282
    %2302 = vmatpush.msra.mxu0 %v2281
    %2303 = vmatpush.msra.mxu0 %v2280
    %2304 = vmatpush.msra.mxu0 %v2279
    %2305 = vmatpush.msra.mxu0 %v2278
    %2306 = vmatpush.msra.mxu0 %v2277
    %2307 = vmatpush.msra.mxu0 %v2276
    %2308 = vmatmul.f32.gmra.mxu0 %v2275
    %v2309 = vpop.f32.mrf.mxu0
    %v2310 = vadd.f32 0.0, %v2309
    %2311 = vdwg.mxu0
    %v2312 = vadd.f32 %v346, %v2310
    %v2313 = vld [vmem:[%s6] sm:$0x1]
    %v2315 = vperm.slane %v2313, 0
    %v2317 = vadd.f32 %v2312, %v2315
    %v2318 = vtanh.pop %v2317
    %v2319 = vmul.f32 %v2259, %v2154
    %v2320 = vsub.f32 1.0, %v2259
    %v2321 = vmul.f32 %v2320, %v2318
    %v2322 = vadd.f32 %v2319, %v2321
    %2323 = vst [vmem:[#allocation17] sm:$0xff] %v2322
    %v2324 = vld [vmem:[%s527] sm:$0xff]
    %v2325 = vld [vmem:[#allocation11] sm:$0xff]
    %v2326 = vld [vmem:[#allocation11 + $0x8] sm:$0xff]
    %v2327 = vld [vmem:[#allocation11 + $0x10] sm:$0xff]
    %v2328 = vld [vmem:[#allocation11 + $0x18] sm:$0xff]
    %v2329 = vld [vmem:[#allocation11 + $0x20] sm:$0xff]
    %v2330 = vld [vmem:[#allocation11 + $0x28] sm:$0xff]
    %v2331 = vld [vmem:[#allocation11 + $0x30] sm:$0xff]
    %v2332 = vld [vmem:[#allocation11 + $0x38] sm:$0xff]
    %v2333 = vld [vmem:[#allocation11 + $0x40] sm:$0xff]
    %v2334 = vld [vmem:[#allocation11 + $0x48] sm:$0xff]
    %v2335 = vld [vmem:[#allocation11 + $0x50] sm:$0xff]
    %v2336 = vld [vmem:[#allocation11 + $0x58] sm:$0xff]
    %v2337 = vld [vmem:[#allocation11 + $0x60] sm:$0xff]
    %v2338 = vld [vmem:[#allocation11 + $0x68] sm:$0xff]
    %v2339 = vld [vmem:[#allocation11 + $0x70] sm:$0xff]
    %v2340 = vld [vmem:[#allocation11 + $0x78] sm:$0xff]
    %v2341 = vld [vmem:[#allocation11 + $0x80] sm:$0xff]
    %v2342 = vld [vmem:[#allocation11 + $0x88] sm:$0xff]
    %v2343 = vld [vmem:[#allocation11 + $0x90] sm:$0xff]
    %v2344 = vld [vmem:[#allocation11 + $0x98] sm:$0xff]
    %v2345 = vld [vmem:[#allocation11 + $0xa0] sm:$0xff]
    %v2346 = vld [vmem:[#allocation11 + $0xa8] sm:$0xff]
    %v2347 = vld [vmem:[#allocation11 + $0xb0] sm:$0xff]
    %v2348 = vld [vmem:[#allocation11 + $0xb8] sm:$0xff]
    %v2349 = vld [vmem:[#allocation11 + $0xc0] sm:$0xff]
    %v2350 = vld [vmem:[#allocation11 + $0xc8] sm:$0xff]
    %v2351 = vld [vmem:[#allocation11 + $0xd0] sm:$0xff]
    %v2352 = vld [vmem:[#allocation11 + $0xd8] sm:$0xff]
    %v2353 = vld [vmem:[#allocation11 + $0xe0] sm:$0xff]
    %v2354 = vld [vmem:[#allocation11 + $0xe8] sm:$0xff]
    %v2355 = vld [vmem:[#allocation11 + $0xf0] sm:$0xff]
    %v2356 = vld [vmem:[#allocation11 + $0xf8] sm:$0xff]
    %v2357 = vld [vmem:[#allocation11 + $0x100] sm:$0xff]
    %v2358 = vld [vmem:[#allocation11 + $0x108] sm:$0xff]
    %v2359 = vld [vmem:[#allocation11 + $0x110] sm:$0xff]
    %v2360 = vld [vmem:[#allocation11 + $0x118] sm:$0xff]
    %v2361 = vld [vmem:[#allocation11 + $0x120] sm:$0xff]
    %v2362 = vld [vmem:[#allocation11 + $0x128] sm:$0xff]
    %v2363 = vld [vmem:[#allocation11 + $0x130] sm:$0xff]
    %v2364 = vld [vmem:[#allocation11 + $0x138] sm:$0xff]
    %v2365 = vld [vmem:[#allocation11 + $0x140] sm:$0xff]
    %v2366 = vld [vmem:[#allocation11 + $0x148] sm:$0xff]
    %v2367 = vld [vmem:[#allocation11 + $0x150] sm:$0xff]
    %v2368 = vld [vmem:[#allocation11 + $0x158] sm:$0xff]
    %v2369 = vld [vmem:[#allocation11 + $0x160] sm:$0xff]
    %v2370 = vld [vmem:[#allocation11 + $0x168] sm:$0xff]
    %v2371 = vld [vmem:[#allocation11 + $0x170] sm:$0xff]
    %v2372 = vld [vmem:[#allocation11 + $0x178] sm:$0xff]
    %2373 = vmatpush.msra.mxu0 %v2370
    %2374 = vmatpush.msra.mxu0 %v2367
    %2375 = vmatpush.msra.mxu0 %v2364
    %2376 = vmatpush.msra.mxu0 %v2361
    %2377 = vmatpush.msra.mxu0 %v2358
    %2378 = vmatpush.msra.mxu0 %v2355
    %2379 = vmatpush.msra.mxu0 %v2352
    %2380 = vmatpush.msra.mxu0 %v2349
    %2381 = vmatpush.msra.mxu0 %v2346
    %2382 = vmatpush.msra.mxu0 %v2343
    %2383 = vmatpush.msra.mxu0 %v2340
    %2384 = vmatpush.msra.mxu0 %v2337
    %2385 = vmatpush.msra.mxu0 %v2334
    %2386 = vmatpush.msra.mxu0 %v2331
    %2387 = vmatpush.msra.mxu0 %v2328
    %2388 = vmatpush.msra.mxu0 %v2325
    %2389 = vmatmul.f32.gmra.mxu0 %v2322
    %v2390 = vpop.f32.mrf.mxu0
    %v2391 = vadd.f32 0.0, %v2390
    %2392 = vdwg.mxu0
    %2393 = vmatpush.msra.mxu0 %v2371
    %2394 = vmatpush.msra.mxu0 %v2368
    %2395 = vmatpush.msra.mxu0 %v2365
    %2396 = vmatpush.msra.mxu0 %v2362
    %2397 = vmatpush.msra.mxu0 %v2359
    %2398 = vmatpush.msra.mxu0 %v2356
    %2399 = vmatpush.msra.mxu0 %v2353
    %2400 = vmatpush.msra.mxu0 %v2350
    %2401 = vmatpush.msra.mxu0 %v2347
    %2402 = vmatpush.msra.mxu0 %v2344
    %2403 = vmatpush.msra.mxu0 %v2341
    %2404 = vmatpush.msra.mxu0 %v2338
    %2405 = vmatpush.msra.mxu0 %v2335
    %2406 = vmatpush.msra.mxu0 %v2332
    %2407 = vmatpush.msra.mxu0 %v2329
    %2408 = vmatpush.msra.mxu0 %v2326
    %2409 = vmatmul.f32.gmra.mxu0 %v2322
    %v2410 = vpop.f32.mrf.mxu0
    %v2411 = vadd.f32 0.0, %v2410
    %2412 = vdwg.mxu0
    %2413 = vmatpush.msra.mxu0 %v2372
    %2414 = vmatpush.msra.mxu0 %v2369
    %2415 = vmatpush.msra.mxu0 %v2366
    %2416 = vmatpush.msra.mxu0 %v2363
    %2417 = vmatpush.msra.mxu0 %v2360
    %2418 = vmatpush.msra.mxu0 %v2357
    %2419 = vmatpush.msra.mxu0 %v2354
    %2420 = vmatpush.msra.mxu0 %v2351
    %2421 = vmatpush.msra.mxu0 %v2348
    %2422 = vmatpush.msra.mxu0 %v2345
    %2423 = vmatpush.msra.mxu0 %v2342
    %2424 = vmatpush.msra.mxu0 %v2339
    %2425 = vmatpush.msra.mxu0 %v2336
    %2426 = vmatpush.msra.mxu0 %v2333
    %2427 = vmatpush.msra.mxu0 %v2330
    %2428 = vmatpush.msra.mxu0 %v2327
    %2429 = vmatmul.f32.gmra.mxu0 %v2322
    %v2430 = vpop.f32.mrf.mxu0
    %v2431 = vadd.f32 0.0, %v2430
    %2432 = vdwg.mxu0
    %v2433 = vld [vmem:[#allocation13] sm:$0xff]
    %v2434 = vld [vmem:[#allocation13 + $0x8] sm:$0xff]
    %v2435 = vld [vmem:[#allocation13 + $0x10] sm:$0xff]
    %v2436 = vld [vmem:[#allocation13 + $0x18] sm:$0xff]
    %v2437 = vld [vmem:[#allocation13 + $0x20] sm:$0xff]
    %v2438 = vld [vmem:[#allocation13 + $0x28] sm:$0xff]
    %v2439 = vld [vmem:[#allocation13 + $0x30] sm:$0xff]
    %v2440 = vld [vmem:[#allocation13 + $0x38] sm:$0xff]
    %v2441 = vld [vmem:[#allocation13 + $0x40] sm:$0xff]
    %v2442 = vld [vmem:[#allocation13 + $0x48] sm:$0xff]
    %v2443 = vld [vmem:[#allocation13 + $0x50] sm:$0xff]
    %v2444 = vld [vmem:[#allocation13 + $0x58] sm:$0xff]
    %v2445 = vld [vmem:[#allocation13 + $0x60] sm:$0xff]
    %v2446 = vld [vmem:[#allocation13 + $0x68] sm:$0xff]
    %v2447 = vld [vmem:[#allocation13 + $0x70] sm:$0xff]
    %v2448 = vld [vmem:[#allocation13 + $0x78] sm:$0xff]
    %v2449 = vld [vmem:[#allocation13 + $0x80] sm:$0xff]
    %v2450 = vld [vmem:[#allocation13 + $0x88] sm:$0xff]
    %v2451 = vld [vmem:[#allocation13 + $0x90] sm:$0xff]
    %v2452 = vld [vmem:[#allocation13 + $0x98] sm:$0xff]
    %v2453 = vld [vmem:[#allocation13 + $0xa0] sm:$0xff]
    %v2454 = vld [vmem:[#allocation13 + $0xa8] sm:$0xff]
    %v2455 = vld [vmem:[#allocation13 + $0xb0] sm:$0xff]
    %v2456 = vld [vmem:[#allocation13 + $0xb8] sm:$0xff]
    %v2457 = vld [vmem:[#allocation13 + $0xc0] sm:$0xff]
    %v2458 = vld [vmem:[#allocation13 + $0xc8] sm:$0xff]
    %v2459 = vld [vmem:[#allocation13 + $0xd0] sm:$0xff]
    %v2460 = vld [vmem:[#allocation13 + $0xd8] sm:$0xff]
    %v2461 = vld [vmem:[#allocation13 + $0xe0] sm:$0xff]
    %v2462 = vld [vmem:[#allocation13 + $0xe8] sm:$0xff]
    %v2463 = vld [vmem:[#allocation13 + $0xf0] sm:$0xff]
    %v2464 = vld [vmem:[#allocation13 + $0xf8] sm:$0xff]
    %2465 = vmatpush.msra.mxu0 %v2463
    %2466 = vmatpush.msra.mxu0 %v2461
    %2467 = vmatpush.msra.mxu0 %v2459
    %2468 = vmatpush.msra.mxu0 %v2457
    %2469 = vmatpush.msra.mxu0 %v2455
    %2470 = vmatpush.msra.mxu0 %v2453
    %2471 = vmatpush.msra.mxu0 %v2451
    %2472 = vmatpush.msra.mxu0 %v2449
    %2473 = vmatpush.msra.mxu0 %v2447
    %2474 = vmatpush.msra.mxu0 %v2445
    %2475 = vmatpush.msra.mxu0 %v2443
    %2476 = vmatpush.msra.mxu0 %v2441
    %2477 = vmatpush.msra.mxu0 %v2439
    %2478 = vmatpush.msra.mxu0 %v2437
    %2479 = vmatpush.msra.mxu0 %v2435
    %2480 = vmatpush.msra.mxu0 %v2433
    %2481 = vmatmul.f32.gmra.mxu0 %v2324
    %v2482 = vpop.f32.mrf.mxu0
    %v2483 = vadd.f32 0.0, %v2482
    %2484 = vdwg.mxu0
    %2485 = vmatpush.msra.mxu0 %v2464
    %2486 = vmatpush.msra.mxu0 %v2462
    %2487 = vmatpush.msra.mxu0 %v2460
    %2488 = vmatpush.msra.mxu0 %v2458
    %2489 = vmatpush.msra.mxu0 %v2456
    %2490 = vmatpush.msra.mxu0 %v2454
    %2491 = vmatpush.msra.mxu0 %v2452
    %2492 = vmatpush.msra.mxu0 %v2450
    %2493 = vmatpush.msra.mxu0 %v2448
    %2494 = vmatpush.msra.mxu0 %v2446
    %2495 = vmatpush.msra.mxu0 %v2444
    %2496 = vmatpush.msra.mxu0 %v2442
    %2497 = vmatpush.msra.mxu0 %v2440
    %2498 = vmatpush.msra.mxu0 %v2438
    %2499 = vmatpush.msra.mxu0 %v2436
    %2500 = vmatpush.msra.mxu0 %v2434
    %2501 = vmatmul.f32.gmra.mxu0 %v2324
    %v2502 = vpop.f32.mrf.mxu0
    %v2503 = vadd.f32 0.0, %v2502
    %2504 = vdwg.mxu0
    %v2505 = vadd.f32 %v2391, %v2483
    %v2506 = vadd.f32 %v2411, %v2503
    %v2507 = vld [vmem:[%s9] sm:$0x3]
    %v2509 = vperm.slane %v2507, 0
    %v2510 = vperm.slane %v2507, 1
    %v2513 = vadd.f32 %v2505, %v2509
    %v2514 = vadd.f32 %v2506, %v2510
    %v2515 = vxor.u32 %v2513, 2147483648
    %v2516 = vxor.u32 %v2514, 2147483648
    %v2517 = vmul.f32 %v2515, 1.442695
    %v2518 = vpow.pop %v2517
    %v2519 = vmul.f32 %v2516, 1.442695
    %v2520 = vpow.pop %v2519
    %v2521 = vadd.f32 %v2518, 1.0
    %v2522 = vadd.f32 %v2520, 1.0
    %v2523 = vrcp.pop %v2521
    %v2524 = vmul.f32 %v2521, %v2523
    %v2525 = vsub.f32 1.0, %v2524
    %v2526 = vmul.f32 %v2523, %v2525
    %v2527 = vadd.f32 %v2523, %v2526
    %vm2528 = vweird.f32 %v2521
    %vm2529 = vweird.f32 %v2523
    %vm2530 = vmor %vm2528, %vm2529
    %v2531 = vsel %vm2530, %v2523, %v2527
    %v2532 = vand.u32 2147483647, %v2521
    %vm2533 = vcmp.eq.f32.partialorder %v2532, 8.507059e+37
    %v2534 = vand.u32 %v2521, 2147483648
    %v2535 = vor.u32 1.1754944e-38, %v2534
    %v2536 = vsel %vm2533, %v2535, %v2531
    %v2537 = vmul.f32 1.0, %v2536
    %v2538 = vrcp.pop %v2522
    %v2539 = vmul.f32 %v2522, %v2538
    %v2540 = vsub.f32 1.0, %v2539
    %v2541 = vmul.f32 %v2538, %v2540
    %v2542 = vadd.f32 %v2538, %v2541
    %vm2543 = vweird.f32 %v2522
    %vm2544 = vweird.f32 %v2538
    %vm2545 = vmor %vm2543, %vm2544
    %v2546 = vsel %vm2545, %v2538, %v2542
    %v2547 = vand.u32 2147483647, %v2522
    %vm2548 = vcmp.eq.f32.partialorder %v2547, 8.507059e+37
    %v2549 = vand.u32 %v2522, 2147483648
    %v2550 = vor.u32 1.1754944e-38, %v2549
    %v2551 = vsel %vm2548, %v2550, %v2546
    %v2552 = vmul.f32 1.0, %v2551
    %v2553 = vmul.f32 %v2552, %v2324
    %v2554 = vld [vmem:[#allocation14] sm:$0xff]
    %v2555 = vld [vmem:[#allocation14 + $0x8] sm:$0xff]
    %v2556 = vld [vmem:[#allocation14 + $0x10] sm:$0xff]
    %v2557 = vld [vmem:[#allocation14 + $0x18] sm:$0xff]
    %v2558 = vld [vmem:[#allocation14 + $0x20] sm:$0xff]
    %v2559 = vld [vmem:[#allocation14 + $0x28] sm:$0xff]
    %v2560 = vld [vmem:[#allocation14 + $0x30] sm:$0xff]
    %v2561 = vld [vmem:[#allocation14 + $0x38] sm:$0xff]
    %v2562 = vld [vmem:[#allocation14 + $0x40] sm:$0xff]
    %v2563 = vld [vmem:[#allocation14 + $0x48] sm:$0xff]
    %v2564 = vld [vmem:[#allocation14 + $0x50] sm:$0xff]
    %v2565 = vld [vmem:[#allocation14 + $0x58] sm:$0xff]
    %v2566 = vld [vmem:[#allocation14 + $0x60] sm:$0xff]
    %v2567 = vld [vmem:[#allocation14 + $0x68] sm:$0xff]
    %v2568 = vld [vmem:[#allocation14 + $0x70] sm:$0xff]
    %v2569 = vld [vmem:[#allocation14 + $0x78] sm:$0xff]
    %2570 = vmatpush.msra.mxu0 %v2569
    %2571 = vmatpush.msra.mxu0 %v2568
    %2572 = vmatpush.msra.mxu0 %v2567
    %2573 = vmatpush.msra.mxu0 %v2566
    %2574 = vmatpush.msra.mxu0 %v2565
    %2575 = vmatpush.msra.mxu0 %v2564
    %2576 = vmatpush.msra.mxu0 %v2563
    %2577 = vmatpush.msra.mxu0 %v2562
    %2578 = vmatpush.msra.mxu0 %v2561
    %2579 = vmatpush.msra.mxu0 %v2560
    %2580 = vmatpush.msra.mxu0 %v2559
    %2581 = vmatpush.msra.mxu0 %v2558
    %2582 = vmatpush.msra.mxu0 %v2557
    %2583 = vmatpush.msra.mxu0 %v2556
    %2584 = vmatpush.msra.mxu0 %v2555
    %2585 = vmatpush.msra.mxu0 %v2554
    %2586 = vmatmul.f32.gmra.mxu0 %v2553
    %v2587 = vpop.f32.mrf.mxu0
    %v2588 = vadd.f32 0.0, %v2587
    %2589 = vdwg.mxu0
    %v2590 = vadd.f32 %v2431, %v2588
    %v2591 = vld [vmem:[%s11] sm:$0x1]
    %v2593 = vperm.slane %v2591, 0
    %v2595 = vadd.f32 %v2590, %v2593
    %v2596 = vtanh.pop %v2595
    %v2597 = vmul.f32 %v2537, %v2324
    %v2598 = vsub.f32 1.0, %v2537
    %v2599 = vmul.f32 %v2598, %v2596
    %v2600 = vadd.f32 %v2597, %v2599
    %2601 = vst [vmem:[%s527] sm:$0xff] %v2600
    %2602 = vst [vmem:[#allocation16 + $0x20] sm:$0xff] %v2600
    %v2603 = vld [vmem:[#allocation17] sm:$0xff]
    %v2604 = vld [vmem:[#allocation8] sm:$0xff]
    %v2605 = vld [vmem:[#allocation8 + $0x8] sm:$0xff]
    %v2606 = vld [vmem:[#allocation8 + $0x10] sm:$0xff]
    %v2607 = vld [vmem:[#allocation8 + $0x18] sm:$0xff]
    %v2608 = vld [vmem:[#allocation8 + $0x20] sm:$0xff]
    %v2609 = vld [vmem:[#allocation8 + $0x28] sm:$0xff]
    %v2610 = vld [vmem:[#allocation8 + $0x30] sm:$0xff]
    %v2611 = vld [vmem:[#allocation8 + $0x38] sm:$0xff]
    %v2612 = vld [vmem:[#allocation8 + $0x40] sm:$0xff]
    %v2613 = vld [vmem:[#allocation8 + $0x48] sm:$0xff]
    %v2614 = vld [vmem:[#allocation8 + $0x50] sm:$0xff]
    %v2615 = vld [vmem:[#allocation8 + $0x58] sm:$0xff]
    %v2616 = vld [vmem:[#allocation8 + $0x60] sm:$0xff]
    %v2617 = vld [vmem:[#allocation8 + $0x68] sm:$0xff]
    %v2618 = vld [vmem:[#allocation8 + $0x70] sm:$0xff]
    %v2619 = vld [vmem:[#allocation8 + $0x78] sm:$0xff]
    %v2620 = vld [vmem:[#allocation8 + $0x80] sm:$0xff]
    %v2621 = vld [vmem:[#allocation8 + $0x88] sm:$0xff]
    %v2622 = vld [vmem:[#allocation8 + $0x90] sm:$0xff]
    %v2623 = vld [vmem:[#allocation8 + $0x98] sm:$0xff]
    %v2624 = vld [vmem:[#allocation8 + $0xa0] sm:$0xff]
    %v2625 = vld [vmem:[#allocation8 + $0xa8] sm:$0xff]
    %v2626 = vld [vmem:[#allocation8 + $0xb0] sm:$0xff]
    %v2627 = vld [vmem:[#allocation8 + $0xb8] sm:$0xff]
    %v2628 = vld [vmem:[#allocation8 + $0xc0] sm:$0xff]
    %v2629 = vld [vmem:[#allocation8 + $0xc8] sm:$0xff]
    %v2630 = vld [vmem:[#allocation8 + $0xd0] sm:$0xff]
    %v2631 = vld [vmem:[#allocation8 + $0xd8] sm:$0xff]
    %v2632 = vld [vmem:[#allocation8 + $0xe0] sm:$0xff]
    %v2633 = vld [vmem:[#allocation8 + $0xe8] sm:$0xff]
    %v2634 = vld [vmem:[#allocation8 + $0xf0] sm:$0xff]
    %v2635 = vld [vmem:[#allocation8 + $0xf8] sm:$0xff]
    %2636 = vmatpush.msra.mxu0 %v2634
    %2637 = vmatpush.msra.mxu0 %v2632
    %2638 = vmatpush.msra.mxu0 %v2630
    %2639 = vmatpush.msra.mxu0 %v2628
    %2640 = vmatpush.msra.mxu0 %v2626
    %2641 = vmatpush.msra.mxu0 %v2624
    %2642 = vmatpush.msra.mxu0 %v2622
    %2643 = vmatpush.msra.mxu0 %v2620
    %2644 = vmatpush.msra.mxu0 %v2618
    %2645 = vmatpush.msra.mxu0 %v2616
    %2646 = vmatpush.msra.mxu0 %v2614
    %2647 = vmatpush.msra.mxu0 %v2612
    %2648 = vmatpush.msra.mxu0 %v2610
    %2649 = vmatpush.msra.mxu0 %v2608
    %2650 = vmatpush.msra.mxu0 %v2606
    %2651 = vmatpush.msra.mxu0 %v2604
    %2652 = vmatmul.f32.gmra.mxu0 %v2603
    %v2653 = vpop.f32.mrf.mxu0
    %v2654 = vadd.f32 0.0, %v2653
    %2655 = vdwg.mxu0
    %2656 = vmatpush.msra.mxu0 %v2635
    %2657 = vmatpush.msra.mxu0 %v2633
    %2658 = vmatpush.msra.mxu0 %v2631
    %2659 = vmatpush.msra.mxu0 %v2629
    %2660 = vmatpush.msra.mxu0 %v2627
    %2661 = vmatpush.msra.mxu0 %v2625
    %2662 = vmatpush.msra.mxu0 %v2623
    %2663 = vmatpush.msra.mxu0 %v2621
    %2664 = vmatpush.msra.mxu0 %v2619
    %2665 = vmatpush.msra.mxu0 %v2617
    %2666 = vmatpush.msra.mxu0 %v2615
    %2667 = vmatpush.msra.mxu0 %v2613
    %2668 = vmatpush.msra.mxu0 %v2611
    %2669 = vmatpush.msra.mxu0 %v2609
    %2670 = vmatpush.msra.mxu0 %v2607
    %2671 = vmatpush.msra.mxu0 %v2605
    %2672 = vmatmul.f32.gmra.mxu0 %v2603
    %v2673 = vpop.f32.mrf.mxu0
    %v2674 = vadd.f32 0.0, %v2673
    %2675 = vdwg.mxu0
    %v2676 = vadd.f32 %v267, %v2654
    %v2677 = vadd.f32 %v308, %v2674
    %v2678 = vld [vmem:[%s4] sm:$0x3]
    %v2680 = vperm.slane %v2678, 0
    %v2681 = vperm.slane %v2678, 1
    %v2684 = vadd.f32 %v2676, %v2680
    %v2685 = vadd.f32 %v2677, %v2681
    %v2686 = vxor.u32 %v2684, 2147483648
    %v2687 = vxor.u32 %v2685, 2147483648
    %v2688 = vmul.f32 %v2686, 1.442695
    %v2689 = vpow.pop %v2688
    %v2690 = vmul.f32 %v2687, 1.442695
    %v2691 = vpow.pop %v2690
    %v2692 = vadd.f32 %v2689, 1.0
    %v2693 = vadd.f32 %v2691, 1.0
    %v2694 = vrcp.pop %v2692
    %v2695 = vmul.f32 %v2692, %v2694
    %v2696 = vsub.f32 1.0, %v2695
    %v2697 = vmul.f32 %v2694, %v2696
    %v2698 = vadd.f32 %v2694, %v2697
    %vm2699 = vweird.f32 %v2692
    %vm2700 = vweird.f32 %v2694
    %vm2701 = vmor %vm2699, %vm2700
    %v2702 = vsel %vm2701, %v2694, %v2698
    %v2703 = vand.u32 2147483647, %v2692
    %vm2704 = vcmp.eq.f32.partialorder %v2703, 8.507059e+37
    %v2705 = vand.u32 %v2692, 2147483648
    %v2706 = vor.u32 1.1754944e-38, %v2705
    %v2707 = vsel %vm2704, %v2706, %v2702
    %v2708 = vmul.f32 1.0, %v2707
    %v2709 = vrcp.pop %v2693
    %v2710 = vmul.f32 %v2693, %v2709
    %v2711 = vsub.f32 1.0, %v2710
    %v2712 = vmul.f32 %v2709, %v2711
    %v2713 = vadd.f32 %v2709, %v2712
    %vm2714 = vweird.f32 %v2693
    %vm2715 = vweird.f32 %v2709
    %vm2716 = vmor %vm2714, %vm2715
    %v2717 = vsel %vm2716, %v2709, %v2713
    %v2718 = vand.u32 2147483647, %v2693
    %vm2719 = vcmp.eq.f32.partialorder %v2718, 8.507059e+37
    %v2720 = vand.u32 %v2693, 2147483648
    %v2721 = vor.u32 1.1754944e-38, %v2720
    %v2722 = vsel %vm2719, %v2721, %v2717
    %v2723 = vmul.f32 1.0, %v2722
    %v2724 = vmul.f32 %v2723, %v2603
    %v2725 = vld [vmem:[#allocation10] sm:$0xff]
    %v2726 = vld [vmem:[#allocation10 + $0x8] sm:$0xff]
    %v2727 = vld [vmem:[#allocation10 + $0x10] sm:$0xff]
    %v2728 = vld [vmem:[#allocation10 + $0x18] sm:$0xff]
    %v2729 = vld [vmem:[#allocation10 + $0x20] sm:$0xff]
    %v2730 = vld [vmem:[#allocation10 + $0x28] sm:$0xff]
    %v2731 = vld [vmem:[#allocation10 + $0x30] sm:$0xff]
    %v2732 = vld [vmem:[#allocation10 + $0x38] sm:$0xff]
    %v2733 = vld [vmem:[#allocation10 + $0x40] sm:$0xff]
    %v2734 = vld [vmem:[#allocation10 + $0x48] sm:$0xff]
    %v2735 = vld [vmem:[#allocation10 + $0x50] sm:$0xff]
    %v2736 = vld [vmem:[#allocation10 + $0x58] sm:$0xff]
    %v2737 = vld [vmem:[#allocation10 + $0x60] sm:$0xff]
    %v2738 = vld [vmem:[#allocation10 + $0x68] sm:$0xff]
    %v2739 = vld [vmem:[#allocation10 + $0x70] sm:$0xff]
    %v2740 = vld [vmem:[#allocation10 + $0x78] sm:$0xff]
    %2741 = vmatpush.msra.mxu0 %v2740
    %2742 = vmatpush.msra.mxu0 %v2739
    %2743 = vmatpush.msra.mxu0 %v2738
    %2744 = vmatpush.msra.mxu0 %v2737
    %2745 = vmatpush.msra.mxu0 %v2736
    %2746 = vmatpush.msra.mxu0 %v2735
    %2747 = vmatpush.msra.mxu0 %v2734
    %2748 = vmatpush.msra.mxu0 %v2733
    %2749 = vmatpush.msra.mxu0 %v2732
    %2750 = vmatpush.msra.mxu0 %v2731
    %2751 = vmatpush.msra.mxu0 %v2730
    %2752 = vmatpush.msra.mxu0 %v2729
    %2753 = vmatpush.msra.mxu0 %v2728
    %2754 = vmatpush.msra.mxu0 %v2727
    %2755 = vmatpush.msra.mxu0 %v2726
    %2756 = vmatpush.msra.mxu0 %v2725
    %2757 = vmatmul.f32.gmra.mxu0 %v2724
    %v2758 = vpop.f32.mrf.mxu0
    %v2759 = vadd.f32 0.0, %v2758
    %2760 = vdwg.mxu0
    %v2761 = vadd.f32 %v349, %v2759
    %v2762 = vld [vmem:[%s6] sm:$0x1]
    %v2764 = vperm.slane %v2762, 0
    %v2766 = vadd.f32 %v2761, %v2764
    %v2767 = vtanh.pop %v2766
    %v2768 = vmul.f32 %v2708, %v2603
    %v2769 = vsub.f32 1.0, %v2708
    %v2770 = vmul.f32 %v2769, %v2767
    %v2771 = vadd.f32 %v2768, %v2770
    %2772 = vst [vmem:[#allocation17] sm:$0xff] %v2771
    %v2773 = vld [vmem:[%s527] sm:$0xff]
    %v2774 = vld [vmem:[#allocation11] sm:$0xff]
    %v2775 = vld [vmem:[#allocation11 + $0x8] sm:$0xff]
    %v2776 = vld [vmem:[#allocation11 + $0x10] sm:$0xff]
    %v2777 = vld [vmem:[#allocation11 + $0x18] sm:$0xff]
    %v2778 = vld [vmem:[#allocation11 + $0x20] sm:$0xff]
    %v2779 = vld [vmem:[#allocation11 + $0x28] sm:$0xff]
    %v2780 = vld [vmem:[#allocation11 + $0x30] sm:$0xff]
    %v2781 = vld [vmem:[#allocation11 + $0x38] sm:$0xff]
    %v2782 = vld [vmem:[#allocation11 + $0x40] sm:$0xff]
    %v2783 = vld [vmem:[#allocation11 + $0x48] sm:$0xff]
    %v2784 = vld [vmem:[#allocation11 + $0x50] sm:$0xff]
    %v2785 = vld [vmem:[#allocation11 + $0x58] sm:$0xff]
    %v2786 = vld [vmem:[#allocation11 + $0x60] sm:$0xff]
    %v2787 = vld [vmem:[#allocation11 + $0x68] sm:$0xff]
    %v2788 = vld [vmem:[#allocation11 + $0x70] sm:$0xff]
    %v2789 = vld [vmem:[#allocation11 + $0x78] sm:$0xff]
    %v2790 = vld [vmem:[#allocation11 + $0x80] sm:$0xff]
    %v2791 = vld [vmem:[#allocation11 + $0x88] sm:$0xff]
    %v2792 = vld [vmem:[#allocation11 + $0x90] sm:$0xff]
    %v2793 = vld [vmem:[#allocation11 + $0x98] sm:$0xff]
    %v2794 = vld [vmem:[#allocation11 + $0xa0] sm:$0xff]
    %v2795 = vld [vmem:[#allocation11 + $0xa8] sm:$0xff]
    %v2796 = vld [vmem:[#allocation11 + $0xb0] sm:$0xff]
    %v2797 = vld [vmem:[#allocation11 + $0xb8] sm:$0xff]
    %v2798 = vld [vmem:[#allocation11 + $0xc0] sm:$0xff]
    %v2799 = vld [vmem:[#allocation11 + $0xc8] sm:$0xff]
    %v2800 = vld [vmem:[#allocation11 + $0xd0] sm:$0xff]
    %v2801 = vld [vmem:[#allocation11 + $0xd8] sm:$0xff]
    %v2802 = vld [vmem:[#allocation11 + $0xe0] sm:$0xff]
    %v2803 = vld [vmem:[#allocation11 + $0xe8] sm:$0xff]
    %v2804 = vld [vmem:[#allocation11 + $0xf0] sm:$0xff]
    %v2805 = vld [vmem:[#allocation11 + $0xf8] sm:$0xff]
    %v2806 = vld [vmem:[#allocation11 + $0x100] sm:$0xff]
    %v2807 = vld [vmem:[#allocation11 + $0x108] sm:$0xff]
    %v2808 = vld [vmem:[#allocation11 + $0x110] sm:$0xff]
    %v2809 = vld [vmem:[#allocation11 + $0x118] sm:$0xff]
    %v2810 = vld [vmem:[#allocation11 + $0x120] sm:$0xff]
    %v2811 = vld [vmem:[#allocation11 + $0x128] sm:$0xff]
    %v2812 = vld [vmem:[#allocation11 + $0x130] sm:$0xff]
    %v2813 = vld [vmem:[#allocation11 + $0x138] sm:$0xff]
    %v2814 = vld [vmem:[#allocation11 + $0x140] sm:$0xff]
    %v2815 = vld [vmem:[#allocation11 + $0x148] sm:$0xff]
    %v2816 = vld [vmem:[#allocation11 + $0x150] sm:$0xff]
    %v2817 = vld [vmem:[#allocation11 + $0x158] sm:$0xff]
    %v2818 = vld [vmem:[#allocation11 + $0x160] sm:$0xff]
    %v2819 = vld [vmem:[#allocation11 + $0x168] sm:$0xff]
    %v2820 = vld [vmem:[#allocation11 + $0x170] sm:$0xff]
    %v2821 = vld [vmem:[#allocation11 + $0x178] sm:$0xff]
    %2822 = vmatpush.msra.mxu0 %v2819
    %2823 = vmatpush.msra.mxu0 %v2816
    %2824 = vmatpush.msra.mxu0 %v2813
    %2825 = vmatpush.msra.mxu0 %v2810
    %2826 = vmatpush.msra.mxu0 %v2807
    %2827 = vmatpush.msra.mxu0 %v2804
    %2828 = vmatpush.msra.mxu0 %v2801
    %2829 = vmatpush.msra.mxu0 %v2798
    %2830 = vmatpush.msra.mxu0 %v2795
    %2831 = vmatpush.msra.mxu0 %v2792
    %2832 = vmatpush.msra.mxu0 %v2789
    %2833 = vmatpush.msra.mxu0 %v2786
    %2834 = vmatpush.msra.mxu0 %v2783
    %2835 = vmatpush.msra.mxu0 %v2780
    %2836 = vmatpush.msra.mxu0 %v2777
    %2837 = vmatpush.msra.mxu0 %v2774
    %2838 = vmatmul.f32.gmra.mxu0 %v2771
    %v2839 = vpop.f32.mrf.mxu0
    %v2840 = vadd.f32 0.0, %v2839
    %2841 = vdwg.mxu0
    %2842 = vmatpush.msra.mxu0 %v2820
    %2843 = vmatpush.msra.mxu0 %v2817
    %2844 = vmatpush.msra.mxu0 %v2814
    %2845 = vmatpush.msra.mxu0 %v2811
    %2846 = vmatpush.msra.mxu0 %v2808
    %2847 = vmatpush.msra.mxu0 %v2805
    %2848 = vmatpush.msra.mxu0 %v2802
    %2849 = vmatpush.msra.mxu0 %v2799
    %2850 = vmatpush.msra.mxu0 %v2796
    %2851 = vmatpush.msra.mxu0 %v2793
    %2852 = vmatpush.msra.mxu0 %v2790
    %2853 = vmatpush.msra.mxu0 %v2787
    %2854 = vmatpush.msra.mxu0 %v2784
    %2855 = vmatpush.msra.mxu0 %v2781
    %2856 = vmatpush.msra.mxu0 %v2778
    %2857 = vmatpush.msra.mxu0 %v2775
    %2858 = vmatmul.f32.gmra.mxu0 %v2771
    %v2859 = vpop.f32.mrf.mxu0
    %v2860 = vadd.f32 0.0, %v2859
    %2861 = vdwg.mxu0
    %2862 = vmatpush.msra.mxu0 %v2821
    %2863 = vmatpush.msra.mxu0 %v2818
    %2864 = vmatpush.msra.mxu0 %v2815
    %2865 = vmatpush.msra.mxu0 %v2812
    %2866 = vmatpush.msra.mxu0 %v2809
    %2867 = vmatpush.msra.mxu0 %v2806
    %2868 = vmatpush.msra.mxu0 %v2803
    %2869 = vmatpush.msra.mxu0 %v2800
    %2870 = vmatpush.msra.mxu0 %v2797
    %2871 = vmatpush.msra.mxu0 %v2794
    %2872 = vmatpush.msra.mxu0 %v2791
    %2873 = vmatpush.msra.mxu0 %v2788
    %2874 = vmatpush.msra.mxu0 %v2785
    %2875 = vmatpush.msra.mxu0 %v2782
    %2876 = vmatpush.msra.mxu0 %v2779
    %2877 = vmatpush.msra.mxu0 %v2776
    %2878 = vmatmul.f32.gmra.mxu0 %v2771
    %v2879 = vpop.f32.mrf.mxu0
    %v2880 = vadd.f32 0.0, %v2879
    %2881 = vdwg.mxu0
    %v2882 = vld [vmem:[#allocation13] sm:$0xff]
    %v2883 = vld [vmem:[#allocation13 + $0x8] sm:$0xff]
    %v2884 = vld [vmem:[#allocation13 + $0x10] sm:$0xff]
    %v2885 = vld [vmem:[#allocation13 + $0x18] sm:$0xff]
    %v2886 = vld [vmem:[#allocation13 + $0x20] sm:$0xff]
    %v2887 = vld [vmem:[#allocation13 + $0x28] sm:$0xff]
    %v2888 = vld [vmem:[#allocation13 + $0x30] sm:$0xff]
    %v2889 = vld [vmem:[#allocation13 + $0x38] sm:$0xff]
    %v2890 = vld [vmem:[#allocation13 + $0x40] sm:$0xff]
    %v2891 = vld [vmem:[#allocation13 + $0x48] sm:$0xff]
    %v2892 = vld [vmem:[#allocation13 + $0x50] sm:$0xff]
    %v2893 = vld [vmem:[#allocation13 + $0x58] sm:$0xff]
    %v2894 = vld [vmem:[#allocation13 + $0x60] sm:$0xff]
    %v2895 = vld [vmem:[#allocation13 + $0x68] sm:$0xff]
    %v2896 = vld [vmem:[#allocation13 + $0x70] sm:$0xff]
    %v2897 = vld [vmem:[#allocation13 + $0x78] sm:$0xff]
    %v2898 = vld [vmem:[#allocation13 + $0x80] sm:$0xff]
    %v2899 = vld [vmem:[#allocation13 + $0x88] sm:$0xff]
    %v2900 = vld [vmem:[#allocation13 + $0x90] sm:$0xff]
    %v2901 = vld [vmem:[#allocation13 + $0x98] sm:$0xff]
    %v2902 = vld [vmem:[#allocation13 + $0xa0] sm:$0xff]
    %v2903 = vld [vmem:[#allocation13 + $0xa8] sm:$0xff]
    %v2904 = vld [vmem:[#allocation13 + $0xb0] sm:$0xff]
    %v2905 = vld [vmem:[#allocation13 + $0xb8] sm:$0xff]
    %v2906 = vld [vmem:[#allocation13 + $0xc0] sm:$0xff]
    %v2907 = vld [vmem:[#allocation13 + $0xc8] sm:$0xff]
    %v2908 = vld [vmem:[#allocation13 + $0xd0] sm:$0xff]
    %v2909 = vld [vmem:[#allocation13 + $0xd8] sm:$0xff]
    %v2910 = vld [vmem:[#allocation13 + $0xe0] sm:$0xff]
    %v2911 = vld [vmem:[#allocation13 + $0xe8] sm:$0xff]
    %v2912 = vld [vmem:[#allocation13 + $0xf0] sm:$0xff]
    %v2913 = vld [vmem:[#allocation13 + $0xf8] sm:$0xff]
    %2914 = vmatpush.msra.mxu0 %v2912
    %2915 = vmatpush.msra.mxu0 %v2910
    %2916 = vmatpush.msra.mxu0 %v2908
    %2917 = vmatpush.msra.mxu0 %v2906
    %2918 = vmatpush.msra.mxu0 %v2904
    %2919 = vmatpush.msra.mxu0 %v2902
    %2920 = vmatpush.msra.mxu0 %v2900
    %2921 = vmatpush.msra.mxu0 %v2898
    %2922 = vmatpush.msra.mxu0 %v2896
    %2923 = vmatpush.msra.mxu0 %v2894
    %2924 = vmatpush.msra.mxu0 %v2892
    %2925 = vmatpush.msra.mxu0 %v2890
    %2926 = vmatpush.msra.mxu0 %v2888
    %2927 = vmatpush.msra.mxu0 %v2886
    %2928 = vmatpush.msra.mxu0 %v2884
    %2929 = vmatpush.msra.mxu0 %v2882
    %2930 = vmatmul.f32.gmra.mxu0 %v2773
    %v2931 = vpop.f32.mrf.mxu0
    %v2932 = vadd.f32 0.0, %v2931
    %2933 = vdwg.mxu0
    %2934 = vmatpush.msra.mxu0 %v2913
    %2935 = vmatpush.msra.mxu0 %v2911
    %2936 = vmatpush.msra.mxu0 %v2909
    %2937 = vmatpush.msra.mxu0 %v2907
    %2938 = vmatpush.msra.mxu0 %v2905
    %2939 = vmatpush.msra.mxu0 %v2903
    %2940 = vmatpush.msra.mxu0 %v2901
    %2941 = vmatpush.msra.mxu0 %v2899
    %2942 = vmatpush.msra.mxu0 %v2897
    %2943 = vmatpush.msra.mxu0 %v2895
    %2944 = vmatpush.msra.mxu0 %v2893
    %2945 = vmatpush.msra.mxu0 %v2891
    %2946 = vmatpush.msra.mxu0 %v2889
    %2947 = vmatpush.msra.mxu0 %v2887
    %2948 = vmatpush.msra.mxu0 %v2885
    %2949 = vmatpush.msra.mxu0 %v2883
    %2950 = vmatmul.f32.gmra.mxu0 %v2773
    %v2951 = vpop.f32.mrf.mxu0
    %v2952 = vadd.f32 0.0, %v2951
    %2953 = vdwg.mxu0
    %v2954 = vadd.f32 %v2840, %v2932
    %v2955 = vadd.f32 %v2860, %v2952
    %v2956 = vld [vmem:[%s9] sm:$0x3]
    %v2958 = vperm.slane %v2956, 0
    %v2959 = vperm.slane %v2956, 1
    %v2962 = vadd.f32 %v2954, %v2958
    %v2963 = vadd.f32 %v2955, %v2959
    %v2964 = vxor.u32 %v2962, 2147483648
    %v2965 = vxor.u32 %v2963, 2147483648
    %v2966 = vmul.f32 %v2964, 1.442695
    %v2967 = vpow.pop %v2966
    %v2968 = vmul.f32 %v2965, 1.442695
    %v2969 = vpow.pop %v2968
    %v2970 = vadd.f32 %v2967, 1.0
    %v2971 = vadd.f32 %v2969, 1.0
    %v2972 = vrcp.pop %v2970
    %v2973 = vmul.f32 %v2970, %v2972
    %v2974 = vsub.f32 1.0, %v2973
    %v2975 = vmul.f32 %v2972, %v2974
    %v2976 = vadd.f32 %v2972, %v2975
    %vm2977 = vweird.f32 %v2970
    %vm2978 = vweird.f32 %v2972
    %vm2979 = vmor %vm2977, %vm2978
    %v2980 = vsel %vm2979, %v2972, %v2976
    %v2981 = vand.u32 2147483647, %v2970
    %vm2982 = vcmp.eq.f32.partialorder %v2981, 8.507059e+37
    %v2983 = vand.u32 %v2970, 2147483648
    %v2984 = vor.u32 1.1754944e-38, %v2983
    %v2985 = vsel %vm2982, %v2984, %v2980
    %v2986 = vmul.f32 1.0, %v2985
    %v2987 = vrcp.pop %v2971
    %v2988 = vmul.f32 %v2971, %v2987
    %v2989 = vsub.f32 1.0, %v2988
    %v2990 = vmul.f32 %v2987, %v2989
    %v2991 = vadd.f32 %v2987, %v2990
    %vm2992 = vweird.f32 %v2971
    %vm2993 = vweird.f32 %v2987
    %vm2994 = vmor %vm2992, %vm2993
    %v2995 = vsel %vm2994, %v2987, %v2991
    %v2996 = vand.u32 2147483647, %v2971
    %vm2997 = vcmp.eq.f32.partialorder %v2996, 8.507059e+37
    %v2998 = vand.u32 %v2971, 2147483648
    %v2999 = vor.u32 1.1754944e-38, %v2998
    %v3000 = vsel %vm2997, %v2999, %v2995
    %v3001 = vmul.f32 1.0, %v3000
    %v3002 = vmul.f32 %v3001, %v2773
    %v3003 = vld [vmem:[#allocation14] sm:$0xff]
    %v3004 = vld [vmem:[#allocation14 + $0x8] sm:$0xff]
    %v3005 = vld [vmem:[#allocation14 + $0x10] sm:$0xff]
    %v3006 = vld [vmem:[#allocation14 + $0x18] sm:$0xff]
    %v3007 = vld [vmem:[#allocation14 + $0x20] sm:$0xff]
    %v3008 = vld [vmem:[#allocation14 + $0x28] sm:$0xff]
    %v3009 = vld [vmem:[#allocation14 + $0x30] sm:$0xff]
    %v3010 = vld [vmem:[#allocation14 + $0x38] sm:$0xff]
    %v3011 = vld [vmem:[#allocation14 + $0x40] sm:$0xff]
    %v3012 = vld [vmem:[#allocation14 + $0x48] sm:$0xff]
    %v3013 = vld [vmem:[#allocation14 + $0x50] sm:$0xff]
    %v3014 = vld [vmem:[#allocation14 + $0x58] sm:$0xff]
    %v3015 = vld [vmem:[#allocation14 + $0x60] sm:$0xff]
    %v3016 = vld [vmem:[#allocation14 + $0x68] sm:$0xff]
    %v3017 = vld [vmem:[#allocation14 + $0x70] sm:$0xff]
    %v3018 = vld [vmem:[#allocation14 + $0x78] sm:$0xff]
    %3019 = vmatpush.msra.mxu0 %v3018
    %3020 = vmatpush.msra.mxu0 %v3017
    %3021 = vmatpush.msra.mxu0 %v3016
    %3022 = vmatpush.msra.mxu0 %v3015
    %3023 = vmatpush.msra.mxu0 %v3014
    %3024 = vmatpush.msra.mxu0 %v3013
    %3025 = vmatpush.msra.mxu0 %v3012
    %3026 = vmatpush.msra.mxu0 %v3011
    %3027 = vmatpush.msra.mxu0 %v3010
    %3028 = vmatpush.msra.mxu0 %v3009
    %3029 = vmatpush.msra.mxu0 %v3008
    %3030 = vmatpush.msra.mxu0 %v3007
    %3031 = vmatpush.msra.mxu0 %v3006
    %3032 = vmatpush.msra.mxu0 %v3005
    %3033 = vmatpush.msra.mxu0 %v3004
    %3034 = vmatpush.msra.mxu0 %v3003
    %3035 = vmatmul.f32.gmra.mxu0 %v3002
    %v3036 = vpop.f32.mrf.mxu0
    %v3037 = vadd.f32 0.0, %v3036
    %3038 = vdwg.mxu0
    %v3039 = vadd.f32 %v2880, %v3037
    %v3040 = vld [vmem:[%s11] sm:$0x1]
    %v3042 = vperm.slane %v3040, 0
    %v3044 = vadd.f32 %v3039, %v3042
    %v3045 = vtanh.pop %v3044
    %v3046 = vmul.f32 %v2986, %v2773
    %v3047 = vsub.f32 1.0, %v2986
    %v3048 = vmul.f32 %v3047, %v3045
    %v3049 = vadd.f32 %v3046, %v3048
    %3050 = vst [vmem:[%s527] sm:$0xff] %v3049
    %3051 = vst [vmem:[#allocation16 + $0x28] sm:$0xff] %v3049
    %v3052 = vld [vmem:[#allocation17] sm:$0xff]
    %v3053 = vld [vmem:[#allocation8] sm:$0xff]
    %v3054 = vld [vmem:[#allocation8 + $0x8] sm:$0xff]
    %v3055 = vld [vmem:[#allocation8 + $0x10] sm:$0xff]
    %v3056 = vld [vmem:[#allocation8 + $0x18] sm:$0xff]
    %v3057 = vld [vmem:[#allocation8 + $0x20] sm:$0xff]
    %v3058 = vld [vmem:[#allocation8 + $0x28] sm:$0xff]
    %v3059 = vld [vmem:[#allocation8 + $0x30] sm:$0xff]
    %v3060 = vld [vmem:[#allocation8 + $0x38] sm:$0xff]
    %v3061 = vld [vmem:[#allocation8 + $0x40] sm:$0xff]
    %v3062 = vld [vmem:[#allocation8 + $0x48] sm:$0xff]
    %v3063 = vld [vmem:[#allocation8 + $0x50] sm:$0xff]
    %v3064 = vld [vmem:[#allocation8 + $0x58] sm:$0xff]
    %v3065 = vld [vmem:[#allocation8 + $0x60] sm:$0xff]
    %v3066 = vld [vmem:[#allocation8 + $0x68] sm:$0xff]
    %v3067 = vld [vmem:[#allocation8 + $0x70] sm:$0xff]
    %v3068 = vld [vmem:[#allocation8 + $0x78] sm:$0xff]
    %v3069 = vld [vmem:[#allocation8 + $0x80] sm:$0xff]
    %v3070 = vld [vmem:[#allocation8 + $0x88] sm:$0xff]
    %v3071 = vld [vmem:[#allocation8 + $0x90] sm:$0xff]
    %v3072 = vld [vmem:[#allocation8 + $0x98] sm:$0xff]
    %v3073 = vld [vmem:[#allocation8 + $0xa0] sm:$0xff]
    %v3074 = vld [vmem:[#allocation8 + $0xa8] sm:$0xff]
    %v3075 = vld [vmem:[#allocation8 + $0xb0] sm:$0xff]
    %v3076 = vld [vmem:[#allocation8 + $0xb8] sm:$0xff]
    %v3077 = vld [vmem:[#allocation8 + $0xc0] sm:$0xff]
    %v3078 = vld [vmem:[#allocation8 + $0xc8] sm:$0xff]
    %v3079 = vld [vmem:[#allocation8 + $0xd0] sm:$0xff]
    %v3080 = vld [vmem:[#allocation8 + $0xd8] sm:$0xff]
    %v3081 = vld [vmem:[#allocation8 + $0xe0] sm:$0xff]
    %v3082 = vld [vmem:[#allocation8 + $0xe8] sm:$0xff]
    %v3083 = vld [vmem:[#allocation8 + $0xf0] sm:$0xff]
    %v3084 = vld [vmem:[#allocation8 + $0xf8] sm:$0xff]
    %3085 = vmatpush.msra.mxu0 %v3083
    %3086 = vmatpush.msra.mxu0 %v3081
    %3087 = vmatpush.msra.mxu0 %v3079
    %3088 = vmatpush.msra.mxu0 %v3077
    %3089 = vmatpush.msra.mxu0 %v3075
    %3090 = vmatpush.msra.mxu0 %v3073
    %3091 = vmatpush.msra.mxu0 %v3071
    %3092 = vmatpush.msra.mxu0 %v3069
    %3093 = vmatpush.msra.mxu0 %v3067
    %3094 = vmatpush.msra.mxu0 %v3065
    %3095 = vmatpush.msra.mxu0 %v3063
    %3096 = vmatpush.msra.mxu0 %v3061
    %3097 = vmatpush.msra.mxu0 %v3059
    %3098 = vmatpush.msra.mxu0 %v3057
    %3099 = vmatpush.msra.mxu0 %v3055
    %3100 = vmatpush.msra.mxu0 %v3053
    %3101 = vmatmul.f32.gmra.mxu0 %v3052
    %v3102 = vpop.f32.mrf.mxu0
    %v3103 = vadd.f32 0.0, %v3102
    %3104 = vdwg.mxu0
    %3105 = vmatpush.msra.mxu0 %v3084
    %3106 = vmatpush.msra.mxu0 %v3082
    %3107 = vmatpush.msra.mxu0 %v3080
    %3108 = vmatpush.msra.mxu0 %v3078
    %3109 = vmatpush.msra.mxu0 %v3076
    %3110 = vmatpush.msra.mxu0 %v3074
    %3111 = vmatpush.msra.mxu0 %v3072
    %3112 = vmatpush.msra.mxu0 %v3070
    %3113 = vmatpush.msra.mxu0 %v3068
    %3114 = vmatpush.msra.mxu0 %v3066
    %3115 = vmatpush.msra.mxu0 %v3064
    %3116 = vmatpush.msra.mxu0 %v3062
    %3117 = vmatpush.msra.mxu0 %v3060
    %3118 = vmatpush.msra.mxu0 %v3058
    %3119 = vmatpush.msra.mxu0 %v3056
    %3120 = vmatpush.msra.mxu0 %v3054
    %3121 = vmatmul.f32.gmra.mxu0 %v3052
    %v3122 = vpop.f32.mrf.mxu0
    %v3123 = vadd.f32 0.0, %v3122
    %3124 = vdwg.mxu0
    %v3125 = vadd.f32 %v270, %v3103
    %v3126 = vadd.f32 %v311, %v3123
    %v3127 = vld [vmem:[%s4] sm:$0x3]
    %v3129 = vperm.slane %v3127, 0
    %v3130 = vperm.slane %v3127, 1
    %v3133 = vadd.f32 %v3125, %v3129
    %v3134 = vadd.f32 %v3126, %v3130
    %v3135 = vxor.u32 %v3133, 2147483648
    %v3136 = vxor.u32 %v3134, 2147483648
    %v3137 = vmul.f32 %v3135, 1.442695
    %v3138 = vpow.pop %v3137
    %v3139 = vmul.f32 %v3136, 1.442695
    %v3140 = vpow.pop %v3139
    %v3141 = vadd.f32 %v3138, 1.0
    %v3142 = vadd.f32 %v3140, 1.0
    %v3143 = vrcp.pop %v3141
    %v3144 = vmul.f32 %v3141, %v3143
    %v3145 = vsub.f32 1.0, %v3144
    %v3146 = vmul.f32 %v3143, %v3145
    %v3147 = vadd.f32 %v3143, %v3146
    %vm3148 = vweird.f32 %v3141
    %vm3149 = vweird.f32 %v3143
    %vm3150 = vmor %vm3148, %vm3149
    %v3151 = vsel %vm3150, %v3143, %v3147
    %v3152 = vand.u32 2147483647, %v3141
    %vm3153 = vcmp.eq.f32.partialorder %v3152, 8.507059e+37
    %v3154 = vand.u32 %v3141, 2147483648
    %v3155 = vor.u32 1.1754944e-38, %v3154
    %v3156 = vsel %vm3153, %v3155, %v3151
    %v3157 = vmul.f32 1.0, %v3156
    %v3158 = vrcp.pop %v3142
    %v3159 = vmul.f32 %v3142, %v3158
    %v3160 = vsub.f32 1.0, %v3159
    %v3161 = vmul.f32 %v3158, %v3160
    %v3162 = vadd.f32 %v3158, %v3161
    %vm3163 = vweird.f32 %v3142
    %vm3164 = vweird.f32 %v3158
    %vm3165 = vmor %vm3163, %vm3164
    %v3166 = vsel %vm3165, %v3158, %v3162
    %v3167 = vand.u32 2147483647, %v3142
    %vm3168 = vcmp.eq.f32.partialorder %v3167, 8.507059e+37
    %v3169 = vand.u32 %v3142, 2147483648
    %v3170 = vor.u32 1.1754944e-38, %v3169
    %v3171 = vsel %vm3168, %v3170, %v3166
    %v3172 = vmul.f32 1.0, %v3171
    %v3173 = vmul.f32 %v3172, %v3052
    %v3174 = vld [vmem:[#allocation10] sm:$0xff]
    %v3175 = vld [vmem:[#allocation10 + $0x8] sm:$0xff]
    %v3176 = vld [vmem:[#allocation10 + $0x10] sm:$0xff]
    %v3177 = vld [vmem:[#allocation10 + $0x18] sm:$0xff]
    %v3178 = vld [vmem:[#allocation10 + $0x20] sm:$0xff]
    %v3179 = vld [vmem:[#allocation10 + $0x28] sm:$0xff]
    %v3180 = vld [vmem:[#allocation10 + $0x30] sm:$0xff]
    %v3181 = vld [vmem:[#allocation10 + $0x38] sm:$0xff]
    %v3182 = vld [vmem:[#allocation10 + $0x40] sm:$0xff]
    %v3183 = vld [vmem:[#allocation10 + $0x48] sm:$0xff]
    %v3184 = vld [vmem:[#allocation10 + $0x50] sm:$0xff]
    %v3185 = vld [vmem:[#allocation10 + $0x58] sm:$0xff]
    %v3186 = vld [vmem:[#allocation10 + $0x60] sm:$0xff]
    %v3187 = vld [vmem:[#allocation10 + $0x68] sm:$0xff]
    %v3188 = vld [vmem:[#allocation10 + $0x70] sm:$0xff]
    %v3189 = vld [vmem:[#allocation10 + $0x78] sm:$0xff]
    %3190 = vmatpush.msra.mxu0 %v3189
    %3191 = vmatpush.msra.mxu0 %v3188
    %3192 = vmatpush.msra.mxu0 %v3187
    %3193 = vmatpush.msra.mxu0 %v3186
    %3194 = vmatpush.msra.mxu0 %v3185
    %3195 = vmatpush.msra.mxu0 %v3184
    %3196 = vmatpush.msra.mxu0 %v3183
    %3197 = vmatpush.msra.mxu0 %v3182
    %3198 = vmatpush.msra.mxu0 %v3181
    %3199 = vmatpush.msra.mxu0 %v3180
    %3200 = vmatpush.msra.mxu0 %v3179
    %3201 = vmatpush.msra.mxu0 %v3178
    %3202 = vmatpush.msra.mxu0 %v3177
    %3203 = vmatpush.msra.mxu0 %v3176
    %3204 = vmatpush.msra.mxu0 %v3175
    %3205 = vmatpush.msra.mxu0 %v3174
    %3206 = vmatmul.f32.gmra.mxu0 %v3173
    %v3207 = vpop.f32.mrf.mxu0
    %v3208 = vadd.f32 0.0, %v3207
    %3209 = vdwg.mxu0
    %v3210 = vadd.f32 %v352, %v3208
    %v3211 = vld [vmem:[%s6] sm:$0x1]
    %v3213 = vperm.slane %v3211, 0
    %v3215 = vadd.f32 %v3210, %v3213
    %v3216 = vtanh.pop %v3215
    %v3217 = vmul.f32 %v3157, %v3052
    %v3218 = vsub.f32 1.0, %v3157
    %v3219 = vmul.f32 %v3218, %v3216
    %v3220 = vadd.f32 %v3217, %v3219
    %3221 = vst [vmem:[#allocation17] sm:$0xff] %v3220
    %v3222 = vld [vmem:[%s527] sm:$0xff]
    %v3223 = vld [vmem:[#allocation11] sm:$0xff]
    %v3224 = vld [vmem:[#allocation11 + $0x8] sm:$0xff]
    %v3225 = vld [vmem:[#allocation11 + $0x10] sm:$0xff]
    %v3226 = vld [vmem:[#allocation11 + $0x18] sm:$0xff]
    %v3227 = vld [vmem:[#allocation11 + $0x20] sm:$0xff]
    %v3228 = vld [vmem:[#allocation11 + $0x28] sm:$0xff]
    %v3229 = vld [vmem:[#allocation11 + $0x30] sm:$0xff]
    %v3230 = vld [vmem:[#allocation11 + $0x38] sm:$0xff]
    %v3231 = vld [vmem:[#allocation11 + $0x40] sm:$0xff]
    %v3232 = vld [vmem:[#allocation11 + $0x48] sm:$0xff]
    %v3233 = vld [vmem:[#allocation11 + $0x50] sm:$0xff]
    %v3234 = vld [vmem:[#allocation11 + $0x58] sm:$0xff]
    %v3235 = vld [vmem:[#allocation11 + $0x60] sm:$0xff]
    %v3236 = vld [vmem:[#allocation11 + $0x68] sm:$0xff]
    %v3237 = vld [vmem:[#allocation11 + $0x70] sm:$0xff]
    %v3238 = vld [vmem:[#allocation11 + $0x78] sm:$0xff]
    %v3239 = vld [vmem:[#allocation11 + $0x80] sm:$0xff]
    %v3240 = vld [vmem:[#allocation11 + $0x88] sm:$0xff]
    %v3241 = vld [vmem:[#allocation11 + $0x90] sm:$0xff]
    %v3242 = vld [vmem:[#allocation11 + $0x98] sm:$0xff]
    %v3243 = vld [vmem:[#allocation11 + $0xa0] sm:$0xff]
    %v3244 = vld [vmem:[#allocation11 + $0xa8] sm:$0xff]
    %v3245 = vld [vmem:[#allocation11 + $0xb0] sm:$0xff]
    %v3246 = vld [vmem:[#allocation11 + $0xb8] sm:$0xff]
    %v3247 = vld [vmem:[#allocation11 + $0xc0] sm:$0xff]
    %v3248 = vld [vmem:[#allocation11 + $0xc8] sm:$0xff]
    %v3249 = vld [vmem:[#allocation11 + $0xd0] sm:$0xff]
    %v3250 = vld [vmem:[#allocation11 + $0xd8] sm:$0xff]
    %v3251 = vld [vmem:[#allocation11 + $0xe0] sm:$0xff]
    %v3252 = vld [vmem:[#allocation11 + $0xe8] sm:$0xff]
    %v3253 = vld [vmem:[#allocation11 + $0xf0] sm:$0xff]
    %v3254 = vld [vmem:[#allocation11 + $0xf8] sm:$0xff]
    %v3255 = vld [vmem:[#allocation11 + $0x100] sm:$0xff]
    %v3256 = vld [vmem:[#allocation11 + $0x108] sm:$0xff]
    %v3257 = vld [vmem:[#allocation11 + $0x110] sm:$0xff]
    %v3258 = vld [vmem:[#allocation11 + $0x118] sm:$0xff]
    %v3259 = vld [vmem:[#allocation11 + $0x120] sm:$0xff]
    %v3260 = vld [vmem:[#allocation11 + $0x128] sm:$0xff]
    %v3261 = vld [vmem:[#allocation11 + $0x130] sm:$0xff]
    %v3262 = vld [vmem:[#allocation11 + $0x138] sm:$0xff]
    %v3263 = vld [vmem:[#allocation11 + $0x140] sm:$0xff]
    %v3264 = vld [vmem:[#allocation11 + $0x148] sm:$0xff]
    %v3265 = vld [vmem:[#allocation11 + $0x150] sm:$0xff]
    %v3266 = vld [vmem:[#allocation11 + $0x158] sm:$0xff]
    %v3267 = vld [vmem:[#allocation11 + $0x160] sm:$0xff]
    %v3268 = vld [vmem:[#allocation11 + $0x168] sm:$0xff]
    %v3269 = vld [vmem:[#allocation11 + $0x170] sm:$0xff]
    %v3270 = vld [vmem:[#allocation11 + $0x178] sm:$0xff]
    %3271 = vmatpush.msra.mxu0 %v3268
    %3272 = vmatpush.msra.mxu0 %v3265
    %3273 = vmatpush.msra.mxu0 %v3262
    %3274 = vmatpush.msra.mxu0 %v3259
    %3275 = vmatpush.msra.mxu0 %v3256
    %3276 = vmatpush.msra.mxu0 %v3253
    %3277 = vmatpush.msra.mxu0 %v3250
    %3278 = vmatpush.msra.mxu0 %v3247
    %3279 = vmatpush.msra.mxu0 %v3244
    %3280 = vmatpush.msra.mxu0 %v3241
    %3281 = vmatpush.msra.mxu0 %v3238
    %3282 = vmatpush.msra.mxu0 %v3235
    %3283 = vmatpush.msra.mxu0 %v3232
    %3284 = vmatpush.msra.mxu0 %v3229
    %3285 = vmatpush.msra.mxu0 %v3226
    %3286 = vmatpush.msra.mxu0 %v3223
    %3287 = vmatmul.f32.gmra.mxu0 %v3220
    %v3288 = vpop.f32.mrf.mxu0
    %v3289 = vadd.f32 0.0, %v3288
    %3290 = vdwg.mxu0
    %3291 = vmatpush.msra.mxu0 %v3269
    %3292 = vmatpush.msra.mxu0 %v3266
    %3293 = vmatpush.msra.mxu0 %v3263
    %3294 = vmatpush.msra.mxu0 %v3260
    %3295 = vmatpush.msra.mxu0 %v3257
    %3296 = vmatpush.msra.mxu0 %v3254
    %3297 = vmatpush.msra.mxu0 %v3251
    %3298 = vmatpush.msra.mxu0 %v3248
    %3299 = vmatpush.msra.mxu0 %v3245
    %3300 = vmatpush.msra.mxu0 %v3242
    %3301 = vmatpush.msra.mxu0 %v3239
    %3302 = vmatpush.msra.mxu0 %v3236
    %3303 = vmatpush.msra.mxu0 %v3233
    %3304 = vmatpush.msra.mxu0 %v3230
    %3305 = vmatpush.msra.mxu0 %v3227
    %3306 = vmatpush.msra.mxu0 %v3224
    %3307 = vmatmul.f32.gmra.mxu0 %v3220
    %v3308 = vpop.f32.mrf.mxu0
    %v3309 = vadd.f32 0.0, %v3308
    %3310 = vdwg.mxu0
    %3311 = vmatpush.msra.mxu0 %v3270
    %3312 = vmatpush.msra.mxu0 %v3267
    %3313 = vmatpush.msra.mxu0 %v3264
    %3314 = vmatpush.msra.mxu0 %v3261
    %3315 = vmatpush.msra.mxu0 %v3258
    %3316 = vmatpush.msra.mxu0 %v3255
    %3317 = vmatpush.msra.mxu0 %v3252
    %3318 = vmatpush.msra.mxu0 %v3249
    %3319 = vmatpush.msra.mxu0 %v3246
    %3320 = vmatpush.msra.mxu0 %v3243
    %3321 = vmatpush.msra.mxu0 %v3240
    %3322 = vmatpush.msra.mxu0 %v3237
    %3323 = vmatpush.msra.mxu0 %v3234
    %3324 = vmatpush.msra.mxu0 %v3231
    %3325 = vmatpush.msra.mxu0 %v3228
    %3326 = vmatpush.msra.mxu0 %v3225
    %3327 = vmatmul.f32.gmra.mxu0 %v3220
    %v3328 = vpop.f32.mrf.mxu0
    %v3329 = vadd.f32 0.0, %v3328
    %3330 = vdwg.mxu0
    %v3331 = vld [vmem:[#allocation13] sm:$0xff]
    %v3332 = vld [vmem:[#allocation13 + $0x8] sm:$0xff]
    %v3333 = vld [vmem:[#allocation13 + $0x10] sm:$0xff]
    %v3334 = vld [vmem:[#allocation13 + $0x18] sm:$0xff]
    %v3335 = vld [vmem:[#allocation13 + $0x20] sm:$0xff]
    %v3336 = vld [vmem:[#allocation13 + $0x28] sm:$0xff]
    %v3337 = vld [vmem:[#allocation13 + $0x30] sm:$0xff]
    %v3338 = vld [vmem:[#allocation13 + $0x38] sm:$0xff]
    %v3339 = vld [vmem:[#allocation13 + $0x40] sm:$0xff]
    %v3340 = vld [vmem:[#allocation13 + $0x48] sm:$0xff]
    %v3341 = vld [vmem:[#allocation13 + $0x50] sm:$0xff]
    %v3342 = vld [vmem:[#allocation13 + $0x58] sm:$0xff]
    %v3343 = vld [vmem:[#allocation13 + $0x60] sm:$0xff]
    %v3344 = vld [vmem:[#allocation13 + $0x68] sm:$0xff]
    %v3345 = vld [vmem:[#allocation13 + $0x70] sm:$0xff]
    %v3346 = vld [vmem:[#allocation13 + $0x78] sm:$0xff]
    %v3347 = vld [vmem:[#allocation13 + $0x80] sm:$0xff]
    %v3348 = vld [vmem:[#allocation13 + $0x88] sm:$0xff]
    %v3349 = vld [vmem:[#allocation13 + $0x90] sm:$0xff]
    %v3350 = vld [vmem:[#allocation13 + $0x98] sm:$0xff]
    %v3351 = vld [vmem:[#allocation13 + $0xa0] sm:$0xff]
    %v3352 = vld [vmem:[#allocation13 + $0xa8] sm:$0xff]
    %v3353 = vld [vmem:[#allocation13 + $0xb0] sm:$0xff]
    %v3354 = vld [vmem:[#allocation13 + $0xb8] sm:$0xff]
    %v3355 = vld [vmem:[#allocation13 + $0xc0] sm:$0xff]
    %v3356 = vld [vmem:[#allocation13 + $0xc8] sm:$0xff]
    %v3357 = vld [vmem:[#allocation13 + $0xd0] sm:$0xff]
    %v3358 = vld [vmem:[#allocation13 + $0xd8] sm:$0xff]
    %v3359 = vld [vmem:[#allocation13 + $0xe0] sm:$0xff]
    %v3360 = vld [vmem:[#allocation13 + $0xe8] sm:$0xff]
    %v3361 = vld [vmem:[#allocation13 + $0xf0] sm:$0xff]
    %v3362 = vld [vmem:[#allocation13 + $0xf8] sm:$0xff]
    %3363 = vmatpush.msra.mxu0 %v3361
    %3364 = vmatpush.msra.mxu0 %v3359
    %3365 = vmatpush.msra.mxu0 %v3357
    %3366 = vmatpush.msra.mxu0 %v3355
    %3367 = vmatpush.msra.mxu0 %v3353
    %3368 = vmatpush.msra.mxu0 %v3351
    %3369 = vmatpush.msra.mxu0 %v3349
    %3370 = vmatpush.msra.mxu0 %v3347
    %3371 = vmatpush.msra.mxu0 %v3345
    %3372 = vmatpush.msra.mxu0 %v3343
    %3373 = vmatpush.msra.mxu0 %v3341
    %3374 = vmatpush.msra.mxu0 %v3339
    %3375 = vmatpush.msra.mxu0 %v3337
    %3376 = vmatpush.msra.mxu0 %v3335
    %3377 = vmatpush.msra.mxu0 %v3333
    %3378 = vmatpush.msra.mxu0 %v3331
    %3379 = vmatmul.f32.gmra.mxu0 %v3222
    %v3380 = vpop.f32.mrf.mxu0
    %v3381 = vadd.f32 0.0, %v3380
    %3382 = vdwg.mxu0
    %3383 = vmatpush.msra.mxu0 %v3362
    %3384 = vmatpush.msra.mxu0 %v3360
    %3385 = vmatpush.msra.mxu0 %v3358
    %3386 = vmatpush.msra.mxu0 %v3356
    %3387 = vmatpush.msra.mxu0 %v3354
    %3388 = vmatpush.msra.mxu0 %v3352
    %3389 = vmatpush.msra.mxu0 %v3350
    %3390 = vmatpush.msra.mxu0 %v3348
    %3391 = vmatpush.msra.mxu0 %v3346
    %3392 = vmatpush.msra.mxu0 %v3344
    %3393 = vmatpush.msra.mxu0 %v3342
    %3394 = vmatpush.msra.mxu0 %v3340
    %3395 = vmatpush.msra.mxu0 %v3338
    %3396 = vmatpush.msra.mxu0 %v3336
    %3397 = vmatpush.msra.mxu0 %v3334
    %3398 = vmatpush.msra.mxu0 %v3332
    %3399 = vmatmul.f32.gmra.mxu0 %v3222
    %v3400 = vpop.f32.mrf.mxu0
    %v3401 = vadd.f32 0.0, %v3400
    %3402 = vdwg.mxu0
    %v3403 = vadd.f32 %v3289, %v3381
    %v3404 = vadd.f32 %v3309, %v3401
    %v3405 = vld [vmem:[%s9] sm:$0x3]
    %v3407 = vperm.slane %v3405, 0
    %v3408 = vperm.slane %v3405, 1
    %v3411 = vadd.f32 %v3403, %v3407
    %v3412 = vadd.f32 %v3404, %v3408
    %v3413 = vxor.u32 %v3411, 2147483648
    %v3414 = vxor.u32 %v3412, 2147483648
    %v3415 = vmul.f32 %v3413, 1.442695
    %v3416 = vpow.pop %v3415
    %v3417 = vmul.f32 %v3414, 1.442695
    %v3418 = vpow.pop %v3417
    %v3419 = vadd.f32 %v3416, 1.0
    %v3420 = vadd.f32 %v3418, 1.0
    %v3421 = vrcp.pop %v3419
    %v3422 = vmul.f32 %v3419, %v3421
    %v3423 = vsub.f32 1.0, %v3422
    %v3424 = vmul.f32 %v3421, %v3423
    %v3425 = vadd.f32 %v3421, %v3424
    %vm3426 = vweird.f32 %v3419
    %vm3427 = vweird.f32 %v3421
    %vm3428 = vmor %vm3426, %vm3427
    %v3429 = vsel %vm3428, %v3421, %v3425
    %v3430 = vand.u32 2147483647, %v3419
    %vm3431 = vcmp.eq.f32.partialorder %v3430, 8.507059e+37
    %v3432 = vand.u32 %v3419, 2147483648
    %v3433 = vor.u32 1.1754944e-38, %v3432
    %v3434 = vsel %vm3431, %v3433, %v3429
    %v3435 = vmul.f32 1.0, %v3434
    %v3436 = vrcp.pop %v3420
    %v3437 = vmul.f32 %v3420, %v3436
    %v3438 = vsub.f32 1.0, %v3437
    %v3439 = vmul.f32 %v3436, %v3438
    %v3440 = vadd.f32 %v3436, %v3439
    %vm3441 = vweird.f32 %v3420
    %vm3442 = vweird.f32 %v3436
    %vm3443 = vmor %vm3441, %vm3442
    %v3444 = vsel %vm3443, %v3436, %v3440
    %v3445 = vand.u32 2147483647, %v3420
    %vm3446 = vcmp.eq.f32.partialorder %v3445, 8.507059e+37
    %v3447 = vand.u32 %v3420, 2147483648
    %v3448 = vor.u32 1.1754944e-38, %v3447
    %v3449 = vsel %vm3446, %v3448, %v3444
    %v3450 = vmul.f32 1.0, %v3449
    %v3451 = vmul.f32 %v3450, %v3222
    %v3452 = vld [vmem:[#allocation14] sm:$0xff]
    %v3453 = vld [vmem:[#allocation14 + $0x8] sm:$0xff]
    %v3454 = vld [vmem:[#allocation14 + $0x10] sm:$0xff]
    %v3455 = vld [vmem:[#allocation14 + $0x18] sm:$0xff]
    %v3456 = vld [vmem:[#allocation14 + $0x20] sm:$0xff]
    %v3457 = vld [vmem:[#allocation14 + $0x28] sm:$0xff]
    %v3458 = vld [vmem:[#allocation14 + $0x30] sm:$0xff]
    %v3459 = vld [vmem:[#allocation14 + $0x38] sm:$0xff]
    %v3460 = vld [vmem:[#allocation14 + $0x40] sm:$0xff]
    %v3461 = vld [vmem:[#allocation14 + $0x48] sm:$0xff]
    %v3462 = vld [vmem:[#allocation14 + $0x50] sm:$0xff]
    %v3463 = vld [vmem:[#allocation14 + $0x58] sm:$0xff]
    %v3464 = vld [vmem:[#allocation14 + $0x60] sm:$0xff]
    %v3465 = vld [vmem:[#allocation14 + $0x68] sm:$0xff]
    %v3466 = vld [vmem:[#allocation14 + $0x70] sm:$0xff]
    %v3467 = vld [vmem:[#allocation14 + $0x78] sm:$0xff]
    %3468 = vmatpush.msra.mxu0 %v3467
    %3469 = vmatpush.msra.mxu0 %v3466
    %3470 = vmatpush.msra.mxu0 %v3465
    %3471 = vmatpush.msra.mxu0 %v3464
    %3472 = vmatpush.msra.mxu0 %v3463
    %3473 = vmatpush.msra.mxu0 %v3462
    %3474 = vmatpush.msra.mxu0 %v3461
    %3475 = vmatpush.msra.mxu0 %v3460
    %3476 = vmatpush.msra.mxu0 %v3459
    %3477 = vmatpush.msra.mxu0 %v3458
    %3478 = vmatpush.msra.mxu0 %v3457
    %3479 = vmatpush.msra.mxu0 %v3456
    %3480 = vmatpush.msra.mxu0 %v3455
    %3481 = vmatpush.msra.mxu0 %v3454
    %3482 = vmatpush.msra.mxu0 %v3453
    %3483 = vmatpush.msra.mxu0 %v3452
    %3484 = vmatmul.f32.gmra.mxu0 %v3451
    %v3485 = vpop.f32.mrf.mxu0
    %v3486 = vadd.f32 0.0, %v3485
    %3487 = vdwg.mxu0
    %v3488 = vadd.f32 %v3329, %v3486
    %v3489 = vld [vmem:[%s11] sm:$0x1]
    %v3491 = vperm.slane %v3489, 0
    %v3493 = vadd.f32 %v3488, %v3491
    %v3494 = vtanh.pop %v3493
    %v3495 = vmul.f32 %v3435, %v3222
    %v3496 = vsub.f32 1.0, %v3435
    %v3497 = vmul.f32 %v3496, %v3494
    %v3498 = vadd.f32 %v3495, %v3497
    %3499 = vst [vmem:[%s527] sm:$0xff] %v3498
    %3500 = vst [vmem:[#allocation16 + $0x30] sm:$0xff] %v3498
    %v3501 = vld [vmem:[#allocation17] sm:$0xff]
    %v3502 = vld [vmem:[#allocation8] sm:$0xff]
    %v3503 = vld [vmem:[#allocation8 + $0x8] sm:$0xff]
    %v3504 = vld [vmem:[#allocation8 + $0x10] sm:$0xff]
    %v3505 = vld [vmem:[#allocation8 + $0x18] sm:$0xff]
    %v3506 = vld [vmem:[#allocation8 + $0x20] sm:$0xff]
    %v3507 = vld [vmem:[#allocation8 + $0x28] sm:$0xff]
    %v3508 = vld [vmem:[#allocation8 + $0x30] sm:$0xff]
    %v3509 = vld [vmem:[#allocation8 + $0x38] sm:$0xff]
    %v3510 = vld [vmem:[#allocation8 + $0x40] sm:$0xff]
    %v3511 = vld [vmem:[#allocation8 + $0x48] sm:$0xff]
    %v3512 = vld [vmem:[#allocation8 + $0x50] sm:$0xff]
    %v3513 = vld [vmem:[#allocation8 + $0x58] sm:$0xff]
    %v3514 = vld [vmem:[#allocation8 + $0x60] sm:$0xff]
    %v3515 = vld [vmem:[#allocation8 + $0x68] sm:$0xff]
    %v3516 = vld [vmem:[#allocation8 + $0x70] sm:$0xff]
    %v3517 = vld [vmem:[#allocation8 + $0x78] sm:$0xff]
    %v3518 = vld [vmem:[#allocation8 + $0x80] sm:$0xff]
    %v3519 = vld [vmem:[#allocation8 + $0x88] sm:$0xff]
    %v3520 = vld [vmem:[#allocation8 + $0x90] sm:$0xff]
    %v3521 = vld [vmem:[#allocation8 + $0x98] sm:$0xff]
    %v3522 = vld [vmem:[#allocation8 + $0xa0] sm:$0xff]
    %v3523 = vld [vmem:[#allocation8 + $0xa8] sm:$0xff]
    %v3524 = vld [vmem:[#allocation8 + $0xb0] sm:$0xff]
    %v3525 = vld [vmem:[#allocation8 + $0xb8] sm:$0xff]
    %v3526 = vld [vmem:[#allocation8 + $0xc0] sm:$0xff]
    %v3527 = vld [vmem:[#allocation8 + $0xc8] sm:$0xff]
    %v3528 = vld [vmem:[#allocation8 + $0xd0] sm:$0xff]
    %v3529 = vld [vmem:[#allocation8 + $0xd8] sm:$0xff]
    %v3530 = vld [vmem:[#allocation8 + $0xe0] sm:$0xff]
    %v3531 = vld [vmem:[#allocation8 + $0xe8] sm:$0xff]
    %v3532 = vld [vmem:[#allocation8 + $0xf0] sm:$0xff]
    %v3533 = vld [vmem:[#allocation8 + $0xf8] sm:$0xff]
    %3534 = vmatpush.msra.mxu0 %v3532
    %3535 = vmatpush.msra.mxu0 %v3530
    %3536 = vmatpush.msra.mxu0 %v3528
    %3537 = vmatpush.msra.mxu0 %v3526
    %3538 = vmatpush.msra.mxu0 %v3524
    %3539 = vmatpush.msra.mxu0 %v3522
    %3540 = vmatpush.msra.mxu0 %v3520
    %3541 = vmatpush.msra.mxu0 %v3518
    %3542 = vmatpush.msra.mxu0 %v3516
    %3543 = vmatpush.msra.mxu0 %v3514
    %3544 = vmatpush.msra.mxu0 %v3512
    %3545 = vmatpush.msra.mxu0 %v3510
    %3546 = vmatpush.msra.mxu0 %v3508
    %3547 = vmatpush.msra.mxu0 %v3506
    %3548 = vmatpush.msra.mxu0 %v3504
    %3549 = vmatpush.msra.mxu0 %v3502
    %3550 = vmatmul.f32.gmra.mxu0 %v3501
    %v3551 = vpop.f32.mrf.mxu0
    %v3552 = vadd.f32 0.0, %v3551
    %3553 = vdwg.mxu0
    %3554 = vmatpush.msra.mxu0 %v3533
    %3555 = vmatpush.msra.mxu0 %v3531
    %3556 = vmatpush.msra.mxu0 %v3529
    %3557 = vmatpush.msra.mxu0 %v3527
    %3558 = vmatpush.msra.mxu0 %v3525
    %3559 = vmatpush.msra.mxu0 %v3523
    %3560 = vmatpush.msra.mxu0 %v3521
    %3561 = vmatpush.msra.mxu0 %v3519
    %3562 = vmatpush.msra.mxu0 %v3517
    %3563 = vmatpush.msra.mxu0 %v3515
    %3564 = vmatpush.msra.mxu0 %v3513
    %3565 = vmatpush.msra.mxu0 %v3511
    %3566 = vmatpush.msra.mxu0 %v3509
    %3567 = vmatpush.msra.mxu0 %v3507
    %3568 = vmatpush.msra.mxu0 %v3505
    %3569 = vmatpush.msra.mxu0 %v3503
    %3570 = vmatmul.f32.gmra.mxu0 %v3501
    %v3571 = vpop.f32.mrf.mxu0
    %v3572 = vadd.f32 0.0, %v3571
    %3573 = vdwg.mxu0
    %v3574 = vadd.f32 %v273, %v3552
    %v3575 = vadd.f32 %v314, %v3572
    %v3576 = vld [vmem:[%s4] sm:$0x3]
    %v3578 = vperm.slane %v3576, 0
    %v3579 = vperm.slane %v3576, 1
    %v3582 = vadd.f32 %v3574, %v3578
    %v3583 = vadd.f32 %v3575, %v3579
    %v3584 = vxor.u32 %v3582, 2147483648
    %v3585 = vxor.u32 %v3583, 2147483648
    %v3586 = vmul.f32 %v3584, 1.442695
    %v3587 = vpow.pop %v3586
    %v3588 = vmul.f32 %v3585, 1.442695
    %v3589 = vpow.pop %v3588
    %v3590 = vadd.f32 %v3587, 1.0
    %v3591 = vadd.f32 %v3589, 1.0
    %v3592 = vrcp.pop %v3590
    %v3593 = vmul.f32 %v3590, %v3592
    %v3594 = vsub.f32 1.0, %v3593
    %v3595 = vmul.f32 %v3592, %v3594
    %v3596 = vadd.f32 %v3592, %v3595
    %vm3597 = vweird.f32 %v3590
    %vm3598 = vweird.f32 %v3592
    %vm3599 = vmor %vm3597, %vm3598
    %v3600 = vsel %vm3599, %v3592, %v3596
    %v3601 = vand.u32 2147483647, %v3590
    %vm3602 = vcmp.eq.f32.partialorder %v3601, 8.507059e+37
    %v3603 = vand.u32 %v3590, 2147483648
    %v3604 = vor.u32 1.1754944e-38, %v3603
    %v3605 = vsel %vm3602, %v3604, %v3600
    %v3606 = vmul.f32 1.0, %v3605
    %v3607 = vrcp.pop %v3591
    %v3608 = vmul.f32 %v3591, %v3607
    %v3609 = vsub.f32 1.0, %v3608
    %v3610 = vmul.f32 %v3607, %v3609
    %v3611 = vadd.f32 %v3607, %v3610
    %vm3612 = vweird.f32 %v3591
    %vm3613 = vweird.f32 %v3607
    %vm3614 = vmor %vm3612, %vm3613
    %v3615 = vsel %vm3614, %v3607, %v3611
    %v3616 = vand.u32 2147483647, %v3591
    %vm3617 = vcmp.eq.f32.partialorder %v3616, 8.507059e+37
    %v3618 = vand.u32 %v3591, 2147483648
    %v3619 = vor.u32 1.1754944e-38, %v3618
    %v3620 = vsel %vm3617, %v3619, %v3615
    %v3621 = vmul.f32 1.0, %v3620
    %v3622 = vmul.f32 %v3621, %v3501
    %v3623 = vld [vmem:[#allocation10] sm:$0xff]
    %v3624 = vld [vmem:[#allocation10 + $0x8] sm:$0xff]
    %v3625 = vld [vmem:[#allocation10 + $0x10] sm:$0xff]
    %v3626 = vld [vmem:[#allocation10 + $0x18] sm:$0xff]
    %v3627 = vld [vmem:[#allocation10 + $0x20] sm:$0xff]
    %v3628 = vld [vmem:[#allocation10 + $0x28] sm:$0xff]
    %v3629 = vld [vmem:[#allocation10 + $0x30] sm:$0xff]
    %v3630 = vld [vmem:[#allocation10 + $0x38] sm:$0xff]
    %v3631 = vld [vmem:[#allocation10 + $0x40] sm:$0xff]
    %v3632 = vld [vmem:[#allocation10 + $0x48] sm:$0xff]
    %v3633 = vld [vmem:[#allocation10 + $0x50] sm:$0xff]
    %v3634 = vld [vmem:[#allocation10 + $0x58] sm:$0xff]
    %v3635 = vld [vmem:[#allocation10 + $0x60] sm:$0xff]
    %v3636 = vld [vmem:[#allocation10 + $0x68] sm:$0xff]
    %v3637 = vld [vmem:[#allocation10 + $0x70] sm:$0xff]
    %v3638 = vld [vmem:[#allocation10 + $0x78] sm:$0xff]
    %3639 = vmatpush.msra.mxu0 %v3638
    %3640 = vmatpush.msra.mxu0 %v3637
    %3641 = vmatpush.msra.mxu0 %v3636
    %3642 = vmatpush.msra.mxu0 %v3635
    %3643 = vmatpush.msra.mxu0 %v3634
    %3644 = vmatpush.msra.mxu0 %v3633
    %3645 = vmatpush.msra.mxu0 %v3632
    %3646 = vmatpush.msra.mxu0 %v3631
    %3647 = vmatpush.msra.mxu0 %v3630
    %3648 = vmatpush.msra.mxu0 %v3629
    %3649 = vmatpush.msra.mxu0 %v3628
    %3650 = vmatpush.msra.mxu0 %v3627
    %3651 = vmatpush.msra.mxu0 %v3626
    %3652 = vmatpush.msra.mxu0 %v3625
    %3653 = vmatpush.msra.mxu0 %v3624
    %3654 = vmatpush.msra.mxu0 %v3623
    %3655 = vmatmul.f32.gmra.mxu0 %v3622
    %v3656 = vpop.f32.mrf.mxu0
    %v3657 = vadd.f32 0.0, %v3656
    %3658 = vdwg.mxu0
    %v3659 = vadd.f32 %v355, %v3657
    %v3660 = vld [vmem:[%s6] sm:$0x1]
    %v3662 = vperm.slane %v3660, 0
    %v3664 = vadd.f32 %v3659, %v3662
    %v3665 = vtanh.pop %v3664
    %v3666 = vmul.f32 %v3606, %v3501
    %v3667 = vsub.f32 1.0, %v3606
    %v3668 = vmul.f32 %v3667, %v3665
    %v3669 = vadd.f32 %v3666, %v3668
    %3670 = vst [vmem:[#allocation17] sm:$0xff] %v3669
    %v3671 = vld [vmem:[%s527] sm:$0xff]
    %v3672 = vld [vmem:[#allocation11] sm:$0xff]
    %v3673 = vld [vmem:[#allocation11 + $0x8] sm:$0xff]
    %v3674 = vld [vmem:[#allocation11 + $0x10] sm:$0xff]
    %v3675 = vld [vmem:[#allocation11 + $0x18] sm:$0xff]
    %v3676 = vld [vmem:[#allocation11 + $0x20] sm:$0xff]
    %v3677 = vld [vmem:[#allocation11 + $0x28] sm:$0xff]
    %v3678 = vld [vmem:[#allocation11 + $0x30] sm:$0xff]
    %v3679 = vld [vmem:[#allocation11 + $0x38] sm:$0xff]
    %v3680 = vld [vmem:[#allocation11 + $0x40] sm:$0xff]
    %v3681 = vld [vmem:[#allocation11 + $0x48] sm:$0xff]
    %v3682 = vld [vmem:[#allocation11 + $0x50] sm:$0xff]
    %v3683 = vld [vmem:[#allocation11 + $0x58] sm:$0xff]
    %v3684 = vld [vmem:[#allocation11 + $0x60] sm:$0xff]
    %v3685 = vld [vmem:[#allocation11 + $0x68] sm:$0xff]
    %v3686 = vld [vmem:[#allocation11 + $0x70] sm:$0xff]
    %v3687 = vld [vmem:[#allocation11 + $0x78] sm:$0xff]
    %v3688 = vld [vmem:[#allocation11 + $0x80] sm:$0xff]
    %v3689 = vld [vmem:[#allocation11 + $0x88] sm:$0xff]
    %v3690 = vld [vmem:[#allocation11 + $0x90] sm:$0xff]
    %v3691 = vld [vmem:[#allocation11 + $0x98] sm:$0xff]
    %v3692 = vld [vmem:[#allocation11 + $0xa0] sm:$0xff]
    %v3693 = vld [vmem:[#allocation11 + $0xa8] sm:$0xff]
    %v3694 = vld [vmem:[#allocation11 + $0xb0] sm:$0xff]
    %v3695 = vld [vmem:[#allocation11 + $0xb8] sm:$0xff]
    %v3696 = vld [vmem:[#allocation11 + $0xc0] sm:$0xff]
    %v3697 = vld [vmem:[#allocation11 + $0xc8] sm:$0xff]
    %v3698 = vld [vmem:[#allocation11 + $0xd0] sm:$0xff]
    %v3699 = vld [vmem:[#allocation11 + $0xd8] sm:$0xff]
    %v3700 = vld [vmem:[#allocation11 + $0xe0] sm:$0xff]
    %v3701 = vld [vmem:[#allocation11 + $0xe8] sm:$0xff]
    %v3702 = vld [vmem:[#allocation11 + $0xf0] sm:$0xff]
    %v3703 = vld [vmem:[#allocation11 + $0xf8] sm:$0xff]
    %v3704 = vld [vmem:[#allocation11 + $0x100] sm:$0xff]
    %v3705 = vld [vmem:[#allocation11 + $0x108] sm:$0xff]
    %v3706 = vld [vmem:[#allocation11 + $0x110] sm:$0xff]
    %v3707 = vld [vmem:[#allocation11 + $0x118] sm:$0xff]
    %v3708 = vld [vmem:[#allocation11 + $0x120] sm:$0xff]
    %v3709 = vld [vmem:[#allocation11 + $0x128] sm:$0xff]
    %v3710 = vld [vmem:[#allocation11 + $0x130] sm:$0xff]
    %v3711 = vld [vmem:[#allocation11 + $0x138] sm:$0xff]
    %v3712 = vld [vmem:[#allocation11 + $0x140] sm:$0xff]
    %v3713 = vld [vmem:[#allocation11 + $0x148] sm:$0xff]
    %v3714 = vld [vmem:[#allocation11 + $0x150] sm:$0xff]
    %v3715 = vld [vmem:[#allocation11 + $0x158] sm:$0xff]
    %v3716 = vld [vmem:[#allocation11 + $0x160] sm:$0xff]
    %v3717 = vld [vmem:[#allocation11 + $0x168] sm:$0xff]
    %v3718 = vld [vmem:[#allocation11 + $0x170] sm:$0xff]
    %v3719 = vld [vmem:[#allocation11 + $0x178] sm:$0xff]
    %3720 = vmatpush.msra.mxu0 %v3717
    %3721 = vmatpush.msra.mxu0 %v3714
    %3722 = vmatpush.msra.mxu0 %v3711
    %3723 = vmatpush.msra.mxu0 %v3708
    %3724 = vmatpush.msra.mxu0 %v3705
    %3725 = vmatpush.msra.mxu0 %v3702
    %3726 = vmatpush.msra.mxu0 %v3699
    %3727 = vmatpush.msra.mxu0 %v3696
    %3728 = vmatpush.msra.mxu0 %v3693
    %3729 = vmatpush.msra.mxu0 %v3690
    %3730 = vmatpush.msra.mxu0 %v3687
    %3731 = vmatpush.msra.mxu0 %v3684
    %3732 = vmatpush.msra.mxu0 %v3681
    %3733 = vmatpush.msra.mxu0 %v3678
    %3734 = vmatpush.msra.mxu0 %v3675
    %3735 = vmatpush.msra.mxu0 %v3672
    %3736 = vmatmul.f32.gmra.mxu0 %v3669
    %v3737 = vpop.f32.mrf.mxu0
    %v3738 = vadd.f32 0.0, %v3737
    %3739 = vdwg.mxu0
    %3740 = vmatpush.msra.mxu0 %v3718
    %3741 = vmatpush.msra.mxu0 %v3715
    %3742 = vmatpush.msra.mxu0 %v3712
    %3743 = vmatpush.msra.mxu0 %v3709
    %3744 = vmatpush.msra.mxu0 %v3706
    %3745 = vmatpush.msra.mxu0 %v3703
    %3746 = vmatpush.msra.mxu0 %v3700
    %3747 = vmatpush.msra.mxu0 %v3697
    %3748 = vmatpush.msra.mxu0 %v3694
    %3749 = vmatpush.msra.mxu0 %v3691
    %3750 = vmatpush.msra.mxu0 %v3688
    %3751 = vmatpush.msra.mxu0 %v3685
    %3752 = vmatpush.msra.mxu0 %v3682
    %3753 = vmatpush.msra.mxu0 %v3679
    %3754 = vmatpush.msra.mxu0 %v3676
    %3755 = vmatpush.msra.mxu0 %v3673
    %3756 = vmatmul.f32.gmra.mxu0 %v3669
    %v3757 = vpop.f32.mrf.mxu0
    %v3758 = vadd.f32 0.0, %v3757
    %3759 = vdwg.mxu0
    %3760 = vmatpush.msra.mxu0 %v3719
    %3761 = vmatpush.msra.mxu0 %v3716
    %3762 = vmatpush.msra.mxu0 %v3713
    %3763 = vmatpush.msra.mxu0 %v3710
    %3764 = vmatpush.msra.mxu0 %v3707
    %3765 = vmatpush.msra.mxu0 %v3704
    %3766 = vmatpush.msra.mxu0 %v3701
    %3767 = vmatpush.msra.mxu0 %v3698
    %3768 = vmatpush.msra.mxu0 %v3695
    %3769 = vmatpush.msra.mxu0 %v3692
    %3770 = vmatpush.msra.mxu0 %v3689
    %3771 = vmatpush.msra.mxu0 %v3686
    %3772 = vmatpush.msra.mxu0 %v3683
    %3773 = vmatpush.msra.mxu0 %v3680
    %3774 = vmatpush.msra.mxu0 %v3677
    %3775 = vmatpush.msra.mxu0 %v3674
    %3776 = vmatmul.f32.gmra.mxu0 %v3669
    %v3777 = vpop.f32.mrf.mxu0
    %v3778 = vadd.f32 0.0, %v3777
    %3779 = vdwg.mxu0
    %v3780 = vld [vmem:[#allocation13] sm:$0xff]
    %v3781 = vld [vmem:[#allocation13 + $0x8] sm:$0xff]
    %v3782 = vld [vmem:[#allocation13 + $0x10] sm:$0xff]
    %v3783 = vld [vmem:[#allocation13 + $0x18] sm:$0xff]
    %v3784 = vld [vmem:[#allocation13 + $0x20] sm:$0xff]
    %v3785 = vld [vmem:[#allocation13 + $0x28] sm:$0xff]
    %v3786 = vld [vmem:[#allocation13 + $0x30] sm:$0xff]
    %v3787 = vld [vmem:[#allocation13 + $0x38] sm:$0xff]
    %v3788 = vld [vmem:[#allocation13 + $0x40] sm:$0xff]
    %v3789 = vld [vmem:[#allocation13 + $0x48] sm:$0xff]
    %v3790 = vld [vmem:[#allocation13 + $0x50] sm:$0xff]
    %v3791 = vld [vmem:[#allocation13 + $0x58] sm:$0xff]
    %v3792 = vld [vmem:[#allocation13 + $0x60] sm:$0xff]
    %v3793 = vld [vmem:[#allocation13 + $0x68] sm:$0xff]
    %v3794 = vld [vmem:[#allocation13 + $0x70] sm:$0xff]
    %v3795 = vld [vmem:[#allocation13 + $0x78] sm:$0xff]
    %v3796 = vld [vmem:[#allocation13 + $0x80] sm:$0xff]
    %v3797 = vld [vmem:[#allocation13 + $0x88] sm:$0xff]
    %v3798 = vld [vmem:[#allocation13 + $0x90] sm:$0xff]
    %v3799 = vld [vmem:[#allocation13 + $0x98] sm:$0xff]
    %v3800 = vld [vmem:[#allocation13 + $0xa0] sm:$0xff]
    %v3801 = vld [vmem:[#allocation13 + $0xa8] sm:$0xff]
    %v3802 = vld [vmem:[#allocation13 + $0xb0] sm:$0xff]
    %v3803 = vld [vmem:[#allocation13 + $0xb8] sm:$0xff]
    %v3804 = vld [vmem:[#allocation13 + $0xc0] sm:$0xff]
    %v3805 = vld [vmem:[#allocation13 + $0xc8] sm:$0xff]
    %v3806 = vld [vmem:[#allocation13 + $0xd0] sm:$0xff]
    %v3807 = vld [vmem:[#allocation13 + $0xd8] sm:$0xff]
    %v3808 = vld [vmem:[#allocation13 + $0xe0] sm:$0xff]
    %v3809 = vld [vmem:[#allocation13 + $0xe8] sm:$0xff]
    %v3810 = vld [vmem:[#allocation13 + $0xf0] sm:$0xff]
    %v3811 = vld [vmem:[#allocation13 + $0xf8] sm:$0xff]
    %3812 = vmatpush.msra.mxu0 %v3810
    %3813 = vmatpush.msra.mxu0 %v3808
    %3814 = vmatpush.msra.mxu0 %v3806
    %3815 = vmatpush.msra.mxu0 %v3804
    %3816 = vmatpush.msra.mxu0 %v3802
    %3817 = vmatpush.msra.mxu0 %v3800
    %3818 = vmatpush.msra.mxu0 %v3798
    %3819 = vmatpush.msra.mxu0 %v3796
    %3820 = vmatpush.msra.mxu0 %v3794
    %3821 = vmatpush.msra.mxu0 %v3792
    %3822 = vmatpush.msra.mxu0 %v3790
    %3823 = vmatpush.msra.mxu0 %v3788
    %3824 = vmatpush.msra.mxu0 %v3786
    %3825 = vmatpush.msra.mxu0 %v3784
    %3826 = vmatpush.msra.mxu0 %v3782
    %3827 = vmatpush.msra.mxu0 %v3780
    %3828 = vmatmul.f32.gmra.mxu0 %v3671
    %v3829 = vpop.f32.mrf.mxu0
    %v3830 = vadd.f32 0.0, %v3829
    %3831 = vdwg.mxu0
    %3832 = vmatpush.msra.mxu0 %v3811
    %3833 = vmatpush.msra.mxu0 %v3809
    %3834 = vmatpush.msra.mxu0 %v3807
    %3835 = vmatpush.msra.mxu0 %v3805
    %3836 = vmatpush.msra.mxu0 %v3803
    %3837 = vmatpush.msra.mxu0 %v3801
    %3838 = vmatpush.msra.mxu0 %v3799
    %3839 = vmatpush.msra.mxu0 %v3797
    %3840 = vmatpush.msra.mxu0 %v3795
    %3841 = vmatpush.msra.mxu0 %v3793
    %3842 = vmatpush.msra.mxu0 %v3791
    %3843 = vmatpush.msra.mxu0 %v3789
    %3844 = vmatpush.msra.mxu0 %v3787
    %3845 = vmatpush.msra.mxu0 %v3785
    %3846 = vmatpush.msra.mxu0 %v3783
    %3847 = vmatpush.msra.mxu0 %v3781
    %3848 = vmatmul.f32.gmra.mxu0 %v3671
    %v3849 = vpop.f32.mrf.mxu0
    %v3850 = vadd.f32 0.0, %v3849
    %3851 = vdwg.mxu0
    %v3852 = vadd.f32 %v3738, %v3830
    %v3853 = vadd.f32 %v3758, %v3850
    %v3854 = vld [vmem:[%s9] sm:$0x3]
    %v3856 = vperm.slane %v3854, 0
    %v3857 = vperm.slane %v3854, 1
    %v3860 = vadd.f32 %v3852, %v3856
    %v3861 = vadd.f32 %v3853, %v3857
    %v3862 = vxor.u32 %v3860, 2147483648
    %v3863 = vxor.u32 %v3861, 2147483648
    %v3864 = vmul.f32 %v3862, 1.442695
    %v3865 = vpow.pop %v3864
    %v3866 = vmul.f32 %v3863, 1.442695
    %v3867 = vpow.pop %v3866
    %v3868 = vadd.f32 %v3865, 1.0
    %v3869 = vadd.f32 %v3867, 1.0
    %v3870 = vrcp.pop %v3868
    %v3871 = vmul.f32 %v3868, %v3870
    %v3872 = vsub.f32 1.0, %v3871
    %v3873 = vmul.f32 %v3870, %v3872
    %v3874 = vadd.f32 %v3870, %v3873
    %vm3875 = vweird.f32 %v3868
    %vm3876 = vweird.f32 %v3870
    %vm3877 = vmor %vm3875, %vm3876
    %v3878 = vsel %vm3877, %v3870, %v3874
    %v3879 = vand.u32 2147483647, %v3868
    %vm3880 = vcmp.eq.f32.partialorder %v3879, 8.507059e+37
    %v3881 = vand.u32 %v3868, 2147483648
    %v3882 = vor.u32 1.1754944e-38, %v3881
    %v3883 = vsel %vm3880, %v3882, %v3878
    %v3884 = vmul.f32 1.0, %v3883
    %v3885 = vrcp.pop %v3869
    %v3886 = vmul.f32 %v3869, %v3885
    %v3887 = vsub.f32 1.0, %v3886
    %v3888 = vmul.f32 %v3885, %v3887
    %v3889 = vadd.f32 %v3885, %v3888
    %vm3890 = vweird.f32 %v3869
    %vm3891 = vweird.f32 %v3885
    %vm3892 = vmor %vm3890, %vm3891
    %v3893 = vsel %vm3892, %v3885, %v3889
    %v3894 = vand.u32 2147483647, %v3869
    %vm3895 = vcmp.eq.f32.partialorder %v3894, 8.507059e+37
    %v3896 = vand.u32 %v3869, 2147483648
    %v3897 = vor.u32 1.1754944e-38, %v3896
    %v3898 = vsel %vm3895, %v3897, %v3893
    %v3899 = vmul.f32 1.0, %v3898
    %v3900 = vmul.f32 %v3899, %v3671
    %v3901 = vld [vmem:[#allocation14] sm:$0xff]
    %v3902 = vld [vmem:[#allocation14 + $0x8] sm:$0xff]
    %v3903 = vld [vmem:[#allocation14 + $0x10] sm:$0xff]
    %v3904 = vld [vmem:[#allocation14 + $0x18] sm:$0xff]
    %v3905 = vld [vmem:[#allocation14 + $0x20] sm:$0xff]
    %v3906 = vld [vmem:[#allocation14 + $0x28] sm:$0xff]
    %v3907 = vld [vmem:[#allocation14 + $0x30] sm:$0xff]
    %v3908 = vld [vmem:[#allocation14 + $0x38] sm:$0xff]
    %v3909 = vld [vmem:[#allocation14 + $0x40] sm:$0xff]
    %v3910 = vld [vmem:[#allocation14 + $0x48] sm:$0xff]
    %v3911 = vld [vmem:[#allocation14 + $0x50] sm:$0xff]
    %v3912 = vld [vmem:[#allocation14 + $0x58] sm:$0xff]
    %v3913 = vld [vmem:[#allocation14 + $0x60] sm:$0xff]
    %v3914 = vld [vmem:[#allocation14 + $0x68] sm:$0xff]
    %v3915 = vld [vmem:[#allocation14 + $0x70] sm:$0xff]
    %v3916 = vld [vmem:[#allocation14 + $0x78] sm:$0xff]
    %3917 = vmatpush.msra.mxu0 %v3916
    %3918 = vmatpush.msra.mxu0 %v3915
    %3919 = vmatpush.msra.mxu0 %v3914
    %3920 = vmatpush.msra.mxu0 %v3913
    %3921 = vmatpush.msra.mxu0 %v3912
    %3922 = vmatpush.msra.mxu0 %v3911
    %3923 = vmatpush.msra.mxu0 %v3910
    %3924 = vmatpush.msra.mxu0 %v3909
    %3925 = vmatpush.msra.mxu0 %v3908
    %3926 = vmatpush.msra.mxu0 %v3907
    %3927 = vmatpush.msra.mxu0 %v3906
    %3928 = vmatpush.msra.mxu0 %v3905
    %3929 = vmatpush.msra.mxu0 %v3904
    %3930 = vmatpush.msra.mxu0 %v3903
    %3931 = vmatpush.msra.mxu0 %v3902
    %3932 = vmatpush.msra.mxu0 %v3901
    %3933 = vmatmul.f32.gmra.mxu0 %v3900
    %v3934 = vpop.f32.mrf.mxu0
    %v3935 = vadd.f32 0.0, %v3934
    %3936 = vdwg.mxu0
    %v3937 = vadd.f32 %v3778, %v3935
    %v3938 = vld [vmem:[%s11] sm:$0x1]
    %v3940 = vperm.slane %v3938, 0
    %v3942 = vadd.f32 %v3937, %v3940
    %v3943 = vtanh.pop %v3942
    %v3944 = vmul.f32 %v3884, %v3671
    %v3945 = vsub.f32 1.0, %v3884
    %v3946 = vmul.f32 %v3945, %v3943
    %v3947 = vadd.f32 %v3944, %v3946
    %3948 = vst [vmem:[%s527] sm:$0xff] %v3947
    %3949 = vst [vmem:[#allocation16 + $0x38] sm:$0xff] %v3947
    // Predicated region
    $region86: #{tpu_custom_call.1} parent=1 // pred_check
      _
    $region87: #{tpu_custom_call.1} parent=1 // pred_check_branch
      %3951 = sbr.rel (0) target = $region89
    $region88: #{tpu_custom_call.1} parent=1 // pred_region
      %3953 = vsyncadd [#allocation4], 0
      %s3954 = sshll.u32 [#allocation16], 4
      %s3955 = int_to_ptr.vmem [resolvable:$true] %s3954
      %s3956 = sshll.u32 %s12, 4
      %s3957 = int_to_ptr.hbm [resolvable:$true] %s3956
      %3962 = dma.vmem_to_hbm [thread:$0]  %s3955, 1024, %s3957, [#allocation4], 128, 128, 8
    $region89: #{tpu_custom_call.1} parent=1 // pred_fallthru
      _
    // Predicated region
    $region90: #{tpu_custom_call.1} parent=1 // pred_check
      _
    $region91: #{tpu_custom_call.1} parent=1 // pred_check_branch
      %3964 = sbr.rel (0) target = $region93
    $region92: #{tpu_custom_call.1} parent=1 // pred_region
      %3966 = vsyncadd [#allocation18], 0
      %s3967 = sshll.u32 [#allocation17], 4
      %s3968 = int_to_ptr.vmem [resolvable:$true] %s3967
      %s3969 = sshll.u32 %s13, 4
      %s3970 = int_to_ptr.hbm [resolvable:$true] %s3969
      %3975 = dma.vmem_to_hbm [thread:$0]  %s3968, 256, %s3970, [#allocation18], 128, 128, 8
    $region93: #{tpu_custom_call.1} parent=1 // pred_fallthru
      _
    // Predicated region
    $region94: #{tpu_custom_call.1} parent=1 // pred_check
      _
    $region95: #{tpu_custom_call.1} parent=1 // pred_check_branch
      %3977 = sbr.rel (0) target = $region97
    $region96: #{tpu_custom_call.1} parent=1 // pred_region
      %3979 = dma.done [#allocation4], 1024
    $region97: #{tpu_custom_call.1} parent=1 // pred_fallthru
      _
    // Predicated region
    $region98: #{tpu_custom_call.1} parent=1 // pred_check
      _
    $region99: #{tpu_custom_call.1} parent=1 // pred_check_branch
      %3981 = sbr.rel (0) target = $region101
    $region100: #{tpu_custom_call.1} parent=1 // pred_region
      %3983 = dma.done [#allocation18], 256
    $region101: #{tpu_custom_call.1} parent=1 // pred_fallthru
      _
    %3984 = vsyncpa [#allocation3], 1
    %3985 = vsyncpa [#allocation6], 1
    %3986 = vsyncpa [#allocation9], 1
    %3987 = vsyncpa [#allocation12], 1
    %3988 = vsyncpa [#allocation15], 1
    %3989 = vsyncpa [#allocation4], 1
    %3990 = vsyncpa [#allocation18], 1

</llo_original>
